<compile_context>
chip_gen: v5e
topology: v5e:2x2
jax: 0.10.0
libtpu: 0.0.40
codegen_flags: <defaults>
</compile_context>

<pallas_src>
import jax
import jax.numpy as jnp
from jax.experimental import pallas as pl
from jax.experimental.pallas import tpu as pltpu


# ----------------------------- helpers -------------------------------------

def _round_up(x, m):
    return (x + m - 1) // m * m


def _pick_tile(dim, align, max_tile):
    """Return (tile, padded_dim): tile is a multiple of `align`, divides padded_dim."""
    padded = _round_up(dim, align)
    if padded <= max_tile:
        return padded, padded
    for t in range(max_tile, align - 1, -align):
        if padded % t == 0:
            return t, padded
    return max_tile, _round_up(padded, max_tile)


# ------------------------- fused 1x1 GEMM (single K step) -------------------

def _gemm_bias_kernel(x_ref, w_ref, b_ref, o_ref):
    # Single K step: no accumulator scratch, no K grid axis; dot + bias written
    # straight to the output block.
    o_ref[...] = (
        jnp.dot(x_ref[...], w_ref[...], preferred_element_type=jnp.float32)
        + b_ref[...]
    ).astype(o_ref.dtype)


def matmul_bias(x, w, b, out_dtype, *, tm_max=256, tn_max=256):
    """(M,K)@(K,N)+b.  w/b are pre-padded so N % 128 == 0; K is NOT padded."""
    M, K = x.shape
    Kw, N = w.shape
    assert K == Kw and N % 128 == 0
    tm, Mp = _pick_tile(M, 16, tm_max)        # sublane dim (bf16 -> mult of 16)
    tn = tn_max if N % tn_max == 0 else 128   # 256-wide N tiles when possible
    if Mp != M:
        x = jnp.zeros((Mp, K), x.dtype).at[:M].set(x)

    out = pl.pallas_call(
        _gemm_bias_kernel,
        out_shape=jax.ShapeDtypeStruct((Mp, N), out_dtype),
        grid=(Mp // tm, N // tn),
        in_specs=[
            pl.BlockSpec((tm, K), lambda i, j: (i, 0)),   # K block == full dim
            pl.BlockSpec((K, tn), lambda i, j: (0, j)),
            pl.BlockSpec((1, tn), lambda i, j: (0, j)),
        ],
        out_specs=pl.BlockSpec((tm, tn), lambda i, j: (i, j)),
        compiler_params=pltpu.CompilerParams(
            dimension_semantics=("parallel", "parallel")),
    )(x, w, b)
    return out[:M]


# ------------------------- direct 3x3 conv (no im2col) ----------------------

def _make_conv3x3_kernel(s, Ho, Wop):
    nph = s * s

    def kernel(*refs):
        x_refs = refs[:nph]
        w_ref, b_ref, o_ref = refs[nph], refs[nph + 1], refs[nph + 2]
        cout_p = w_ref.shape[2]
        xs = [r[0] for r in x_refs]               # (ph_H, ph_W, Cin) values
        acc = jnp.zeros((Ho * Wop, cout_p), jnp.float32)
        for kh in range(3):                       # 9 taps, fully unrolled
            for kw in range(3):
                xph = xs[(kh % s) * s + (kw % s)]
                dh, dw = kh // s, kw // s
                win = xph[dh:dh + Ho, dw:dw + Wop, :]       # unit-stride window
                patch = win.reshape(Ho * Wop, win.shape[-1])
                acc = acc + jnp.dot(patch, w_ref[kh * 3 + kw],
                                    preferred_element_type=jnp.float32)
        o_ref[0] = (acc + b_ref[...]).astype(o_ref.dtype).reshape(Ho, Wop, cout_p)

    return kernel


def conv3x3(x, w9, b, *, stride, padding, cout, out_dtype):
    """Direct 3x3 conv on NHWC bf16 input.
    w9: (9, Cin, Cout_p) bf16 (tap-major, lane-padded); b: (1, Cout_p) f32."""
    n, H, W, cin = x.shape
    assert w9.shape[1] == cin
    cout_p = w9.shape[2]
    s = stride
    if padding:
        x = jnp.pad(x, ((0, 0), (padding, padding), (padding, padding), (0, 0)))
    Hp, Wp = H + 2 * padding, W + 2 * padding
    Ho = (Hp - 3) // s + 1
    Wo = (Wp - 3) // s + 1
    Wop = _round_up(Wo, 8)          # keep in-kernel reshapes sublane-aligned
    max_d = (3 - 1) // s
    ph_H, ph_W = Ho + max_d, Wop + max_d

    # Even/odd phase split (stride==2) so every in-kernel slice is unit-stride;
    # for stride==1 this is just the padded input itself (no copy).
    phases = []
    for i in range(s):
        for j in range(s):
            ph = x[:, i::s, j::s, :][:, :ph_H, :ph_W, :]
            pad_h, pad_w = ph_H - ph.shape[1], ph_W - ph.shape[2]
            if pad_h or pad_w:
                ph = jnp.pad(ph, ((0, 0), (0, pad_h), (0, pad_w), (0, 0)))
            phases.append(ph)

    out = pl.pallas_call(
        _make_conv3x3_kernel(s, Ho, Wop),
        out_shape=jax.ShapeDtypeStruct((n, Ho, Wop, cout_p), out_dtype),
        grid=(n,),
        in_specs=(
            [pl.BlockSpec((1, ph_H, ph_W, cin), lambda bi: (bi, 0, 0, 0))] * (s * s)
            + [pl.BlockSpec((9, cin, cout_p), lambda bi: (0, 0, 0)),
               pl.BlockSpec((1, cout_p), lambda bi: (0, 0))]
        ),
        out_specs=pl.BlockSpec((1, Ho, Wop, cout_p), lambda bi: (bi, 0, 0, 0)),
        compiler_params=pltpu.CompilerParams(dimension_semantics=("parallel",)),
    )(*phases, w9, b)
    return out[:, :, :Wo, :cout]


# ------------------------- fused 3x3/stride-2 max pool ----------------------

def _max9_kernel(*refs):
    *in_refs, o_ref = refs
    m = in_refs[0][...]
    for r in in_refs[1:]:
        m = jnp.maximum(m, r[...])
    o_ref[...] = m


def maxpool3x3_s2(x):
    """MaxPool2d(3, 2) on NHWC: one Pallas call over the 9 strided tap views."""
    n, H, W, C = x.shape
    Ho = (H - 3) // 2 + 1
    Wo = (W - 3) // 2 + 1
    M = n * Ho * Wo
    taps = [x[:, kh:kh + 2 * Ho:2, kw:kw + 2 * Wo:2, :].reshape(M, C)
            for kh in range(3) for kw in range(3)]
    if M <= 1024:
        tm, Mp = M, M                      # block == full dims (legal, no pad)
    else:
        tm, Mp = _pick_tile(M, 8, 1024)
        if Mp != M:
            taps = [jnp.zeros((Mp, C), x.dtype).at[:M].set(t) for t in taps]
    # TODO(synk): C (=in_channels) is not lane-dense here -> masked stores;
    # negligible at this size, pad C once in NHWC for large channel counts.
    out = pl.pallas_call(
        _max9_kernel,
        out_shape=jax.ShapeDtypeStruct((Mp, C), x.dtype),
        grid=(Mp // tm,),
        in_specs=[pl.BlockSpec((tm, C), lambda i: (i, 0))] * 9,
        out_specs=pl.BlockSpec((tm, C), lambda i: (i, 0)),
        compiler_params=pltpu.CompilerParams(dimension_semantics=("parallel",)),
    )(*taps)
    return out[:M].reshape(n, Ho, Wo, C)


# ----------------------------- parameters -----------------------------------

def init_inception_b_params(key, in_channels):
    ks = jax.random.split(key, 8)

    def conv_w(k, cout, cin, kh, kw):
        fan_in = cin * kh * kw
        return jax.random.normal(k, (cout, cin, kh, kw), jnp.float32) / jnp.sqrt(fan_in)

    return {
        "w_b3": conv_w(ks[0], 384, in_channels, 1, 1),
        "b_b3": 0.01 * jax.random.normal(ks[1], (384,), jnp.float32),
        "w_d1": conv_w(ks[2], 64, in_channels, 1, 1),
        "b_d1": 0.01 * jax.random.normal(ks[3], (64,), jnp.float32),
        "w_d2": conv_w(ks[4], 96, 64, 3, 3),
        "b_d2": 0.01 * jax.random.normal(ks[5], (96,), jnp.float32),
        "w_d3": conv_w(ks[6], 96, 96, 3, 3),
        "b_d3": 0.01 * jax.random.normal(ks[7], (96,), jnp.float32),
    }


def prepare_inception_b_params(raw):
    """One-time weight/bias repack (hoisted out of the forward pass):
    transpose to matmul layout, zero-pad to lane-dense widths, cast to bf16."""
    cin = raw["w_b3"].shape[1]

    # Fused 1x1 GEMM: cols [0:384] = branch3x3, [384:448] = dbl_1, rest zero.
    w1 = jnp.zeros((cin, 512), jnp.float32)
    w1 = w1.at[:, :384].set(raw["w_b3"].reshape(384, cin).T)
    w1 = w1.at[:, 384:448].set(raw["w_d1"].reshape(64, cin).T)
    b1 = jnp.zeros((1, 512), jnp.float32)
    b1 = b1.at[0, :384].set(raw["b_b3"]).at[0, 384:448].set(raw["b_d1"])

    def prep3x3(w, b, cin_p, cout_p=128):
        cout, cin_, _, _ = w.shape
        w9 = jnp.transpose(w, (2, 3, 1, 0)).reshape(9, cin_, cout)   # (tap,Ci,Co)
        w9p = jnp.zeros((9, cin_p, cout_p), jnp.float32)
        w9p = w9p.at[:, :cin_, :cout].set(w9)
        bp = jnp.zeros((1, cout_p), jnp.float32).at[0, :cout].set(b)
        return w9p.astype(jnp.bfloat16), bp

    w_d2, b_d2 = prep3x3(raw["w_d2"], raw["b_d2"], cin_p=64)
    # d3 consumes d2's lane-padded 128-channel output directly (extra ch == 0).
    w_d3, b_d3 = prep3x3(raw["w_d3"], raw["b_d3"], cin_p=128)

    return {"w_1x1": w1.astype(jnp.bfloat16), "b_1x1": b1,
            "w_d2": w_d2, "b_d2": b_d2, "w_d3": w_d3, "b_d3": b_d3}


# ----------------------------- InceptionB forward ---------------------------

def inception_b_forward(x_nchw, p):
    x = jnp.transpose(x_nchw, (0, 2, 3, 1))          # NCHW -> NHWC
    n, H, W, cin = x.shape
    x_bf = x.astype(jnp.bfloat16)

    # Fused 1x1 convs (branch3x3 + branch3x3dbl_1): one single-K-step GEMM over
    # all positions; the 384ch half is then stride-2 subsampled (equivalent to
    # the 1x1/stride-2 conv).
    fused = matmul_bias(x_bf.reshape(n * H * W, cin), p["w_1x1"], p["b_1x1"],
                        jnp.bfloat16)
    fused = fused.reshape(n, H, W, 512)
    b3 = fused[..., :384][:, ::2, ::2, :]            # (n, ceil(H/2), ceil(W/2), 384)
    d = fused[..., 384:448]                          # (n, H, W, 64) bf16

    # branch3x3dbl_2: 3x3, pad 1, stride 1 (keep lane-dense 128ch, extras = 0).
    d = conv3x3(d, p["w_d2"], p["b_d2"], stride=1, padding=1,
                cout=128, out_dtype=jnp.bfloat16)
    # branch3x3dbl_3: 3x3, stride 2.
    d = conv3x3(d, p["w_d3"], p["b_d3"], stride=2, padding=0,
                cout=96, out_dtype=jnp.float32)

    # branch_pool: MaxPool2d(3, 2).
    pool = maxpool3x3_s2(x)

    # TODO(synk): the reference module's torch.cat is ill-defined for every
    # input size (the 1x1/stride-2 branch is one pixel larger spatially than
    # the 3x3/stride-2 branches); crop branch3x3 to the common spatial size so
    # the channel concat is well defined (deliberate divergence from reference).
    Ho, Wo = d.shape[1], d.shape[2]
    b3 = b3[:, :Ho, :Wo, :].astype(jnp.float32)
    out = jnp.concatenate([b3, d, pool[:, :Ho, :Wo, :]], axis=-1)
    # TODO(synk): final concat/NCHW transpose left to XLA; for large batches,
    # write each branch at its channel offset of a lane-padded buffer instead.
    return jnp.transpose(out, (0, 3, 1, 2))          # NHWC -> NCHW


if __name__ == "__main__":
    key = jax.random.PRNGKey(0)
    k_x, k_p = jax.random.split(key)

    in_channels = 4
    x = jax.random.normal(k_x, (2, in_channels, 16, 16), jnp.float32)  # NCHW
    params = prepare_inception_b_params(init_inception_b_params(k_p, in_channels))

    fwd = jax.jit(inception_b_forward)
    out = jax.block_until_ready(fwd(x, params))
    assert out.shape == (2, 384 + 96 + in_channels, 7, 7), out.shape
    assert bool(jnp.all(jnp.isfinite(out)))
    print("KERNEL_OK")
</pallas_src>

<mosaic_0001>
module attributes {stable_mosaic.version = 11 : i64} {
  func.func @_gemm_bias_kernel(%arg0: i32, %arg1: i32, %arg2: memref<256x4xbf16, #tpu.memory_space<vmem>>, %arg3: memref<4x256xbf16, #tpu.memory_space<vmem>>, %arg4: memref<1x256xf32, #tpu.memory_space<vmem>>, %arg5: memref<256x256xbf16, #tpu.memory_space<vmem>>) attributes {dimension_semantics = [#tpu.dimension_semantics<parallel>, #tpu.dimension_semantics<parallel>], iteration_bounds = array<i64: 2, 2>, scalar_prefetch = 0 : i64, scratch_operands = 0 : i64, tpu.core_type = #tpu.core_type<tc>, window_params = [{transform_indices = @transform_0, window_bounds = array<i64: 256, 4>}, {transform_indices = @transform_1, window_bounds = array<i64: 4, 256>}, {transform_indices = @transform_2, window_bounds = array<i64: 1, 256>}, {transform_indices = @transform_3, window_bounds = array<i64: 256, 256>}]} {
    %c0 = arith.constant 0 : index
    %c0_0 = arith.constant 0 : index
    %0 = vector.load %arg2[%c0, %c0_0] : memref<256x4xbf16, #tpu.memory_space<vmem>>, vector<256x4xbf16>
    %c0_1 = arith.constant 0 : index
    %c0_2 = arith.constant 0 : index
    %1 = vector.load %arg3[%c0_1, %c0_2] : memref<4x256xbf16, #tpu.memory_space<vmem>>, vector<4x256xbf16>
    %cst = arith.constant dense<0.000000e+00> : vector<256x256xf32>
    %2 = tpu.matmul %0, %1, %cst {dimension_numbers = #tpu.dot_dimension_numbers<[1], [0], [0], [1], [0, 0, 1, 1], [], []>} : vector<256x4xbf16>, vector<4x256xbf16>, vector<256x256xf32> -> vector<256x256xf32>
    %c0_3 = arith.constant 0 : index
    %c0_4 = arith.constant 0 : index
    %3 = vector.load %arg4[%c0_3, %c0_4] : memref<1x256xf32, #tpu.memory_space<vmem>>, vector<1x256xf32>
    %4 = vector.broadcast %3 : vector<1x256xf32> to vector<256x256xf32>
    %5 = arith.addf %2, %4 : vector<256x256xf32>
    %6 = arith.truncf %5 : vector<256x256xf32> to vector<256x256xbf16>
    %c0_5 = arith.constant 0 : index
    %c0_6 = arith.constant 0 : index
    %7 = vector.load %arg5[%c0_5, %c0_6] : memref<256x256xbf16, #tpu.memory_space<vmem>>, vector<256x256xbf16>
    tpu.vector_store %arg5[%c0_5, %c0_6], %6 {strides = array<i32>} : memref<256x256xbf16, #tpu.memory_space<vmem>>, vector<256x256xbf16>,
    return
  }
  func.func @transform_0(%arg0: i32, %arg1: i32) -> (i32, i32) {
    %c0_i32 = arith.constant 0 : i32
    %c0_i32_0 = arith.constant 0 : i32
    return %arg0, %c0_i32 : i32, i32
  }
  func.func @transform_1(%arg0: i32, %arg1: i32) -> (i32, i32) {
    %c0_i32 = arith.constant 0 : i32
    %c0_i32_0 = arith.constant 0 : i32
    return %c0_i32, %arg1 : i32, i32
  }
  func.func @transform_2(%arg0: i32, %arg1: i32) -> (i32, i32) {
    %c0_i32 = arith.constant 0 : i32
    %c0_i32_0 = arith.constant 0 : i32
    return %c0_i32, %arg1 : i32, i32
  }
  func.func @transform_3(%arg0: i32, %arg1: i32) -> (i32, i32) {
    %c0_i32 = arith.constant 0 : i32
    return %arg0, %arg1 : i32, i32
  }
}

module attributes {stable_mosaic.version = 11 : i64} {
  func.func @_max9_kernel(%arg0: i32, %arg1: memref<98x4xf32, #tpu.memory_space<vmem>>, %arg2: memref<98x4xf32, #tpu.memory_space<vmem>>, %arg3: memref<98x4xf32, #tpu.memory_space<vmem>>, %arg4: memref<98x4xf32, #tpu.memory_space<vmem>>, %arg5: memref<98x4xf32, #tpu.memory_space<vmem>>, %arg6: memref<98x4xf32, #tpu.memory_space<vmem>>, %arg7: memref<98x4xf32, #tpu.memory_space<vmem>>, %arg8: memref<98x4xf32, #tpu.memory_space<vmem>>, %arg9: memref<98x4xf32, #tpu.memory_space<vmem>>, %arg10: memref<98x4xf32, #tpu.memory_space<vmem>>) attributes {dimension_semantics = [#tpu.dimension_semantics<parallel>], iteration_bounds = array<i64: 1>, scalar_prefetch = 0 : i64, scratch_operands = 0 : i64, tpu.core_type = #tpu.core_type<tc>, window_params = [{transform_indices = @transform_0, window_bounds = array<i64: 98, 4>}, {transform_indices = @transform_1, window_bounds = array<i64: 98, 4>}, {transform_indices = @transform_2, window_bounds = array<i64: 98, 4>}, {transform_indices = @transform_3, window_bounds = array<i64: 98, 4>}, {transform_indices = @transform_4, window_bounds = array<i64: 98, 4>}, {transform_indices = @transform_5, window_bounds = array<i64: 98, 4>}, {transform_indices = @transform_6, window_bounds = array<i64: 98, 4>}, {transform_indices = @transform_7, window_bounds = array<i64: 98, 4>}, {transform_indices = @transform_8, window_bounds = array<i64: 98, 4>}, {transform_indices = @transform_9, window_bounds = array<i64: 98, 4>}]} {
    %c0 = arith.constant 0 : index
    %c0_0 = arith.constant 0 : index
    %0 = vector.load %arg1[%c0, %c0_0] : memref<98x4xf32, #tpu.memory_space<vmem>>, vector<98x4xf32>
    %c0_1 = arith.constant 0 : index
    %c0_2 = arith.constant 0 : index
    %1 = vector.load %arg2[%c0_1, %c0_2] : memref<98x4xf32, #tpu.memory_space<vmem>>, vector<98x4xf32>
    %2 = arith.maximumf %0, %1 : vector<98x4xf32>
    %c0_3 = arith.constant 0 : index
    %c0_4 = arith.constant 0 : index
    %3 = vector.load %arg3[%c0_3, %c0_4] : memref<98x4xf32, #tpu.memory_space<vmem>>, vector<98x4xf32>
    %4 = arith.maximumf %2, %3 : vector<98x4xf32>
    %c0_5 = arith.constant 0 : index
    %c0_6 = arith.constant 0 : index
    %5 = vector.load %arg4[%c0_5, %c0_6] : memref<98x4xf32, #tpu.memory_space<vmem>>, vector<98x4xf32>
    %6 = arith.maximumf %4, %5 : vector<98x4xf32>
    %c0_7 = arith.constant 0 : index
    %c0_8 = arith.constant 0 : index
    %7 = vector.load %arg5[%c0_7, %c0_8] : memref<98x4xf32, #tpu.memory_space<vmem>>, vector<98x4xf32>
    %8 = arith.maximumf %6, %7 : vector<98x4xf32>
    %c0_9 = arith.constant 0 : index
    %c0_10 = arith.constant 0 : index
    %9 = vector.load %arg6[%c0_9, %c0_10] : memref<98x4xf32, #tpu.memory_space<vmem>>, vector<98x4xf32>
    %10 = arith.maximumf %8, %9 : vector<98x4xf32>
    %c0_11 = arith.constant 0 : index
    %c0_12 = arith.constant 0 : index
    %11 = vector.load %arg7[%c0_11, %c0_12] : memref<98x4xf32, #tpu.memory_space<vmem>>, vector<98x4xf32>
    %12 = arith.maximumf %10, %11 : vector<98x4xf32>
    %c0_13 = arith.constant 0 : index
    %c0_14 = arith.constant 0 : index
    %13 = vector.load %arg8[%c0_13, %c0_14] : memref<98x4xf32, #tpu.memory_space<vmem>>, vector<98x4xf32>
    %14 = arith.maximumf %12, %13 : vector<98x4xf32>
    %c0_15 = arith.constant 0 : index
    %c0_16 = arith.constant 0 : index
    %15 = vector.load %arg9[%c0_15, %c0_16] : memref<98x4xf32, #tpu.memory_space<vmem>>, vector<98x4xf32>
    %16 = arith.maximumf %14, %15 : vector<98x4xf32>
    %c0_17 = arith.constant 0 : index
    %c0_18 = arith.constant 0 : index
    %17 = vector.load %arg10[%c0_17, %c0_18] : memref<98x4xf32, #tpu.memory_space<vmem>>, vector<98x4xf32>
    tpu.vector_store %arg10[%c0_17, %c0_18], %16 {strides = array<i32>} : memref<98x4xf32, #tpu.memory_space<vmem>>, vector<98x4xf32>,
    return
  }
  func.func @transform_0(%arg0: i32) -> (i32, i32) {
    %c0_i32 = arith.constant 0 : i32
    %c0_i32_0 = arith.constant 0 : i32
    return %arg0, %c0_i32 : i32, i32
  }
  func.func @transform_1(%arg0: i32) -> (i32, i32) {
    %c0_i32 = arith.constant 0 : i32
    %c0_i32_0 = arith.constant 0 : i32
    return %arg0, %c0_i32 : i32, i32
  }
  func.func @transform_2(%arg0: i32) -> (i32, i32) {
    %c0_i32 = arith.constant 0 : i32
    %c0_i32_0 = arith.constant 0 : i32
    return %arg0, %c0_i32 : i32, i32
  }
  func.func @transform_3(%arg0: i32) -> (i32, i32) {
    %c0_i32 = arith.constant 0 : i32
    %c0_i32_0 = arith.constant 0 : i32
    return %arg0, %c0_i32 : i32, i32
  }
  func.func @transform_4(%arg0: i32) -> (i32, i32) {
    %c0_i32 = arith.constant 0 : i32
    %c0_i32_0 = arith.constant 0 : i32
    return %arg0, %c0_i32 : i32, i32
  }
  func.func @transform_5(%arg0: i32) -> (i32, i32) {
    %c0_i32 = arith.constant 0 : i32
    %c0_i32_0 = arith.constant 0 : i32
    return %arg0, %c0_i32 : i32, i32
  }
  func.func @transform_6(%arg0: i32) -> (i32, i32) {
    %c0_i32 = arith.constant 0 : i32
    %c0_i32_0 = arith.constant 0 : i32
    return %arg0, %c0_i32 : i32, i32
  }
  func.func @transform_7(%arg0: i32) -> (i32, i32) {
    %c0_i32 = arith.constant 0 : i32
    %c0_i32_0 = arith.constant 0 : i32
    return %arg0, %c0_i32 : i32, i32
  }
  func.func @transform_8(%arg0: i32) -> (i32, i32) {
    %c0_i32 = arith.constant 0 : i32
    %c0_i32_0 = arith.constant 0 : i32
    return %arg0, %c0_i32 : i32, i32
  }
  func.func @transform_9(%arg0: i32) -> (i32, i32) {
    %c0_i32 = arith.constant 0 : i32
    %c0_i32_0 = arith.constant 0 : i32
    return %arg0, %c0_i32 : i32, i32
  }
}

module attributes {stable_mosaic.version = 11 : i64} {
  func.func @kernel(%arg0: i32, %arg1: memref<1x18x18x64xbf16, #tpu.memory_space<vmem>>, %arg2: memref<9x64x128xbf16, #tpu.memory_space<vmem>>, %arg3: memref<1x128xf32, #tpu.memory_space<vmem>>, %arg4: memref<1x16x16x128xbf16, #tpu.memory_space<vmem>>) attributes {dimension_semantics = [#tpu.dimension_semantics<parallel>], iteration_bounds = array<i64: 2>, scalar_prefetch = 0 : i64, scratch_operands = 0 : i64, tpu.core_type = #tpu.core_type<tc>, window_params = [{transform_indices = @transform_0, window_bounds = array<i64: 1, 18, 18, 64>}, {pipeline_mode = #tpu.pipeline_mode<synchronous>, transform_indices = @transform_1, window_bounds = array<i64: 9, 64, 128>}, {pipeline_mode = #tpu.pipeline_mode<synchronous>, transform_indices = @transform_2, window_bounds = array<i64: 1, 128>}, {transform_indices = @transform_3, window_bounds = array<i64: 1, 16, 16, 128>}]} {
    %c0 = arith.constant 0 : index
    %c0_0 = arith.constant 0 : index
    %c0_1 = arith.constant 0 : index
    %c0_2 = arith.constant 0 : index
    %0 = vector.load %arg1[%c0, %c0_0, %c0_1, %c0_2] : memref<1x18x18x64xbf16, #tpu.memory_space<vmem>>, vector<1x18x18x64xbf16>
    %1 = vector.shape_cast %0 : vector<1x18x18x64xbf16> to vector<18x18x64xbf16>
    %cst = arith.constant 0.000000e+00 : f32
    %2 = vector.broadcast %cst : f32 to vector<256x128xf32>
    %3 = vector.extract_strided_slice %1 {offsets = [0, 0, 0], sizes = [16, 16, 64], strides = [1, 1, 1]} : vector<18x18x64xbf16> to vector<16x16x64xbf16>
    %4 = vector.shape_cast %3 : vector<16x16x64xbf16> to vector<256x64xbf16>
    %c0_3 = arith.constant 0 : index
    %c0_4 = arith.constant 0 : index
    %c0_5 = arith.constant 0 : index
    %5 = vector.load %arg2[%c0_3, %c0_4, %c0_5] : memref<9x64x128xbf16, #tpu.memory_space<vmem>>, vector<1x64x128xbf16>
    %6 = vector.shape_cast %5 : vector<1x64x128xbf16> to vector<64x128xbf16>
    %cst_6 = arith.constant dense<0.000000e+00> : vector<256x128xf32>
    %7 = tpu.matmul %4, %6, %cst_6 {dimension_numbers = #tpu.dot_dimension_numbers<[1], [0], [0], [1], [0, 0, 1, 1], [], []>} : vector<256x64xbf16>, vector<64x128xbf16>, vector<256x128xf32> -> vector<256x128xf32>
    %8 = arith.addf %2, %7 : vector<256x128xf32>
    %9 = vector.extract_strided_slice %1 {offsets = [0, 1, 0], sizes = [16, 16, 64], strides = [1, 1, 1]} : vector<18x18x64xbf16> to vector<16x16x64xbf16>
    %10 = vector.shape_cast %9 : vector<16x16x64xbf16> to vector<256x64xbf16>
    %c1 = arith.constant 1 : index
    %c0_7 = arith.constant 0 : index
    %c0_8 = arith.constant 0 : index
    %11 = vector.load %arg2[%c1, %c0_7, %c0_8] : memref<9x64x128xbf16, #tpu.memory_space<vmem>>, vector<1x64x128xbf16>
    %12 = vector.shape_cast %11 : vector<1x64x128xbf16> to vector<64x128xbf16>
    %cst_9 = arith.constant dense<0.000000e+00> : vector<256x128xf32>
    %13 = tpu.matmul %10, %12, %cst_9 {dimension_numbers = #tpu.dot_dimension_numbers<[1], [0], [0], [1], [0, 0, 1, 1], [], []>} : vector<256x64xbf16>, vector<64x128xbf16>, vector<256x128xf32> -> vector<256x128xf32>
    %14 = arith.addf %8, %13 : vector<256x128xf32>
    %15 = vector.extract_strided_slice %1 {offsets = [0, 2, 0], sizes = [16, 16, 64], strides = [1, 1, 1]} : vector<18x18x64xbf16> to vector<16x16x64xbf16>
    %16 = vector.shape_cast %15 : vector<16x16x64xbf16> to vector<256x64xbf16>
    %c2 = arith.constant 2 : index
    %c0_10 = arith.constant 0 : index
    %c0_11 = arith.constant 0 : index
    %17 = vector.load %arg2[%c2, %c0_10, %c0_11] : memref<9x64x128xbf16, #tpu.memory_space<vmem>>, vector<1x64x128xbf16>
    %18 = vector.shape_cast %17 : vector<1x64x128xbf16> to vector<64x128xbf16>
    %cst_12 = arith.constant dense<0.000000e+00> : vector<256x128xf32>
    %19 = tpu.matmul %16, %18, %cst_12 {dimension_numbers = #tpu.dot_dimension_numbers<[1], [0], [0], [1], [0, 0, 1, 1], [], []>} : vector<256x64xbf16>, vector<64x128xbf16>, vector<256x128xf32> -> vector<256x128xf32>
    %20 = arith.addf %14, %19 : vector<256x128xf32>
    %21 = vector.extract_strided_slice %1 {offsets = [1, 0, 0], sizes = [16, 16, 64], strides = [1, 1, 1]} : vector<18x18x64xbf16> to vector<16x16x64xbf16>
    %22 = vector.shape_cast %21 : vector<16x16x64xbf16> to vector<256x64xbf16>
    %c3 = arith.constant 3 : index
    %c0_13 = arith.constant 0 : index
    %c0_14 = arith.constant 0 : index
    %23 = vector.load %arg2[%c3, %c0_13, %c0_14] : memref<9x64x128xbf16, #tpu.memory_space<vmem>>, vector<1x64x128xbf16>
    %24 = vector.shape_cast %23 : vector<1x64x128xbf16> to vector<64x128xbf16>
    %cst_15 = arith.constant dense<0.000000e+00> : vector<256x128xf32>
    %25 = tpu.matmul %22, %24, %cst_15 {dimension_numbers = #tpu.dot_dimension_numbers<[1], [0], [0], [1], [0, 0, 1, 1], [], []>} : vector<256x64xbf16>, vector<64x128xbf16>, vector<256x128xf32> -> vector<256x128xf32>
    %26 = arith.addf %20, %25 : vector<256x128xf32>
    %27 = vector.extract_strided_slice %1 {offsets = [1, 1, 0], sizes = [16, 16, 64], strides = [1, 1, 1]} : vector<18x18x64xbf16> to vector<16x16x64xbf16>
    %28 = vector.shape_cast %27 : vector<16x16x64xbf16> to vector<256x64xbf16>
    %c4 = arith.constant 4 : index
    %c0_16 = arith.constant 0 : index
    %c0_17 = arith.constant 0 : index
    %29 = vector.load %arg2[%c4, %c0_16, %c0_17] : memref<9x64x128xbf16, #tpu.memory_space<vmem>>, vector<1x64x128xbf16>
    %30 = vector.shape_cast %29 : vector<1x64x128xbf16> to vector<64x128xbf16>
    %cst_18 = arith.constant dense<0.000000e+00> : vector<256x128xf32>
    %31 = tpu.matmul %28, %30, %cst_18 {dimension_numbers = #tpu.dot_dimension_numbers<[1], [0], [0], [1], [0, 0, 1, 1], [], []>} : vector<256x64xbf16>, vector<64x128xbf16>, vector<256x128xf32> -> vector<256x128xf32>
    %32 = arith.addf %26, %31 : vector<256x128xf32>
    %33 = vector.extract_strided_slice %1 {offsets = [1, 2, 0], sizes = [16, 16, 64], strides = [1, 1, 1]} : vector<18x18x64xbf16> to vector<16x16x64xbf16>
    %34 = vector.shape_cast %33 : vector<16x16x64xbf16> to vector<256x64xbf16>
    %c5 = arith.constant 5 : index
    %c0_19 = arith.constant 0 : index
    %c0_20 = arith.constant 0 : index
    %35 = vector.load %arg2[%c5, %c0_19, %c0_20] : memref<9x64x128xbf16, #tpu.memory_space<vmem>>, vector<1x64x128xbf16>
    %36 = vector.shape_cast %35 : vector<1x64x128xbf16> to vector<64x128xbf16>
    %cst_21 = arith.constant dense<0.000000e+00> : vector<256x128xf32>
    %37 = tpu.matmul %34, %36, %cst_21 {dimension_numbers = #tpu.dot_dimension_numbers<[1], [0], [0], [1], [0, 0, 1, 1], [], []>} : vector<256x64xbf16>, vector<64x128xbf16>, vector<256x128xf32> -> vector<256x128xf32>
    %38 = arith.addf %32, %37 : vector<256x128xf32>
    %39 = vector.extract_strided_slice %1 {offsets = [2, 0, 0], sizes = [16, 16, 64], strides = [1, 1, 1]} : vector<18x18x64xbf16> to vector<16x16x64xbf16>
    %40 = vector.shape_cast %39 : vector<16x16x64xbf16> to vector<256x64xbf16>
    %c6 = arith.constant 6 : index
    %c0_22 = arith.constant 0 : index
    %c0_23 = arith.constant 0 : index
    %41 = vector.load %arg2[%c6, %c0_22, %c0_23] : memref<9x64x128xbf16, #tpu.memory_space<vmem>>, vector<1x64x128xbf16>
    %42 = vector.shape_cast %41 : vector<1x64x128xbf16> to vector<64x128xbf16>
    %cst_24 = arith.constant dense<0.000000e+00> : vector<256x128xf32>
    %43 = tpu.matmul %40, %42, %cst_24 {dimension_numbers = #tpu.dot_dimension_numbers<[1], [0], [0], [1], [0, 0, 1, 1], [], []>} : vector<256x64xbf16>, vector<64x128xbf16>, vector<256x128xf32> -> vector<256x128xf32>
    %44 = arith.addf %38, %43 : vector<256x128xf32>
    %45 = vector.extract_strided_slice %1 {offsets = [2, 1, 0], sizes = [16, 16, 64], strides = [1, 1, 1]} : vector<18x18x64xbf16> to vector<16x16x64xbf16>
    %46 = vector.shape_cast %45 : vector<16x16x64xbf16> to vector<256x64xbf16>
    %c7 = arith.constant 7 : index
    %c0_25 = arith.constant 0 : index
    %c0_26 = arith.constant 0 : index
    %47 = vector.load %arg2[%c7, %c0_25, %c0_26] : memref<9x64x128xbf16, #tpu.memory_space<vmem>>, vector<1x64x128xbf16>
    %48 = vector.shape_cast %47 : vector<1x64x128xbf16> to vector<64x128xbf16>
    %cst_27 = arith.constant dense<0.000000e+00> : vector<256x128xf32>
    %49 = tpu.matmul %46, %48, %cst_27 {dimension_numbers = #tpu.dot_dimension_numbers<[1], [0], [0], [1], [0, 0, 1, 1], [], []>} : vector<256x64xbf16>, vector<64x128xbf16>, vector<256x128xf32> -> vector<256x128xf32>
    %50 = arith.addf %44, %49 : vector<256x128xf32>
    %51 = vector.extract_strided_slice %1 {offsets = [2, 2, 0], sizes = [16, 16, 64], strides = [1, 1, 1]} : vector<18x18x64xbf16> to vector<16x16x64xbf16>
    %52 = vector.shape_cast %51 : vector<16x16x64xbf16> to vector<256x64xbf16>
    %c8 = arith.constant 8 : index
    %c0_28 = arith.constant 0 : index
    %c0_29 = arith.constant 0 : index
    %53 = vector.load %arg2[%c8, %c0_28, %c0_29] : memref<9x64x128xbf16, #tpu.memory_space<vmem>>, vector<1x64x128xbf16>
    %54 = vector.shape_cast %53 : vector<1x64x128xbf16> to vector<64x128xbf16>
    %cst_30 = arith.constant dense<0.000000e+00> : vector<256x128xf32>
    %55 = tpu.matmul %52, %54, %cst_30 {dimension_numbers = #tpu.dot_dimension_numbers<[1], [0], [0], [1], [0, 0, 1, 1], [], []>} : vector<256x64xbf16>, vector<64x128xbf16>, vector<256x128xf32> -> vector<256x128xf32>
    %56 = arith.addf %50, %55 : vector<256x128xf32>
    %c0_31 = arith.constant 0 : index
    %c0_32 = arith.constant 0 : index
    %57 = vector.load %arg3[%c0_31, %c0_32] : memref<1x128xf32, #tpu.memory_space<vmem>>, vector<1x128xf32>
    %58 = vector.broadcast %57 : vector<1x128xf32> to vector<256x128xf32>
    %59 = arith.addf %56, %58 : vector<256x128xf32>
    %60 = arith.truncf %59 : vector<256x128xf32> to vector<256x128xbf16>
    %61 = vector.shape_cast %60 : vector<256x128xbf16> to vector<16x16x128xbf16>
    %c0_33 = arith.constant 0 : index
    %c0_34 = arith.constant 0 : index
    %c0_35 = arith.constant 0 : index
    %c0_36 = arith.constant 0 : index
    %62 = vector.load %arg4[%c0_33, %c0_34, %c0_35, %c0_36] : memref<1x16x16x128xbf16, #tpu.memory_space<vmem>>, vector<1x16x16x128xbf16>
    %63 = vector.shape_cast %62 : vector<1x16x16x128xbf16> to vector<16x16x128xbf16>
    %64 = vector.shape_cast %61 : vector<16x16x128xbf16> to vector<1x16x16x128xbf16>
    tpu.vector_store %arg4[%c0_33, %c0_34, %c0_35, %c0_36], %64 {strides = array<i32>} : memref<1x16x16x128xbf16, #tpu.memory_space<vmem>>, vector<1x16x16x128xbf16>,
    return
  }
  func.func @transform_0(%arg0: i32) -> (i32, i32, i32, i32) {
    %c0_i32 = arith.constant 0 : i32
    %c0_i32_0 = arith.constant 0 : i32
    %c0_i32_1 = arith.constant 0 : i32
    %c0_i32_2 = arith.constant 0 : i32
    return %arg0, %c0_i32, %c0_i32_0, %c0_i32_1 : i32, i32, i32, i32
  }
  func.func @transform_1(%arg0: i32) -> (i32, i32, i32) {
    %c0_i32 = arith.constant 0 : i32
    %c0_i32_0 = arith.constant 0 : i32
    %c0_i32_1 = arith.constant 0 : i32
    %c0_i32_2 = arith.constant 0 : i32
    return %c0_i32, %c0_i32_0, %c0_i32_1 : i32, i32, i32
  }
  func.func @transform_2(%arg0: i32) -> (i32, i32) {
    %c0_i32 = arith.constant 0 : i32
    %c0_i32_0 = arith.constant 0 : i32
    %c0_i32_1 = arith.constant 0 : i32
    return %c0_i32, %c0_i32_0 : i32, i32
  }
  func.func @transform_3(%arg0: i32) -> (i32, i32, i32, i32) {
    %c0_i32 = arith.constant 0 : i32
    %c0_i32_0 = arith.constant 0 : i32
    %c0_i32_1 = arith.constant 0 : i32
    %c0_i32_2 = arith.constant 0 : i32
    return %arg0, %c0_i32, %c0_i32_0, %c0_i32_1 : i32, i32, i32, i32
  }
}

module attributes {stable_mosaic.version = 11 : i64} {
  func.func @kernel(%arg0: i32, %arg1: memref<1x8x9x128xbf16, #tpu.memory_space<vmem>>, %arg2: memref<1x8x9x128xbf16, #tpu.memory_space<vmem>>, %arg3: memref<1x8x9x128xbf16, #tpu.memory_space<vmem>>, %arg4: memref<1x8x9x128xbf16, #tpu.memory_space<vmem>>, %arg5: memref<9x128x128xbf16, #tpu.memory_space<vmem>>, %arg6: memref<1x128xf32, #tpu.memory_space<vmem>>, %arg7: memref<1x7x8x128xf32, #tpu.memory_space<vmem>>) attributes {dimension_semantics = [#tpu.dimension_semantics<parallel>], iteration_bounds = array<i64: 2>, scalar_prefetch = 0 : i64, scratch_operands = 0 : i64, tpu.core_type = #tpu.core_type<tc>, window_params = [{transform_indices = @transform_0, window_bounds = array<i64: 1, 8, 9, 128>}, {transform_indices = @transform_1, window_bounds = array<i64: 1, 8, 9, 128>}, {transform_indices = @transform_2, window_bounds = array<i64: 1, 8, 9, 128>}, {transform_indices = @transform_3, window_bounds = array<i64: 1, 8, 9, 128>}, {pipeline_mode = #tpu.pipeline_mode<synchronous>, transform_indices = @transform_4, window_bounds = array<i64: 9, 128, 128>}, {pipeline_mode = #tpu.pipeline_mode<synchronous>, transform_indices = @transform_5, window_bounds = array<i64: 1, 128>}, {transform_indices = @transform_6, window_bounds = array<i64: 1, 7, 8, 128>}]} {
    %c0 = arith.constant 0 : index
    %c0_0 = arith.constant 0 : index
    %c0_1 = arith.constant 0 : index
    %c0_2 = arith.constant 0 : index
    %0 = vector.load %arg1[%c0, %c0_0, %c0_1, %c0_2] : memref<1x8x9x128xbf16, #tpu.memory_space<vmem>>, vector<1x8x9x128xbf16>
    %1 = vector.shape_cast %0 : vector<1x8x9x128xbf16> to vector<8x9x128xbf16>
    %c0_3 = arith.constant 0 : index
    %c0_4 = arith.constant 0 : index
    %c0_5 = arith.constant 0 : index
    %c0_6 = arith.constant 0 : index
    %2 = vector.load %arg2[%c0_3, %c0_4, %c0_5, %c0_6] : memref<1x8x9x128xbf16, #tpu.memory_space<vmem>>, vector<1x8x9x128xbf16>
    %3 = vector.shape_cast %2 : vector<1x8x9x128xbf16> to vector<8x9x128xbf16>
    %c0_7 = arith.constant 0 : index
    %c0_8 = arith.constant 0 : index
    %c0_9 = arith.constant 0 : index
    %c0_10 = arith.constant 0 : index
    %4 = vector.load %arg3[%c0_7, %c0_8, %c0_9, %c0_10] : memref<1x8x9x128xbf16, #tpu.memory_space<vmem>>, vector<1x8x9x128xbf16>
    %5 = vector.shape_cast %4 : vector<1x8x9x128xbf16> to vector<8x9x128xbf16>
    %c0_11 = arith.constant 0 : index
    %c0_12 = arith.constant 0 : index
    %c0_13 = arith.constant 0 : index
    %c0_14 = arith.constant 0 : index
    %6 = vector.load %arg4[%c0_11, %c0_12, %c0_13, %c0_14] : memref<1x8x9x128xbf16, #tpu.memory_space<vmem>>, vector<1x8x9x128xbf16>
    %7 = vector.shape_cast %6 : vector<1x8x9x128xbf16> to vector<8x9x128xbf16>
    %cst = arith.constant 0.000000e+00 : f32
    %8 = vector.broadcast %cst : f32 to vector<56x128xf32>
    %9 = vector.extract_strided_slice %1 {offsets = [0, 0, 0], sizes = [7, 8, 128], strides = [1, 1, 1]} : vector<8x9x128xbf16> to vector<7x8x128xbf16>
    %10 = vector.shape_cast %9 : vector<7x8x128xbf16> to vector<56x128xbf16>
    %c0_15 = arith.constant 0 : index
    %c0_16 = arith.constant 0 : index
    %c0_17 = arith.constant 0 : index
    %11 = vector.load %arg5[%c0_15, %c0_16, %c0_17] : memref<9x128x128xbf16, #tpu.memory_space<vmem>>, vector<1x128x128xbf16>
    %12 = vector.shape_cast %11 : vector<1x128x128xbf16> to vector<128x128xbf16>
    %cst_18 = arith.constant dense<0.000000e+00> : vector<56x128xf32>
    %13 = tpu.matmul %10, %12, %cst_18 {dimension_numbers = #tpu.dot_dimension_numbers<[1], [0], [0], [1], [0, 0, 1, 1], [], []>} : vector<56x128xbf16>, vector<128x128xbf16>, vector<56x128xf32> -> vector<56x128xf32>
    %14 = arith.addf %8, %13 : vector<56x128xf32>
    %15 = vector.extract_strided_slice %3 {offsets = [0, 0, 0], sizes = [7, 8, 128], strides = [1, 1, 1]} : vector<8x9x128xbf16> to vector<7x8x128xbf16>
    %16 = vector.shape_cast %15 : vector<7x8x128xbf16> to vector<56x128xbf16>
    %c1 = arith.constant 1 : index
    %c0_19 = arith.constant 0 : index
    %c0_20 = arith.constant 0 : index
    %17 = vector.load %arg5[%c1, %c0_19, %c0_20] : memref<9x128x128xbf16, #tpu.memory_space<vmem>>, vector<1x128x128xbf16>
    %18 = vector.shape_cast %17 : vector<1x128x128xbf16> to vector<128x128xbf16>
    %cst_21 = arith.constant dense<0.000000e+00> : vector<56x128xf32>
    %19 = tpu.matmul %16, %18, %cst_21 {dimension_numbers = #tpu.dot_dimension_numbers<[1], [0], [0], [1], [0, 0, 1, 1], [], []>} : vector<56x128xbf16>, vector<128x128xbf16>, vector<56x128xf32> -> vector<56x128xf32>
    %20 = arith.addf %14, %19 : vector<56x128xf32>
    %21 = vector.extract_strided_slice %1 {offsets = [0, 1, 0], sizes = [7, 8, 128], strides = [1, 1, 1]} : vector<8x9x128xbf16> to vector<7x8x128xbf16>
    %22 = vector.shape_cast %21 : vector<7x8x128xbf16> to vector<56x128xbf16>
    %c2 = arith.constant 2 : index
    %c0_22 = arith.constant 0 : index
    %c0_23 = arith.constant 0 : index
    %23 = vector.load %arg5[%c2, %c0_22, %c0_23] : memref<9x128x128xbf16, #tpu.memory_space<vmem>>, vector<1x128x128xbf16>
    %24 = vector.shape_cast %23 : vector<1x128x128xbf16> to vector<128x128xbf16>
    %cst_24 = arith.constant dense<0.000000e+00> : vector<56x128xf32>
    %25 = tpu.matmul %22, %24, %cst_24 {dimension_numbers = #tpu.dot_dimension_numbers<[1], [0], [0], [1], [0, 0, 1, 1], [], []>} : vector<56x128xbf16>, vector<128x128xbf16>, vector<56x128xf32> -> vector<56x128xf32>
    %26 = arith.addf %20, %25 : vector<56x128xf32>
    %27 = vector.extract_strided_slice %5 {offsets = [0, 0, 0], sizes = [7, 8, 128], strides = [1, 1, 1]} : vector<8x9x128xbf16> to vector<7x8x128xbf16>
    %28 = vector.shape_cast %27 : vector<7x8x128xbf16> to vector<56x128xbf16>
    %c3 = arith.constant 3 : index
    %c0_25 = arith.constant 0 : index
    %c0_26 = arith.constant 0 : index
    %29 = vector.load %arg5[%c3, %c0_25, %c0_26] : memref<9x128x128xbf16, #tpu.memory_space<vmem>>, vector<1x128x128xbf16>
    %30 = vector.shape_cast %29 : vector<1x128x128xbf16> to vector<128x128xbf16>
    %cst_27 = arith.constant dense<0.000000e+00> : vector<56x128xf32>
    %31 = tpu.matmul %28, %30, %cst_27 {dimension_numbers = #tpu.dot_dimension_numbers<[1], [0], [0], [1], [0, 0, 1, 1], [], []>} : vector<56x128xbf16>, vector<128x128xbf16>, vector<56x128xf32> -> vector<56x128xf32>
    %32 = arith.addf %26, %31 : vector<56x128xf32>
    %33 = vector.extract_strided_slice %7 {offsets = [0, 0, 0], sizes = [7, 8, 128], strides = [1, 1, 1]} : vector<8x9x128xbf16> to vector<7x8x128xbf16>
    %34 = vector.shape_cast %33 : vector<7x8x128xbf16> to vector<56x128xbf16>
    %c4 = arith.constant 4 : index
    %c0_28 = arith.constant 0 : index
    %c0_29 = arith.constant 0 : index
    %35 = vector.load %arg5[%c4, %c0_28, %c0_29] : memref<9x128x128xbf16, #tpu.memory_space<vmem>>, vector<1x128x128xbf16>
    %36 = vector.shape_cast %35 : vector<1x128x128xbf16> to vector<128x128xbf16>
    %cst_30 = arith.constant dense<0.000000e+00> : vector<56x128xf32>
    %37 = tpu.matmul %34, %36, %cst_30 {dimension_numbers = #tpu.dot_dimension_numbers<[1], [0], [0], [1], [0, 0, 1, 1], [], []>} : vector<56x128xbf16>, vector<128x128xbf16>, vector<56x128xf32> -> vector<56x128xf32>
    %38 = arith.addf %32, %37 : vector<56x128xf32>
    %39 = vector.extract_strided_slice %5 {offsets = [0, 1, 0], sizes = [7, 8, 128], strides = [1, 1, 1]} : vector<8x9x128xbf16> to vector<7x8x128xbf16>
    %40 = vector.shape_cast %39 : vector<7x8x128xbf16> to vector<56x128xbf16>
    %c5 = arith.constant 5 : index
    %c0_31 = arith.constant 0 : index
    %c0_32 = arith.constant 0 : index
    %41 = vector.load %arg5[%c5, %c0_31, %c0_32] : memref<9x128x128xbf16, #tpu.memory_space<vmem>>, vector<1x128x128xbf16>
    %42 = vector.shape_cast %41 : vector<1x128x128xbf16> to vector<128x128xbf16>
    %cst_33 = arith.constant dense<0.000000e+00> : vector<56x128xf32>
    %43 = tpu.matmul %40, %42, %cst_33 {dimension_numbers = #tpu.dot_dimension_numbers<[1], [0], [0], [1], [0, 0, 1, 1], [], []>} : vector<56x128xbf16>, vector<128x128xbf16>, vector<56x128xf32> -> vector<56x128xf32>
    %44 = arith.addf %38, %43 : vector<56x128xf32>
    %45 = vector.extract_strided_slice %1 {offsets = [1, 0, 0], sizes = [7, 8, 128], strides = [1, 1, 1]} : vector<8x9x128xbf16> to vector<7x8x128xbf16>
    %46 = vector.shape_cast %45 : vector<7x8x128xbf16> to vector<56x128xbf16>
    %c6 = arith.constant 6 : index
    %c0_34 = arith.constant 0 : index
    %c0_35 = arith.constant 0 : index
    %47 = vector.load %arg5[%c6, %c0_34, %c0_35] : memref<9x128x128xbf16, #tpu.memory_space<vmem>>, vector<1x128x128xbf16>
    %48 = vector.shape_cast %47 : vector<1x128x128xbf16> to vector<128x128xbf16>
    %cst_36 = arith.constant dense<0.000000e+00> : vector<56x128xf32>
    %49 = tpu.matmul %46, %48, %cst_36 {dimension_numbers = #tpu.dot_dimension_numbers<[1], [0], [0], [1], [0, 0, 1, 1], [], []>} : vector<56x128xbf16>, vector<128x128xbf16>, vector<56x128xf32> -> vector<56x128xf32>
    %50 = arith.addf %44, %49 : vector<56x128xf32>
    %51 = vector.extract_strided_slice %3 {offsets = [1, 0, 0], sizes = [7, 8, 128], strides = [1, 1, 1]} : vector<8x9x128xbf16> to vector<7x8x128xbf16>
    %52 = vector.shape_cast %51 : vector<7x8x128xbf16> to vector<56x128xbf16>
    %c7 = arith.constant 7 : index
    %c0_37 = arith.constant 0 : index
    %c0_38 = arith.constant 0 : index
    %53 = vector.load %arg5[%c7, %c0_37, %c0_38] : memref<9x128x128xbf16, #tpu.memory_space<vmem>>, vector<1x128x128xbf16>
    %54 = vector.shape_cast %53 : vector<1x128x128xbf16> to vector<128x128xbf16>
    %cst_39 = arith.constant dense<0.000000e+00> : vector<56x128xf32>
    %55 = tpu.matmul %52, %54, %cst_39 {dimension_numbers = #tpu.dot_dimension_numbers<[1], [0], [0], [1], [0, 0, 1, 1], [], []>} : vector<56x128xbf16>, vector<128x128xbf16>, vector<56x128xf32> -> vector<56x128xf32>
    %56 = arith.addf %50, %55 : vector<56x128xf32>
    %57 = vector.extract_strided_slice %1 {offsets = [1, 1, 0], sizes = [7, 8, 128], strides = [1, 1, 1]} : vector<8x9x128xbf16> to vector<7x8x128xbf16>
    %58 = vector.shape_cast %57 : vector<7x8x128xbf16> to vector<56x128xbf16>
    %c8 = arith.constant 8 : index
    %c0_40 = arith.constant 0 : index
    %c0_41 = arith.constant 0 : index
    %59 = vector.load %arg5[%c8, %c0_40, %c0_41] : memref<9x128x128xbf16, #tpu.memory_space<vmem>>, vector<1x128x128xbf16>
    %60 = vector.shape_cast %59 : vector<1x128x128xbf16> to vector<128x128xbf16>
    %cst_42 = arith.constant dense<0.000000e+00> : vector<56x128xf32>
    %61 = tpu.matmul %58, %60, %cst_42 {dimension_numbers = #tpu.dot_dimension_numbers<[1], [0], [0], [1], [0, 0, 1, 1], [], []>} : vector<56x128xbf16>, vector<128x128xbf16>, vector<56x128xf32> -> vector<56x128xf32>
    %62 = arith.addf %56, %61 : vector<56x128xf32>
    %c0_43 = arith.constant 0 : index
    %c0_44 = arith.constant 0 : index
    %63 = vector.load %arg6[%c0_43, %c0_44] : memref<1x128xf32, #tpu.memory_space<vmem>>, vector<1x128xf32>
    %64 = vector.broadcast %63 : vector<1x128xf32> to vector<56x128xf32>
    %65 = arith.addf %62, %64 : vector<56x128xf32>
    %66 = vector.shape_cast %65 : vector<56x128xf32> to vector<7x8x128xf32>
    %c0_45 = arith.constant 0 : index
    %c0_46 = arith.constant 0 : index
    %c0_47 = arith.constant 0 : index
    %c0_48 = arith.constant 0 : index
    %67 = vector.load %arg7[%c0_45, %c0_46, %c0_47, %c0_48] : memref<1x7x8x128xf32, #tpu.memory_space<vmem>>, vector<1x7x8x128xf32>
    %68 = vector.shape_cast %67 : vector<1x7x8x128xf32> to vector<7x8x128xf32>
    %69 = vector.shape_cast %66 : vector<7x8x128xf32> to vector<1x7x8x128xf32>
    tpu.vector_store %arg7[%c0_45, %c0_46, %c0_47, %c0_48], %69 {strides = array<i32>} : memref<1x7x8x128xf32, #tpu.memory_space<vmem>>, vector<1x7x8x128xf32>,
    return
  }
  func.func @transform_0(%arg0: i32) -> (i32, i32, i32, i32) {
    %c0_i32 = arith.constant 0 : i32
    %c0_i32_0 = arith.constant 0 : i32
    %c0_i32_1 = arith.constant 0 : i32
    %c0_i32_2 = arith.constant 0 : i32
    return %arg0, %c0_i32, %c0_i32_0, %c0_i32_1 : i32, i32, i32, i32
  }
  func.func @transform_1(%arg0: i32) -> (i32, i32, i32, i32) {
    %c0_i32 = arith.constant 0 : i32
    %c0_i32_0 = arith.constant 0 : i32
    %c0_i32_1 = arith.constant 0 : i32
    %c0_i32_2 = arith.constant 0 : i32
    return %arg0, %c0_i32, %c0_i32_0, %c0_i32_1 : i32, i32, i32, i32
  }
  func.func @transform_2(%arg0: i32) -> (i32, i32, i32, i32) {
    %c0_i32 = arith.constant 0 : i32
    %c0_i32_0 = arith.constant 0 : i32
    %c0_i32_1 = arith.constant 0 : i32
    %c0_i32_2 = arith.constant 0 : i32
    return %arg0, %c0_i32, %c0_i32_0, %c0_i32_1 : i32, i32, i32, i32
  }
  func.func @transform_3(%arg0: i32) -> (i32, i32, i32, i32) {
    %c0_i32 = arith.constant 0 : i32
    %c0_i32_0 = arith.constant 0 : i32
    %c0_i32_1 = arith.constant 0 : i32
    %c0_i32_2 = arith.constant 0 : i32
    return %arg0, %c0_i32, %c0_i32_0, %c0_i32_1 : i32, i32, i32, i32
  }
  func.func @transform_4(%arg0: i32) -> (i32, i32, i32) {
    %c0_i32 = arith.constant 0 : i32
    %c0_i32_0 = arith.constant 0 : i32
    %c0_i32_1 = arith.constant 0 : i32
    %c0_i32_2 = arith.constant 0 : i32
    return %c0_i32, %c0_i32_0, %c0_i32_1 : i32, i32, i32
  }
  func.func @transform_5(%arg0: i32) -> (i32, i32) {
    %c0_i32 = arith.constant 0 : i32
    %c0_i32_0 = arith.constant 0 : i32
    %c0_i32_1 = arith.constant 0 : i32
    return %c0_i32, %c0_i32_0 : i32, i32
  }
  func.func @transform_6(%arg0: i32) -> (i32, i32, i32, i32) {
    %c0_i32 = arith.constant 0 : i32
    %c0_i32_0 = arith.constant 0 : i32
    %c0_i32_1 = arith.constant 0 : i32
    %c0_i32_2 = arith.constant 0 : i32
    return %arg0, %c0_i32, %c0_i32_0, %c0_i32_1 : i32, i32, i32, i32
  }
}

</mosaic_0001>

<llo_original>
// kernel: inception_b_forward.7
$region0: #{inception_b_forward.7}
  #allocation0 [shape = 'u32[]', space=smem, size = 0x4, offset = 0x4, fixed_abs, tag = 'smem constant byte address 0x4 - core index']
  #allocation1 [shape = 'u32[72,128]{1,0:T(1,128)}', space=vmem, size = 0x9000, scoped, tag = 'internal scratch']
  %s0 = inlined_call_operand.vmem [shape: f32[98,4], index: 0, kind: input, shape index: {}]
  %s1 = inlined_call_operand.vmem [shape: f32[98,4], index: 1, kind: input, shape index: {}]
  %s2 = inlined_call_operand.vmem [shape: f32[98,4], index: 2, kind: input, shape index: {}]
  %s3 = inlined_call_operand.vmem [shape: f32[98,4], index: 3, kind: input, shape index: {}]
  %s4 = inlined_call_operand.vmem [shape: f32[98,4], index: 4, kind: input, shape index: {}]
  %s5 = inlined_call_operand.vmem [shape: f32[98,4], index: 5, kind: input, shape index: {}]
  %s6 = inlined_call_operand.vmem [shape: f32[98,4], index: 6, kind: input, shape index: {}]
  %s7 = inlined_call_operand.vmem [shape: f32[98,4], index: 7, kind: input, shape index: {}]
  %s8 = inlined_call_operand.vmem [shape: f32[98,4], index: 8, kind: input, shape index: {}]
  %s9 = inlined_call_operand.vmem [shape: f32[98,4], index: 9, kind: output, shape index: {}]
  %s10 = sld [smem:[#allocation0]]
  $region46: #{inception_b_forward.7} parent=0
    _
  %s12 = ssub.s32 1, %s10
  %s13 = scalar_select 0, %s12, %s10
  // Predicated region
  $region2: #{inception_b_forward.7} parent=0 // pred_check
    _
  $region3: #{inception_b_forward.7} parent=0 // pred_check_branch
    %15 = sbr.rel (0) target = $region5
  $region4: #{inception_b_forward.7} parent=0 // pred_region
    _
  $region5: #{inception_b_forward.7} parent=0 // pred_fallthru
    _
  // Predicated region
  $region6: #{inception_b_forward.7} parent=0 // pred_check
    _
  $region7: #{inception_b_forward.7} parent=0 // pred_check_branch
    %17 = sbr.rel (0) target = $region9
  $region8: #{inception_b_forward.7} parent=0 // pred_region
    _
  $region9: #{inception_b_forward.7} parent=0 // pred_fallthru
    _
  // Predicated region
  $region10: #{inception_b_forward.7} parent=0 // pred_check
    _
  $region11: #{inception_b_forward.7} parent=0 // pred_check_branch
    %19 = sbr.rel (0) target = $region13
  $region12: #{inception_b_forward.7} parent=0 // pred_region
    _
  $region13: #{inception_b_forward.7} parent=0 // pred_fallthru
    _
  // Predicated region
  $region14: #{inception_b_forward.7} parent=0 // pred_check
    _
  $region15: #{inception_b_forward.7} parent=0 // pred_check_branch
    %21 = sbr.rel (0) target = $region17
  $region16: #{inception_b_forward.7} parent=0 // pred_region
    _
  $region17: #{inception_b_forward.7} parent=0 // pred_fallthru
    _
  // Predicated region
  $region18: #{inception_b_forward.7} parent=0 // pred_check
    _
  $region19: #{inception_b_forward.7} parent=0 // pred_check_branch
    %23 = sbr.rel (0) target = $region21
  $region20: #{inception_b_forward.7} parent=0 // pred_region
    _
  $region21: #{inception_b_forward.7} parent=0 // pred_fallthru
    _
  // Predicated region
  $region22: #{inception_b_forward.7} parent=0 // pred_check
    _
  $region23: #{inception_b_forward.7} parent=0 // pred_check_branch
    %25 = sbr.rel (0) target = $region25
  $region24: #{inception_b_forward.7} parent=0 // pred_region
    _
  $region25: #{inception_b_forward.7} parent=0 // pred_fallthru
    _
  // Predicated region
  $region26: #{inception_b_forward.7} parent=0 // pred_check
    _
  $region27: #{inception_b_forward.7} parent=0 // pred_check_branch
    %27 = sbr.rel (0) target = $region29
  $region28: #{inception_b_forward.7} parent=0 // pred_region
    _
  $region29: #{inception_b_forward.7} parent=0 // pred_fallthru
    _
  // Predicated region
  $region30: #{inception_b_forward.7} parent=0 // pred_check
    _
  $region31: #{inception_b_forward.7} parent=0 // pred_check_branch
    %29 = sbr.rel (0) target = $region33
  $region32: #{inception_b_forward.7} parent=0 // pred_region
    _
  $region33: #{inception_b_forward.7} parent=0 // pred_fallthru
    _
  // Predicated region
  $region34: #{inception_b_forward.7} parent=0 // pred_check
    _
  $region35: #{inception_b_forward.7} parent=0 // pred_check_branch
    %31 = sbr.rel (0) target = $region37
  $region36: #{inception_b_forward.7} parent=0 // pred_region
    _
  $region37: #{inception_b_forward.7} parent=0 // pred_fallthru
    _
  %v32 = vld [vmem:[%s0] sm:$0xff]
  %v33 = vld [vmem:[%s0 + $0x8] sm:$0xff]
  %v34 = vld [vmem:[%s0 + $0x10] sm:$0xff]
  %v35 = vld [vmem:[%s0 + $0x18] sm:$0xff]
  %v36 = vld [vmem:[%s0 + $0x20] sm:$0xff]
  %v37 = vld [vmem:[%s0 + $0x28] sm:$0xff]
  %v38 = vld [vmem:[%s0 + $0x30] sm:$0xff]
  %v39 = vld [vmem:[%s0 + $0x38] sm:$0xff]
  %v40 = vld [vmem:[%s0 + $0x40] sm:$0xff]
  %v41 = vld [vmem:[%s0 + $0x48] sm:$0xff]
  %v42 = vld [vmem:[%s0 + $0x50] sm:$0xff]
  %v43 = vld [vmem:[%s0 + $0x58] sm:$0xff]
  %v44 = vld [vmem:[%s0 + $0x60] sm:$0x3]
  %v45 = vld [vmem:[%s1] sm:$0xff]
  %v46 = vld [vmem:[%s1 + $0x8] sm:$0xff]
  %v47 = vld [vmem:[%s1 + $0x10] sm:$0xff]
  %v48 = vld [vmem:[%s1 + $0x18] sm:$0xff]
  %v49 = vld [vmem:[%s1 + $0x20] sm:$0xff]
  %v50 = vld [vmem:[%s1 + $0x28] sm:$0xff]
  %v51 = vld [vmem:[%s1 + $0x30] sm:$0xff]
  %v52 = vld [vmem:[%s1 + $0x38] sm:$0xff]
  %v53 = vld [vmem:[%s1 + $0x40] sm:$0xff]
  %v54 = vld [vmem:[%s1 + $0x48] sm:$0xff]
  %v55 = vld [vmem:[%s1 + $0x50] sm:$0xff]
  %v56 = vld [vmem:[%s1 + $0x58] sm:$0xff]
  %v57 = vld [vmem:[%s1 + $0x60] sm:$0x3]
  %v58 = vmax.f32 %v32, %v45
  %v59 = vmax.f32 %v33, %v46
  %v60 = vmax.f32 %v34, %v47
  %v61 = vmax.f32 %v35, %v48
  %v62 = vmax.f32 %v36, %v49
  %v63 = vmax.f32 %v37, %v50
  %v64 = vmax.f32 %v38, %v51
  %v65 = vmax.f32 %v39, %v52
  %v66 = vmax.f32 %v40, %v53
  %v67 = vmax.f32 %v41, %v54
  %v68 = vmax.f32 %v42, %v55
  %v69 = vmax.f32 %v43, %v56
  %v70 = vmax.f32 %v44, %v57
  %v71 = vld [vmem:[%s2] sm:$0xff]
  %v72 = vld [vmem:[%s2 + $0x8] sm:$0xff]
  %v73 = vld [vmem:[%s2 + $0x10] sm:$0xff]
  %v74 = vld [vmem:[%s2 + $0x18] sm:$0xff]
  %v75 = vld [vmem:[%s2 + $0x20] sm:$0xff]
  %v76 = vld [vmem:[%s2 + $0x28] sm:$0xff]
  %v77 = vld [vmem:[%s2 + $0x30] sm:$0xff]
  %v78 = vld [vmem:[%s2 + $0x38] sm:$0xff]
  %v79 = vld [vmem:[%s2 + $0x40] sm:$0xff]
  %v80 = vld [vmem:[%s2 + $0x48] sm:$0xff]
  %v81 = vld [vmem:[%s2 + $0x50] sm:$0xff]
  %v82 = vld [vmem:[%s2 + $0x58] sm:$0xff]
  %v83 = vld [vmem:[%s2 + $0x60] sm:$0x3]
  %v84 = vmax.f32 %v58, %v71
  %v85 = vmax.f32 %v59, %v72
  %v86 = vmax.f32 %v60, %v73
  %v87 = vmax.f32 %v61, %v74
  %v88 = vmax.f32 %v62, %v75
  %v89 = vmax.f32 %v63, %v76
  %v90 = vmax.f32 %v64, %v77
  %v91 = vmax.f32 %v65, %v78
  %v92 = vmax.f32 %v66, %v79
  %v93 = vmax.f32 %v67, %v80
  %v94 = vmax.f32 %v68, %v81
  %v95 = vmax.f32 %v69, %v82
  %v96 = vmax.f32 %v70, %v83
  %v97 = vld [vmem:[%s3] sm:$0xff]
  %v98 = vld [vmem:[%s3 + $0x8] sm:$0xff]
  %v99 = vld [vmem:[%s3 + $0x10] sm:$0xff]
  %v100 = vld [vmem:[%s3 + $0x18] sm:$0xff]
  %v101 = vld [vmem:[%s3 + $0x20] sm:$0xff]
  %v102 = vld [vmem:[%s3 + $0x28] sm:$0xff]
  %v103 = vld [vmem:[%s3 + $0x30] sm:$0xff]
  %v104 = vld [vmem:[%s3 + $0x38] sm:$0xff]
  %v105 = vld [vmem:[%s3 + $0x40] sm:$0xff]
  %v106 = vld [vmem:[%s3 + $0x48] sm:$0xff]
  %v107 = vld [vmem:[%s3 + $0x50] sm:$0xff]
  %v108 = vld [vmem:[%s3 + $0x58] sm:$0xff]
  %v109 = vld [vmem:[%s3 + $0x60] sm:$0x3]
  %v110 = vmax.f32 %v84, %v97
  %v111 = vmax.f32 %v85, %v98
  %v112 = vmax.f32 %v86, %v99
  %v113 = vmax.f32 %v87, %v100
  %v114 = vmax.f32 %v88, %v101
  %v115 = vmax.f32 %v89, %v102
  %v116 = vmax.f32 %v90, %v103
  %v117 = vmax.f32 %v91, %v104
  %v118 = vmax.f32 %v92, %v105
  %v119 = vmax.f32 %v93, %v106
  %v120 = vmax.f32 %v94, %v107
  %v121 = vmax.f32 %v95, %v108
  %v122 = vmax.f32 %v96, %v109
  %v123 = vld [vmem:[%s4] sm:$0xff]
  %v124 = vld [vmem:[%s4 + $0x8] sm:$0xff]
  %v125 = vld [vmem:[%s4 + $0x10] sm:$0xff]
  %v126 = vld [vmem:[%s4 + $0x18] sm:$0xff]
  %v127 = vld [vmem:[%s4 + $0x20] sm:$0xff]
  %v128 = vld [vmem:[%s4 + $0x28] sm:$0xff]
  %v129 = vld [vmem:[%s4 + $0x30] sm:$0xff]
  %v130 = vld [vmem:[%s4 + $0x38] sm:$0xff]
  %v131 = vld [vmem:[%s4 + $0x40] sm:$0xff]
  %v132 = vld [vmem:[%s4 + $0x48] sm:$0xff]
  %v133 = vld [vmem:[%s4 + $0x50] sm:$0xff]
  %v134 = vld [vmem:[%s4 + $0x58] sm:$0xff]
  %v135 = vld [vmem:[%s4 + $0x60] sm:$0x3]
  %v136 = vmax.f32 %v110, %v123
  %v137 = vmax.f32 %v111, %v124
  %v138 = vmax.f32 %v112, %v125
  %v139 = vmax.f32 %v113, %v126
  %v140 = vmax.f32 %v114, %v127
  %v141 = vmax.f32 %v115, %v128
  %v142 = vmax.f32 %v116, %v129
  %v143 = vmax.f32 %v117, %v130
  %v144 = vmax.f32 %v118, %v131
  %v145 = vmax.f32 %v119, %v132
  %v146 = vmax.f32 %v120, %v133
  %v147 = vmax.f32 %v121, %v134
  %v148 = vmax.f32 %v122, %v135
  %v149 = vld [vmem:[%s5] sm:$0xff]
  %v150 = vld [vmem:[%s5 + $0x8] sm:$0xff]
  %v151 = vld [vmem:[%s5 + $0x10] sm:$0xff]
  %v152 = vld [vmem:[%s5 + $0x18] sm:$0xff]
  %v153 = vld [vmem:[%s5 + $0x20] sm:$0xff]
  %v154 = vld [vmem:[%s5 + $0x28] sm:$0xff]
  %v155 = vld [vmem:[%s5 + $0x30] sm:$0xff]
  %v156 = vld [vmem:[%s5 + $0x38] sm:$0xff]
  %v157 = vld [vmem:[%s5 + $0x40] sm:$0xff]
  %v158 = vld [vmem:[%s5 + $0x48] sm:$0xff]
  %v159 = vld [vmem:[%s5 + $0x50] sm:$0xff]
  %v160 = vld [vmem:[%s5 + $0x58] sm:$0xff]
  %v161 = vld [vmem:[%s5 + $0x60] sm:$0x3]
  %v162 = vmax.f32 %v136, %v149
  %v163 = vmax.f32 %v137, %v150
  %v164 = vmax.f32 %v138, %v151
  %v165 = vmax.f32 %v139, %v152
  %v166 = vmax.f32 %v140, %v153
  %v167 = vmax.f32 %v141, %v154
  %v168 = vmax.f32 %v142, %v155
  %v169 = vmax.f32 %v143, %v156
  %v170 = vmax.f32 %v144, %v157
  %v171 = vmax.f32 %v145, %v158
  %v172 = vmax.f32 %v146, %v159
  %v173 = vmax.f32 %v147, %v160
  %v174 = vmax.f32 %v148, %v161
  %v175 = vld [vmem:[%s6] sm:$0xff]
  %v176 = vld [vmem:[%s6 + $0x8] sm:$0xff]
  %v177 = vld [vmem:[%s6 + $0x10] sm:$0xff]
  %v178 = vld [vmem:[%s6 + $0x18] sm:$0xff]
  %v179 = vld [vmem:[%s6 + $0x20] sm:$0xff]
  %v180 = vld [vmem:[%s6 + $0x28] sm:$0xff]
  %v181 = vld [vmem:[%s6 + $0x30] sm:$0xff]
  %v182 = vld [vmem:[%s6 + $0x38] sm:$0xff]
  %v183 = vld [vmem:[%s6 + $0x40] sm:$0xff]
  %v184 = vld [vmem:[%s6 + $0x48] sm:$0xff]
  %v185 = vld [vmem:[%s6 + $0x50] sm:$0xff]
  %v186 = vld [vmem:[%s6 + $0x58] sm:$0xff]
  %v187 = vld [vmem:[%s6 + $0x60] sm:$0x3]
  %v188 = vmax.f32 %v162, %v175
  %v189 = vmax.f32 %v163, %v176
  %v190 = vmax.f32 %v164, %v177
  %v191 = vmax.f32 %v165, %v178
  %v192 = vmax.f32 %v166, %v179
  %v193 = vmax.f32 %v167, %v180
  %v194 = vmax.f32 %v168, %v181
  %v195 = vmax.f32 %v169, %v182
  %v196 = vmax.f32 %v170, %v183
  %v197 = vmax.f32 %v171, %v184
  %v198 = vmax.f32 %v172, %v185
  %v199 = vmax.f32 %v173, %v186
  %v200 = vmax.f32 %v174, %v187
  %v201 = vld [vmem:[%s7] sm:$0xff]
  %v202 = vld [vmem:[%s7 + $0x8] sm:$0xff]
  %v203 = vld [vmem:[%s7 + $0x10] sm:$0xff]
  %v204 = vld [vmem:[%s7 + $0x18] sm:$0xff]
  %v205 = vld [vmem:[%s7 + $0x20] sm:$0xff]
  %v206 = vld [vmem:[%s7 + $0x28] sm:$0xff]
  %v207 = vld [vmem:[%s7 + $0x30] sm:$0xff]
  %v208 = vld [vmem:[%s7 + $0x38] sm:$0xff]
  %v209 = vld [vmem:[%s7 + $0x40] sm:$0xff]
  %v210 = vld [vmem:[%s7 + $0x48] sm:$0xff]
  %v211 = vld [vmem:[%s7 + $0x50] sm:$0xff]
  %v212 = vld [vmem:[%s7 + $0x58] sm:$0xff]
  %v213 = vld [vmem:[%s7 + $0x60] sm:$0x3]
  %v214 = vmax.f32 %v188, %v201
  %v215 = vmax.f32 %v189, %v202
  %v216 = vmax.f32 %v190, %v203
  %v217 = vmax.f32 %v191, %v204
  %v218 = vmax.f32 %v192, %v205
  %v219 = vmax.f32 %v193, %v206
  %v220 = vmax.f32 %v194, %v207
  %v221 = vmax.f32 %v195, %v208
  %v222 = vmax.f32 %v196, %v209
  %v223 = vmax.f32 %v197, %v210
  %v224 = vmax.f32 %v198, %v211
  %v225 = vmax.f32 %v199, %v212
  %v226 = vmax.f32 %v200, %v213
  %v227 = vld [vmem:[%s8] sm:$0xff]
  %v228 = vld [vmem:[%s8 + $0x8] sm:$0xff]
  %v229 = vld [vmem:[%s8 + $0x10] sm:$0xff]
  %v230 = vld [vmem:[%s8 + $0x18] sm:$0xff]
  %v231 = vld [vmem:[%s8 + $0x20] sm:$0xff]
  %v232 = vld [vmem:[%s8 + $0x28] sm:$0xff]
  %v233 = vld [vmem:[%s8 + $0x30] sm:$0xff]
  %v234 = vld [vmem:[%s8 + $0x38] sm:$0xff]
  %v235 = vld [vmem:[%s8 + $0x40] sm:$0xff]
  %v236 = vld [vmem:[%s8 + $0x48] sm:$0xff]
  %v237 = vld [vmem:[%s8 + $0x50] sm:$0xff]
  %v238 = vld [vmem:[%s8 + $0x58] sm:$0xff]
  %v239 = vld [vmem:[%s8 + $0x60] sm:$0x3]
  %v240 = vmax.f32 %v214, %v227
  %v241 = vmax.f32 %v215, %v228
  %v242 = vmax.f32 %v216, %v229
  %v243 = vmax.f32 %v217, %v230
  %v244 = vmax.f32 %v218, %v231
  %v245 = vmax.f32 %v219, %v232
  %v246 = vmax.f32 %v220, %v233
  %v247 = vmax.f32 %v221, %v234
  %v248 = vmax.f32 %v222, %v235
  %v249 = vmax.f32 %v223, %v236
  %v250 = vmax.f32 %v224, %v237
  %v251 = vmax.f32 %v225, %v238
  %v252 = vmax.f32 %v226, %v239
  %vm253 = vcmask 31744
  %254 = vst.msk [vmem:[%s9] sm:$0xff] %vm253, %v240
  %255 = vst.msk [vmem:[%s9 + $0x8] sm:$0xff] %vm253, %v241
  %256 = vst.msk [vmem:[%s9 + $0x10] sm:$0xff] %vm253, %v242
  %257 = vst.msk [vmem:[%s9 + $0x18] sm:$0xff] %vm253, %v243
  %258 = vst.msk [vmem:[%s9 + $0x20] sm:$0xff] %vm253, %v244
  %259 = vst.msk [vmem:[%s9 + $0x28] sm:$0xff] %vm253, %v245
  %260 = vst.msk [vmem:[%s9 + $0x30] sm:$0xff] %vm253, %v246
  %261 = vst.msk [vmem:[%s9 + $0x38] sm:$0xff] %vm253, %v247
  %262 = vst.msk [vmem:[%s9 + $0x40] sm:$0xff] %vm253, %v248
  %263 = vst.msk [vmem:[%s9 + $0x48] sm:$0xff] %vm253, %v249
  %264 = vst.msk [vmem:[%s9 + $0x50] sm:$0xff] %vm253, %v250
  %265 = vst.msk [vmem:[%s9 + $0x58] sm:$0xff] %vm253, %v251
  %vm266 = vcmask 25600
  %267 = vst.msk [vmem:[%s9 + $0x60] sm:$0x3] %vm266, %v252
  // Predicated region
  $region38: #{inception_b_forward.7} parent=0 // pred_check
    _
  $region39: #{inception_b_forward.7} parent=0 // pred_check_branch
    %269 = sbr.rel (0) target = $region41
  $region40: #{inception_b_forward.7} parent=0 // pred_region
    _
  $region41: #{inception_b_forward.7} parent=0 // pred_fallthru
    _
  // Predicated region
  $region42: #{inception_b_forward.7} parent=0 // pred_check
    _
  $region43: #{inception_b_forward.7} parent=0 // pred_check_branch
    %271 = sbr.rel (0) target = $region45
  $region44: #{inception_b_forward.7} parent=0 // pred_region
    _
  $region45: #{inception_b_forward.7} parent=0 // pred_fallthru
    _

// kernel: inception_b_forward.4
$region0: #{inception_b_forward.4}
  #allocation0 [shape = 'u32[]', space=smem, size = 0x4, offset = 0x4, fixed_abs, tag = 'smem constant byte address 0x4 - core index']
  #allocation1 [shape = 'u32[72,128]{1,0:T(1,128)}', space=vmem, size = 0x9000, scoped, tag = 'internal scratch']
  %s0 = inlined_call_operand.vmem [shape: bf16[512,4], index: 0, kind: input, shape index: {}]
  %s1 = inlined_call_operand.vmem [shape: bf16[4,512], index: 1, kind: input, shape index: {}]
  %s2 = inlined_call_operand.vmem [shape: f32[1,512], index: 2, kind: input, shape index: {}]
  %s3 = inlined_call_operand.vmem [shape: bf16[512,512], index: 3, kind: output, shape index: {}]
  %s4 = sld [smem:[#allocation0]]
  $region79: #{inception_b_forward.4} parent=0
    _
  %s6 = ssub.s32 1, %s4
  %s7 = scalar_select 0, %s6, %s4
  $region1: #{inception_b_forward.4} parent=0
    #allocation2 [shape = 'u8[262144]{0}', space=vmem, size = 0x40000, scoped, tag = 'output window, operand 0']
    loop: start=0, step=1, limit=6
    $region2: #{inception_b_forward.4} parent=1 // loop_pre_header
      _
    $region3: #{inception_b_forward.4} parent=1 // loop_header
      %s9 = sphi 0, %s13
      %p10 = scmp.ge.s32.totalorder %s9, 6
      %s16 = sphi 0, %s28
      %s17 = sphi 0, %s24
      %s18 = sphi 0, %s16
      %s19 = sphi 0, %s17
      %s20 = sphi 0, %s18
      %s21 = sphi 0, %s19
      %s31 = sphi 0, %s33
      %s34 = sphi 0, %s31
      %s35 = sphi 0, %s34
      %s51 = sphi 0, %s35
      %s57 = sphi 0, %s59
      %s60 = sphi 0, %s57
      %s61 = sphi 0, %s60
      %s77 = sphi 0, %s61
      %s83 = sphi 0, %s85
      %s86 = sphi 0, %s83
      %s87 = sphi 0, %s86
      %s103 = sphi 0, %s87
      %s111 = sphi 0, %s113
      %s114 = sphi 0, %s111
      %s115 = sphi 0, %s114
      %s131 = sphi 0, %s115
    $region4: #{inception_b_forward.4} parent=1 // loop_header_branch
      %12 = sbr.rel (%p10) target = $region8
    $region5: #{inception_b_forward.4} parent=1 // loop_body
      %s14 = ssub.s32 %s9, 1
      %s15 = ssub.s32 %s9, 2
      %s22 = sadd.s32 1, %s17
      %p23 = scmp.ge.s32.totalorder %s22, 2
      %s24 = scalar_select %p23, 0, %s22
      %s25 = sadd.s32 1, %s16
      %s26 = scalar_select %p23, %s25, %s16
      %p27 = scmp.ge.s32.totalorder %s26, 2
      %s28 = scalar_select %p27, 0, %s26
      %s29 = ssub.s32 %s16, %s28
      %p30 = scmp.eq.s32.totalorder %s29, 0
      %s32 = sadd.s32 %s31, 1
      %s33 = scalar_select %p30, %s31, %s32
      %p36 = pneg %p30
      %p37 = scmp.eq.s32.totalorder %s9, 3
      %p38 = por %p36, %p37
      %p39 = scmp.ne.s32.totalorder %s31, %s34
      %p40 = scmp.eq.s32.totalorder %s9, 0
      %p41 = por %p39, %p40
      %p42 = scmp.ne.s32.totalorder %s31, %s34
      %p43 = scmp.eq.s32.totalorder %s14, 3
      %p44 = por %p42, %p43
      %p45 = scmp.ne.s32.totalorder %s34, %s35
      %p46 = scmp.eq.s32.totalorder %s14, 0
      %p47 = por %p45, %p46
      %p48 = scmp.ne.s32.totalorder %s34, %s35
      %p49 = scmp.eq.s32.totalorder %s15, 3
      %p50 = por %p48, %p49
      %p52 = scmp.ne.s32.totalorder %s35, %s51
      %p53 = scmp.eq.s32.totalorder %s15, 0
      %p54 = por %p52, %p53
      %s55 = ssub.s32 %s17, %s24
      %p56 = scmp.eq.s32.totalorder %s55, 0
      %s58 = sadd.s32 %s57, 1
      %s59 = scalar_select %p56, %s57, %s58
      %p62 = pneg %p56
      %p63 = scmp.eq.s32.totalorder %s9, 3
      %p64 = por %p62, %p63
      %p65 = scmp.ne.s32.totalorder %s57, %s60
      %p66 = scmp.eq.s32.totalorder %s9, 0
      %p67 = por %p65, %p66
      %p68 = scmp.ne.s32.totalorder %s57, %s60
      %p69 = scmp.eq.s32.totalorder %s14, 3
      %p70 = por %p68, %p69
      %p71 = scmp.ne.s32.totalorder %s60, %s61
      %p72 = scmp.eq.s32.totalorder %s14, 0
      %p73 = por %p71, %p72
      %p74 = scmp.ne.s32.totalorder %s60, %s61
      %p75 = scmp.eq.s32.totalorder %s15, 3
      %p76 = por %p74, %p75
      %p78 = scmp.ne.s32.totalorder %s61, %s77
      %p79 = scmp.eq.s32.totalorder %s15, 0
      %p80 = por %p78, %p79
      %s81 = ssub.s32 %s17, %s24
      %p82 = scmp.eq.s32.totalorder %s81, 0
      %s84 = sadd.s32 %s83, 1
      %s85 = scalar_select %p82, %s83, %s84
      %p88 = pneg %p82
      %p89 = scmp.eq.s32.totalorder %s9, 3
      %p90 = por %p88, %p89
      %p91 = scmp.ne.s32.totalorder %s83, %s86
      %p92 = scmp.eq.s32.totalorder %s9, 0
      %p93 = por %p91, %p92
      %p94 = scmp.ne.s32.totalorder %s83, %s86
      %p95 = scmp.eq.s32.totalorder %s14, 3
      %p96 = por %p94, %p95
      %p97 = scmp.ne.s32.totalorder %s86, %s87
      %p98 = scmp.eq.s32.totalorder %s14, 0
      %p99 = por %p97, %p98
      %p100 = scmp.ne.s32.totalorder %s86, %s87
      %p101 = scmp.eq.s32.totalorder %s15, 3
      %p102 = por %p100, %p101
      %p104 = scmp.ne.s32.totalorder %s87, %s103
      %p105 = scmp.eq.s32.totalorder %s15, 0
      %p106 = por %p104, %p105
      %s107 = ssub.s32 %s16, %s28
      %s108 = ssub.s32 %s17, %s24
      %s109 = sor.u32 %s107, %s108
      %p110 = scmp.eq.s32.totalorder %s109, 0
      %s112 = sadd.s32 %s111, 1
      %s113 = scalar_select %p110, %s111, %s112
      %p116 = pneg %p110
      %p117 = scmp.eq.s32.totalorder %s9, 3
      %p118 = por %p116, %p117
      %p119 = scmp.ne.s32.totalorder %s111, %s114
      %p120 = scmp.eq.s32.totalorder %s9, 0
      %p121 = por %p119, %p120
      %p122 = scmp.ne.s32.totalorder %s111, %s114
      %p123 = scmp.eq.s32.totalorder %s14, 3
      %p124 = por %p122, %p123
      %p125 = scmp.ne.s32.totalorder %s114, %s115
      %p126 = scmp.eq.s32.totalorder %s14, 0
      %p127 = por %p125, %p126
      %p128 = scmp.ne.s32.totalorder %s114, %s115
      %p129 = scmp.eq.s32.totalorder %s15, 3
      %p130 = por %p128, %p129
      %p132 = scmp.ne.s32.totalorder %s115, %s131
      %p133 = scmp.eq.s32.totalorder %s15, 0
      %p134 = por %p132, %p133
      %p135 = scmp.le.s32.totalorder 1, %s9
      %p136 = scmp.lt.s32.totalorder %s9, 5
      %p137 = pnand %p135, %p136
      %p138 = pneg %p137
      // Predicated region
      $region9: #{inception_b_forward.4} parent=5 // pred_check
        _
      $region10: #{inception_b_forward.4} parent=5 // pred_check_branch
        %140 = sbr.rel (%p137) target = $region12
      $region11: #{inception_b_forward.4} parent=5 // pred_region
        %s141 = ssub.s32 %s9, 1
      $region12: #{inception_b_forward.4} parent=5 // pred_fallthru
        _
      %p142 = scmp.lt.s32.totalorder %s9, 4
      // Predicated region
      $region13: #{inception_b_forward.4} parent=5 // pred_check
        %p143 = pneg %p142
      $region14: #{inception_b_forward.4} parent=5 // pred_check_branch
        %145 = sbr.rel (%p143) target = $region16
      $region15: #{inception_b_forward.4} parent=5 // pred_region
        // Predicated region
        $region17: #{inception_b_forward.4} parent=15 // pred_check
          %p146 = pneg %p41
        $region18: #{inception_b_forward.4} parent=15 // pred_check_branch
          %148 = sbr.rel (%p146) target = $region20
        $region19: #{inception_b_forward.4} parent=15 // pred_region
          %s149 = smul.u32 32, %s16
          %p150 = scmp.lt.s32.totalorder %s149, 63
          %s151 = scalar_select %p150, %s149, 63
          %s152 = smul.addr %s151, 4
          %s153 = scalar_lea.vmem %s0, %s152
          %s154 = smul.u32 32, %s16
        $region20: #{inception_b_forward.4} parent=15 // pred_fallthru
          _
        // Predicated region
        $region21: #{inception_b_forward.4} parent=15 // pred_check
          %p155 = pneg %p67
        $region22: #{inception_b_forward.4} parent=15 // pred_check_branch
          %157 = sbr.rel (%p155) target = $region24
        $region23: #{inception_b_forward.4} parent=15 // pred_region
          %s158 = smul.u32 2, %s17
          %p159 = scmp.lt.s32.totalorder %s158, 3
          %s160 = scalar_select %p159, %s158, 3
          %s161 = smul.addr %s160, 2
          %s162 = scalar_lea.vmem %s1, %s161
          %s163 = smul.u32 2, %s17
        $region24: #{inception_b_forward.4} parent=15 // pred_fallthru
          _
        // Predicated region
        $region25: #{inception_b_forward.4} parent=15 // pred_check
          %p164 = pneg %p93
        $region26: #{inception_b_forward.4} parent=15 // pred_check_branch
          %166 = sbr.rel (%p164) target = $region28
        $region27: #{inception_b_forward.4} parent=15 // pred_region
          %s167 = smul.u32 2, %s17
          %p168 = scmp.lt.s32.totalorder %s167, 3
          %s169 = scalar_select %p168, %s167, 3
          %s170 = scalar_lea.vmem %s2, %s169
          %s171 = smul.u32 2, %s17
        $region28: #{inception_b_forward.4} parent=15 // pred_fallthru
          _
      $region16: #{inception_b_forward.4} parent=5 // pred_fallthru
        _
      %p172 = scmp.le.s32.totalorder 1, %s9
      %p173 = scmp.lt.s32.totalorder %s9, 5
      %p174 = pnand %p172, %p173
      %p175 = pneg %p174
      // Predicated region
      $region29: #{inception_b_forward.4} parent=5 // pred_check
        _
      $region30: #{inception_b_forward.4} parent=5 // pred_check_branch
        %177 = sbr.rel (%p174) target = $region32
      $region31: #{inception_b_forward.4} parent=5 // pred_region
        %s178 = ssub.s32 %s9, 1
        %s179 = smul.u32 32, %s18
        %p180 = scmp.lt.s32.totalorder %s179, 63
        %s181 = scalar_select %p180, %s179, 63
        %s182 = smul.addr %s181, 4
        %s183 = scalar_lea.vmem %s0, %s182
        %p184 = pneg %p47
        %p185 = pneg %p44
        %s186 = smul.u32 2, %s19
        %p187 = scmp.lt.s32.totalorder %s186, 3
        %s188 = scalar_select %p187, %s186, 3
        %s189 = smul.addr %s188, 2
        %s190 = scalar_lea.vmem %s1, %s189
        %p191 = pneg %p73
        %p192 = pneg %p70
        %s193 = smul.u32 2, %s19
        %p194 = scmp.lt.s32.totalorder %s193, 3
        %s195 = scalar_select %p194, %s193, 3
        %s196 = scalar_lea.vmem %s2, %s195
        %p197 = pneg %p99
        %p198 = pneg %p96
        %p199 = pneg %p127
        %p200 = pneg %p124
        %s201 = sand.u32 %s114, 1
        %s202 = sand.u32 %s114, 1
        %s203 = smul.addr %s202, 256
        %s204 = scalar_lea.vmem [#allocation2], %s203
        %s205 = smul.u32 32, %s18
        %p206 = scmp.lt.s32.totalorder %s205, 63
        %s207 = scalar_select %p206, %s205, 63
        %s208 = smul.addr %s207, 4
        %s209 = scalar_lea.vmem %s0, %s208
        %s210 = smul.u32 32, %s18
        %s211 = smul.u32 2, %s19
        %p212 = scmp.lt.s32.totalorder %s211, 3
        %s213 = scalar_select %p212, %s211, 3
        %s214 = smul.addr %s213, 2
        %s215 = scalar_lea.vmem %s1, %s214
        %s216 = smul.u32 2, %s19
        %s217 = smul.u32 2, %s19
        %p218 = scmp.lt.s32.totalorder %s217, 3
        %s219 = scalar_select %p218, %s217, 3
        %s220 = scalar_lea.vmem %s2, %s219
        %s221 = smul.u32 2, %s19
        %s222 = smul.u32 32, %s18
        %s223 = smul.u32 2, %s19
        %v225 = vld [vmem:[%s209] sm:$0xf]
        %v226 = vld [vmem:[%s209 + $0x4] sm:$0xf]
        %v227 = vld [vmem:[%s209 + $0x8] sm:$0xf]
        %v228 = vld [vmem:[%s209 + $0xc] sm:$0xf]
        %v229 = vld [vmem:[%s209 + $0x10] sm:$0xf]
        %v230 = vld [vmem:[%s209 + $0x14] sm:$0xf]
        %v231 = vld [vmem:[%s209 + $0x18] sm:$0xf]
        %v232 = vld [vmem:[%s209 + $0x1c] sm:$0xf]
        %v233 = vld [vmem:[%s209 + $0x20] sm:$0xf]
        %v234 = vld [vmem:[%s209 + $0x24] sm:$0xf]
        %v235 = vld [vmem:[%s209 + $0x28] sm:$0xf]
        %v236 = vld [vmem:[%s209 + $0x2c] sm:$0xf]
        %v237 = vld [vmem:[%s209 + $0x30] sm:$0xf]
        %v238 = vld [vmem:[%s209 + $0x34] sm:$0xf]
        %v239 = vld [vmem:[%s209 + $0x38] sm:$0xf]
        %v240 = vld [vmem:[%s209 + $0x3c] sm:$0xf]
        %v241 = vld [vmem:[%s209 + $0x40] sm:$0xf]
        %v242 = vld [vmem:[%s209 + $0x44] sm:$0xf]
        %v243 = vld [vmem:[%s209 + $0x48] sm:$0xf]
        %v244 = vld [vmem:[%s209 + $0x4c] sm:$0xf]
        %v245 = vld [vmem:[%s209 + $0x50] sm:$0xf]
        %v246 = vld [vmem:[%s209 + $0x54] sm:$0xf]
        %v247 = vld [vmem:[%s209 + $0x58] sm:$0xf]
        %v248 = vld [vmem:[%s209 + $0x5c] sm:$0xf]
        %v249 = vld [vmem:[%s209 + $0x60] sm:$0xf]
        %v250 = vld [vmem:[%s209 + $0x64] sm:$0xf]
        %v251 = vld [vmem:[%s209 + $0x68] sm:$0xf]
        %v252 = vld [vmem:[%s209 + $0x6c] sm:$0xf]
        %v253 = vld [vmem:[%s209 + $0x70] sm:$0xf]
        %v254 = vld [vmem:[%s209 + $0x74] sm:$0xf]
        %v255 = vld [vmem:[%s209 + $0x78] sm:$0xf]
        %v256 = vld [vmem:[%s209 + $0x7c] sm:$0xf]
        %v257 = vld [vmem:[%s215] sm:$0xf]
        %v258 = vld [vmem:[%s220] sm:$0x3]
        %v260 = vperm.slane %v258, 0
        %v261 = vperm.slane %v258, 1
        %v296 = vunpack.c.l.b16 %v225
        %v297 = vunpack.c.l.b16 %v226
        %v298 = vunpack.c.l.b16 %v227
        %v299 = vunpack.c.l.b16 %v228
        %v300 = vunpack.c.l.b16 %v229
        %v301 = vunpack.c.l.b16 %v230
        %v302 = vunpack.c.l.b16 %v231
        %v303 = vunpack.c.l.b16 %v232
        %v304 = vunpack.c.l.b16 %v233
        %v305 = vunpack.c.l.b16 %v234
        %v306 = vunpack.c.l.b16 %v235
        %v307 = vunpack.c.l.b16 %v236
        %v308 = vunpack.c.l.b16 %v237
        %v309 = vunpack.c.l.b16 %v238
        %v310 = vunpack.c.l.b16 %v239
        %v311 = vunpack.c.l.b16 %v240
        %v312 = vunpack.c.l.b16 %v241
        %v313 = vunpack.c.l.b16 %v242
        %v314 = vunpack.c.l.b16 %v243
        %v315 = vunpack.c.l.b16 %v244
        %v316 = vunpack.c.l.b16 %v245
        %v317 = vunpack.c.l.b16 %v246
        %v318 = vunpack.c.l.b16 %v247
        %v319 = vunpack.c.l.b16 %v248
        %v320 = vunpack.c.l.b16 %v249
        %v321 = vunpack.c.l.b16 %v250
        %v322 = vunpack.c.l.b16 %v251
        %v323 = vunpack.c.l.b16 %v252
        %v324 = vunpack.c.l.b16 %v253
        %v325 = vunpack.c.l.b16 %v254
        %v326 = vunpack.c.l.b16 %v255
        %v327 = vunpack.c.l.b16 %v256
        %v328 = vpack.c.b16 %v297, %v296
        %v329 = vpack.c.b16 %v299, %v298
        %v330 = vpack.c.b16 %v301, %v300
        %v331 = vpack.c.b16 %v303, %v302
        %v332 = vpack.c.b16 %v305, %v304
        %v333 = vpack.c.b16 %v307, %v306
        %v334 = vpack.c.b16 %v309, %v308
        %v335 = vpack.c.b16 %v311, %v310
        %v336 = vpack.c.b16 %v313, %v312
        %v337 = vpack.c.b16 %v315, %v314
        %v338 = vpack.c.b16 %v317, %v316
        %v339 = vpack.c.b16 %v319, %v318
        %v340 = vpack.c.b16 %v321, %v320
        %v341 = vpack.c.b16 %v323, %v322
        %v342 = vpack.c.b16 %v325, %v324
        %v343 = vpack.c.b16 %v327, %v326
        %345 = vst [vmem:[#allocation1] ss:$4 sm:$0xff] %v257
        %v346 = vld.sshfl [vmem:[#allocation1] sm:$0xff pattern:$0x73625140]
        %v347 = vld.sshfl [vmem:[#allocation1 + $0x8] sm:$0xff pattern:$0x73625140]
        %vm348 = vcmask 31744
        %v350 = vsel %vm348, %v328, 0
        %v353 = vsel %vm348, %v329, 0
        %v356 = vsel %vm348, %v330, 0
        %v359 = vsel %vm348, %v331, 0
        %v362 = vsel %vm348, %v332, 0
        %v365 = vsel %vm348, %v333, 0
        %v368 = vsel %vm348, %v334, 0
        %v371 = vsel %vm348, %v335, 0
        %v374 = vsel %vm348, %v336, 0
        %v377 = vsel %vm348, %v337, 0
        %v380 = vsel %vm348, %v338, 0
        %v383 = vsel %vm348, %v339, 0
        %v386 = vsel %vm348, %v340, 0
        %v389 = vsel %vm348, %v341, 0
        %v392 = vsel %vm348, %v342, 0
        %v395 = vsel %vm348, %v343, 0
        %vm397 = vcmask 1041408
        %v398 = vsel %vm397, %v346, 0
        %v400 = vsel %vm397, %v347, 0
        %402 = vmatpush.bf16.msra.mxu0 0
        %403 = vmatpush.bf16.msra.mxu0 0
        %404 = vmatpush.bf16.msra.mxu0 0
        %405 = vmatpush.bf16.msra.mxu0 0
        %406 = vmatpush.bf16.msra.mxu0 0
        %407 = vmatpush.bf16.msra.mxu0 0
        %408 = vmatpush.bf16.msra.mxu0 0
        %409 = vmatpush.bf16.msra.mxu0 %v398
        %410 = vmatmul.bf16.gmra.mxu0 %v350
        %v411 = vpop.f32.mrf.mxu0
        %v412 = vadd.f32 %v260, %v411
        %v413 = vpop.f32.mrf.mxu0
        %v414 = vadd.f32 %v260, %v413
        %415 = vmatmul.bf16.gmra.mxu0 %v353
        %v416 = vpop.f32.mrf.mxu0
        %v417 = vadd.f32 %v260, %v416
        %v418 = vpop.f32.mrf.mxu0
        %v419 = vadd.f32 %v260, %v418
        %420 = vmatmul.bf16.gmra.mxu0 %v356
        %v421 = vpop.f32.mrf.mxu0
        %v422 = vadd.f32 %v260, %v421
        %v423 = vpop.f32.mrf.mxu0
        %v424 = vadd.f32 %v260, %v423
        %425 = vmatmul.bf16.gmra.mxu0 %v359
        %v426 = vpop.f32.mrf.mxu0
        %v427 = vadd.f32 %v260, %v426
        %v428 = vpop.f32.mrf.mxu0
        %v429 = vadd.f32 %v260, %v428
        %430 = vmatmul.bf16.gmra.mxu0 %v362
        %v431 = vpop.f32.mrf.mxu0
        %v432 = vadd.f32 %v260, %v431
        %v433 = vpop.f32.mrf.mxu0
        %v434 = vadd.f32 %v260, %v433
        %435 = vmatmul.bf16.gmra.mxu0 %v365
        %v436 = vpop.f32.mrf.mxu0
        %v437 = vadd.f32 %v260, %v436
        %v438 = vpop.f32.mrf.mxu0
        %v439 = vadd.f32 %v260, %v438
        %440 = vmatmul.bf16.gmra.mxu0 %v368
        %v441 = vpop.f32.mrf.mxu0
        %v442 = vadd.f32 %v260, %v441
        %v443 = vpop.f32.mrf.mxu0
        %v444 = vadd.f32 %v260, %v443
        %445 = vmatmul.bf16.gmra.mxu0 %v371
        %v446 = vpop.f32.mrf.mxu0
        %v447 = vadd.f32 %v260, %v446
        %v448 = vpop.f32.mrf.mxu0
        %v449 = vadd.f32 %v260, %v448
        %450 = vmatmul.bf16.gmra.mxu0 %v374
        %v451 = vpop.f32.mrf.mxu0
        %v452 = vadd.f32 %v260, %v451
        %v453 = vpop.f32.mrf.mxu0
        %v454 = vadd.f32 %v260, %v453
        %455 = vmatmul.bf16.gmra.mxu0 %v377
        %v456 = vpop.f32.mrf.mxu0
        %v457 = vadd.f32 %v260, %v456
        %v458 = vpop.f32.mrf.mxu0
        %v459 = vadd.f32 %v260, %v458
        %460 = vmatmul.bf16.gmra.mxu0 %v380
        %v461 = vpop.f32.mrf.mxu0
        %v462 = vadd.f32 %v260, %v461
        %v463 = vpop.f32.mrf.mxu0
        %v464 = vadd.f32 %v260, %v463
        %465 = vmatmul.bf16.gmra.mxu0 %v383
        %v466 = vpop.f32.mrf.mxu0
        %v467 = vadd.f32 %v260, %v466
        %v468 = vpop.f32.mrf.mxu0
        %v469 = vadd.f32 %v260, %v468
        %470 = vmatmul.bf16.gmra.mxu0 %v386
        %v471 = vpop.f32.mrf.mxu0
        %v472 = vadd.f32 %v260, %v471
        %v473 = vpop.f32.mrf.mxu0
        %v474 = vadd.f32 %v260, %v473
        %475 = vmatmul.bf16.gmra.mxu0 %v389
        %v476 = vpop.f32.mrf.mxu0
        %v477 = vadd.f32 %v260, %v476
        %v478 = vpop.f32.mrf.mxu0
        %v479 = vadd.f32 %v260, %v478
        %480 = vmatmul.bf16.gmra.mxu0 %v392
        %v481 = vpop.f32.mrf.mxu0
        %v482 = vadd.f32 %v260, %v481
        %v483 = vpop.f32.mrf.mxu0
        %v484 = vadd.f32 %v260, %v483
        %485 = vmatmul.bf16.gmra.mxu0 %v395
        %v486 = vpop.f32.mrf.mxu0
        %v487 = vadd.f32 %v260, %v486
        %v488 = vpop.f32.mrf.mxu0
        %v489 = vadd.f32 %v260, %v488
        %490 = vdwg.mxu0
        %491 = vmatpush.bf16.msra.mxu0 0
        %492 = vmatpush.bf16.msra.mxu0 0
        %493 = vmatpush.bf16.msra.mxu0 0
        %494 = vmatpush.bf16.msra.mxu0 0
        %495 = vmatpush.bf16.msra.mxu0 0
        %496 = vmatpush.bf16.msra.mxu0 0
        %497 = vmatpush.bf16.msra.mxu0 0
        %498 = vmatpush.bf16.msra.mxu0 %v400
        %499 = vmatmul.bf16.gmra.mxu0 %v350
        %v500 = vpop.f32.mrf.mxu0
        %v501 = vadd.f32 %v261, %v500
        %v502 = vpop.f32.mrf.mxu0
        %v503 = vadd.f32 %v261, %v502
        %504 = vmatmul.bf16.gmra.mxu0 %v353
        %v505 = vpop.f32.mrf.mxu0
        %v506 = vadd.f32 %v261, %v505
        %v507 = vpop.f32.mrf.mxu0
        %v508 = vadd.f32 %v261, %v507
        %509 = vmatmul.bf16.gmra.mxu0 %v356
        %v510 = vpop.f32.mrf.mxu0
        %v511 = vadd.f32 %v261, %v510
        %v512 = vpop.f32.mrf.mxu0
        %v513 = vadd.f32 %v261, %v512
        %514 = vmatmul.bf16.gmra.mxu0 %v359
        %v515 = vpop.f32.mrf.mxu0
        %v516 = vadd.f32 %v261, %v515
        %v517 = vpop.f32.mrf.mxu0
        %v518 = vadd.f32 %v261, %v517
        %519 = vmatmul.bf16.gmra.mxu0 %v362
        %v520 = vpop.f32.mrf.mxu0
        %v521 = vadd.f32 %v261, %v520
        %v522 = vpop.f32.mrf.mxu0
        %v523 = vadd.f32 %v261, %v522
        %524 = vmatmul.bf16.gmra.mxu0 %v365
        %v525 = vpop.f32.mrf.mxu0
        %v526 = vadd.f32 %v261, %v525
        %v527 = vpop.f32.mrf.mxu0
        %v528 = vadd.f32 %v261, %v527
        %529 = vmatmul.bf16.gmra.mxu0 %v368
        %v530 = vpop.f32.mrf.mxu0
        %v531 = vadd.f32 %v261, %v530
        %v532 = vpop.f32.mrf.mxu0
        %v533 = vadd.f32 %v261, %v532
        %534 = vmatmul.bf16.gmra.mxu0 %v371
        %v535 = vpop.f32.mrf.mxu0
        %v536 = vadd.f32 %v261, %v535
        %v537 = vpop.f32.mrf.mxu0
        %v538 = vadd.f32 %v261, %v537
        %539 = vmatmul.bf16.gmra.mxu0 %v374
        %v540 = vpop.f32.mrf.mxu0
        %v541 = vadd.f32 %v261, %v540
        %v542 = vpop.f32.mrf.mxu0
        %v543 = vadd.f32 %v261, %v542
        %544 = vmatmul.bf16.gmra.mxu0 %v377
        %v545 = vpop.f32.mrf.mxu0
        %v546 = vadd.f32 %v261, %v545
        %v547 = vpop.f32.mrf.mxu0
        %v548 = vadd.f32 %v261, %v547
        %549 = vmatmul.bf16.gmra.mxu0 %v380
        %v550 = vpop.f32.mrf.mxu0
        %v551 = vadd.f32 %v261, %v550
        %v552 = vpop.f32.mrf.mxu0
        %v553 = vadd.f32 %v261, %v552
        %554 = vmatmul.bf16.gmra.mxu0 %v383
        %v555 = vpop.f32.mrf.mxu0
        %v556 = vadd.f32 %v261, %v555
        %v557 = vpop.f32.mrf.mxu0
        %v558 = vadd.f32 %v261, %v557
        %559 = vmatmul.bf16.gmra.mxu0 %v386
        %v560 = vpop.f32.mrf.mxu0
        %v561 = vadd.f32 %v261, %v560
        %v562 = vpop.f32.mrf.mxu0
        %v563 = vadd.f32 %v261, %v562
        %564 = vmatmul.bf16.gmra.mxu0 %v389
        %v565 = vpop.f32.mrf.mxu0
        %v566 = vadd.f32 %v261, %v565
        %v567 = vpop.f32.mrf.mxu0
        %v568 = vadd.f32 %v261, %v567
        %569 = vmatmul.bf16.gmra.mxu0 %v392
        %v570 = vpop.f32.mrf.mxu0
        %v571 = vadd.f32 %v261, %v570
        %v572 = vpop.f32.mrf.mxu0
        %v573 = vadd.f32 %v261, %v572
        %574 = vmatmul.bf16.gmra.mxu0 %v395
        %v575 = vpop.f32.mrf.mxu0
        %v576 = vadd.f32 %v261, %v575
        %v577 = vpop.f32.mrf.mxu0
        %v578 = vadd.f32 %v261, %v577
        %579 = vdwg.mxu0
        %v580 = vpack.c.bf16 %v501, %v412
        %v581 = vpack.c.bf16 %v503, %v414
        %v582 = vpack.c.bf16 %v506, %v417
        %v583 = vpack.c.bf16 %v508, %v419
        %v584 = vpack.c.bf16 %v511, %v422
        %v585 = vpack.c.bf16 %v513, %v424
        %v586 = vpack.c.bf16 %v516, %v427
        %v587 = vpack.c.bf16 %v518, %v429
        %v588 = vpack.c.bf16 %v521, %v432
        %v589 = vpack.c.bf16 %v523, %v434
        %v590 = vpack.c.bf16 %v526, %v437
        %v591 = vpack.c.bf16 %v528, %v439
        %v592 = vpack.c.bf16 %v531, %v442
        %v593 = vpack.c.bf16 %v533, %v444
        %v594 = vpack.c.bf16 %v536, %v447
        %v595 = vpack.c.bf16 %v538, %v449
        %v596 = vpack.c.bf16 %v541, %v452
        %v597 = vpack.c.bf16 %v543, %v454
        %v598 = vpack.c.bf16 %v546, %v457
        %v599 = vpack.c.bf16 %v548, %v459
        %v600 = vpack.c.bf16 %v551, %v462
        %v601 = vpack.c.bf16 %v553, %v464
        %v602 = vpack.c.bf16 %v556, %v467
        %v603 = vpack.c.bf16 %v558, %v469
        %v604 = vpack.c.bf16 %v561, %v472
        %v605 = vpack.c.bf16 %v563, %v474
        %v606 = vpack.c.bf16 %v566, %v477
        %v607 = vpack.c.bf16 %v568, %v479
        %v608 = vpack.c.bf16 %v571, %v482
        %v609 = vpack.c.bf16 %v573, %v484
        %v610 = vpack.c.bf16 %v576, %v487
        %v611 = vpack.c.bf16 %v578, %v489
        %612 = vst [vmem:[%s204] sm:$0xff] %v580
        %613 = vst [vmem:[%s204 + $0x8] sm:$0xff] %v581
        %614 = vst [vmem:[%s204 + $0x10] sm:$0xff] %v582
        %615 = vst [vmem:[%s204 + $0x18] sm:$0xff] %v583
        %616 = vst [vmem:[%s204 + $0x20] sm:$0xff] %v584
        %617 = vst [vmem:[%s204 + $0x28] sm:$0xff] %v585
        %618 = vst [vmem:[%s204 + $0x30] sm:$0xff] %v586
        %619 = vst [vmem:[%s204 + $0x38] sm:$0xff] %v587
        %620 = vst [vmem:[%s204 + $0x40] sm:$0xff] %v588
        %621 = vst [vmem:[%s204 + $0x48] sm:$0xff] %v589
        %622 = vst [vmem:[%s204 + $0x50] sm:$0xff] %v590
        %623 = vst [vmem:[%s204 + $0x58] sm:$0xff] %v591
        %624 = vst [vmem:[%s204 + $0x60] sm:$0xff] %v592
        %625 = vst [vmem:[%s204 + $0x68] sm:$0xff] %v593
        %626 = vst [vmem:[%s204 + $0x70] sm:$0xff] %v594
        %627 = vst [vmem:[%s204 + $0x78] sm:$0xff] %v595
        %628 = vst [vmem:[%s204 + $0x80] sm:$0xff] %v596
        %629 = vst [vmem:[%s204 + $0x88] sm:$0xff] %v597
        %630 = vst [vmem:[%s204 + $0x90] sm:$0xff] %v598
        %631 = vst [vmem:[%s204 + $0x98] sm:$0xff] %v599
        %632 = vst [vmem:[%s204 + $0xa0] sm:$0xff] %v600
        %633 = vst [vmem:[%s204 + $0xa8] sm:$0xff] %v601
        %634 = vst [vmem:[%s204 + $0xb0] sm:$0xff] %v602
        %635 = vst [vmem:[%s204 + $0xb8] sm:$0xff] %v603
        %636 = vst [vmem:[%s204 + $0xc0] sm:$0xff] %v604
        %637 = vst [vmem:[%s204 + $0xc8] sm:$0xff] %v605
        %638 = vst [vmem:[%s204 + $0xd0] sm:$0xff] %v606
        %639 = vst [vmem:[%s204 + $0xd8] sm:$0xff] %v607
        %640 = vst [vmem:[%s204 + $0xe0] sm:$0xff] %v608
        %641 = vst [vmem:[%s204 + $0xe8] sm:$0xff] %v609
        %642 = vst [vmem:[%s204 + $0xf0] sm:$0xff] %v610
        %643 = vst [vmem:[%s204 + $0xf8] sm:$0xff] %v611
        %s644 = sand.u32 %s114, 1
        %s645 = sand.u32 %s114, 1
        %s646 = smul.addr %s645, 256
        %s647 = scalar_lea.vmem [#allocation2], %s646
        // Predicated region
        $region33: #{inception_b_forward.4} parent=31 // pred_check
          %p648 = pneg %p124
        $region34: #{inception_b_forward.4} parent=31 // pred_check_branch
          %650 = sbr.rel (%p648) target = $region36
        $region35: #{inception_b_forward.4} parent=31 // pred_region
          %s651 = smul.u32 32, %s18
          %s652 = smul.u32 2, %s19
          %s653 = smul.addr %s651, 4
          %s654 = sadd.s32 %s652, %s653
          %s655 = smul.addr %s654, 4
          %s656 = scalar_lea.vmem %s3, %s655
          // Predicated region
          $region37: #{inception_b_forward.4} parent=35 // pred_check
            _
          $region38: #{inception_b_forward.4} parent=35 // pred_check_branch
            %658 = sbr.rel (0) target = $region40
          $region39: #{inception_b_forward.4} parent=35 // pred_region
            // Predicated region
            $region41: #{inception_b_forward.4} parent=39 // pred_check
              _
            $region42: #{inception_b_forward.4} parent=39 // pred_check_branch
              %660 = sbr.rel (0) target = $region44
            $region43: #{inception_b_forward.4} parent=39 // pred_region
              // Predicated region
              $region56: #{inception_b_forward.4} parent=43 // pred_check
                _
              $region57: #{inception_b_forward.4} parent=43 // pred_check_branch
                %738 = sbr.rel (0) target = $region59
              $region58: #{inception_b_forward.4} parent=43 // pred_region
                loop: start=0, step=1, limit=1
                $region60: #{inception_b_forward.4} parent=58 // loop_pre_header
                  _
                $region61: #{inception_b_forward.4} parent=58 // loop_header
                  %s740 = sphi 0, %s744
                  %p741 = scmp.ge.s32.totalorder %s740, 1
                  %s745 = sphi %s647, %s647
                  %s746 = sphi %s656, %s656
                $region62: #{inception_b_forward.4} parent=58 // loop_header_branch
                  %743 = sbr.rel (%p741) target = $region66
                $region63: #{inception_b_forward.4} parent=58 // loop_body
                  %v747 = vld [vmem:[%s745] sm:$0xff]
                  %748 = vst [vmem:[%s746] sm:$0xff] %v747
                  %v749 = vld [vmem:[%s745 + $0x8] sm:$0xff]
                  %750 = vst [vmem:[%s746 + $0x10] sm:$0xff] %v749
                  %v751 = vld [vmem:[%s745 + $0x10] sm:$0xff]
                  %752 = vst [vmem:[%s746 + $0x20] sm:$0xff] %v751
                  %v753 = vld [vmem:[%s745 + $0x18] sm:$0xff]
                  %754 = vst [vmem:[%s746 + $0x30] sm:$0xff] %v753
                  %v755 = vld [vmem:[%s745 + $0x20] sm:$0xff]
                  %756 = vst [vmem:[%s746 + $0x40] sm:$0xff] %v755
                  %v757 = vld [vmem:[%s745 + $0x28] sm:$0xff]
                  %758 = vst [vmem:[%s746 + $0x50] sm:$0xff] %v757
                  %v759 = vld [vmem:[%s745 + $0x30] sm:$0xff]
                  %760 = vst [vmem:[%s746 + $0x60] sm:$0xff] %v759
                  %v761 = vld [vmem:[%s745 + $0x38] sm:$0xff]
                  %762 = vst [vmem:[%s746 + $0x70] sm:$0xff] %v761
                  %v763 = vld [vmem:[%s745 + $0x40] sm:$0xff]
                  %764 = vst [vmem:[%s746 + $0x80] sm:$0xff] %v763
                  %v765 = vld [vmem:[%s745 + $0x48] sm:$0xff]
                  %766 = vst [vmem:[%s746 + $0x90] sm:$0xff] %v765
                  %v767 = vld [vmem:[%s745 + $0x50] sm:$0xff]
                  %768 = vst [vmem:[%s746 + $0xa0] sm:$0xff] %v767
                  %v769 = vld [vmem:[%s745 + $0x58] sm:$0xff]
                  %770 = vst [vmem:[%s746 + $0xb0] sm:$0xff] %v769
                  %v771 = vld [vmem:[%s745 + $0x60] sm:$0xff]
                  %772 = vst [vmem:[%s746 + $0xc0] sm:$0xff] %v771
                  %v773 = vld [vmem:[%s745 + $0x68] sm:$0xff]
                  %774 = vst [vmem:[%s746 + $0xd0] sm:$0xff] %v773
                  %v775 = vld [vmem:[%s745 + $0x70] sm:$0xff]
                  %776 = vst [vmem:[%s746 + $0xe0] sm:$0xff] %v775
                  %v777 = vld [vmem:[%s745 + $0x78] sm:$0xff]
                  %778 = vst [vmem:[%s746 + $0xf0] sm:$0xff] %v777
                  %v779 = vld [vmem:[%s745 + $0x80] sm:$0xff]
                  %780 = vst [vmem:[%s746 + $0x100] sm:$0xff] %v779
                  %v781 = vld [vmem:[%s745 + $0x88] sm:$0xff]
                  %782 = vst [vmem:[%s746 + $0x110] sm:$0xff] %v781
                  %v783 = vld [vmem:[%s745 + $0x90] sm:$0xff]
                  %784 = vst [vmem:[%s746 + $0x120] sm:$0xff] %v783
                  %v785 = vld [vmem:[%s745 + $0x98] sm:$0xff]
                  %786 = vst [vmem:[%s746 + $0x130] sm:$0xff] %v785
                  %v787 = vld [vmem:[%s745 + $0xa0] sm:$0xff]
                  %788 = vst [vmem:[%s746 + $0x140] sm:$0xff] %v787
                  %v789 = vld [vmem:[%s745 + $0xa8] sm:$0xff]
                  %790 = vst [vmem:[%s746 + $0x150] sm:$0xff] %v789
                  %v791 = vld [vmem:[%s745 + $0xb0] sm:$0xff]
                  %792 = vst [vmem:[%s746 + $0x160] sm:$0xff] %v791
                  %v793 = vld [vmem:[%s745 + $0xb8] sm:$0xff]
                  %794 = vst [vmem:[%s746 + $0x170] sm:$0xff] %v793
                  %v795 = vld [vmem:[%s745 + $0xc0] sm:$0xff]
                  %796 = vst [vmem:[%s746 + $0x180] sm:$0xff] %v795
                  %v797 = vld [vmem:[%s745 + $0xc8] sm:$0xff]
                  %798 = vst [vmem:[%s746 + $0x190] sm:$0xff] %v797
                  %v799 = vld [vmem:[%s745 + $0xd0] sm:$0xff]
                  %800 = vst [vmem:[%s746 + $0x1a0] sm:$0xff] %v799
                  %v801 = vld [vmem:[%s745 + $0xd8] sm:$0xff]
                  %802 = vst [vmem:[%s746 + $0x1b0] sm:$0xff] %v801
                  %v803 = vld [vmem:[%s745 + $0xe0] sm:$0xff]
                  %804 = vst [vmem:[%s746 + $0x1c0] sm:$0xff] %v803
                  %v805 = vld [vmem:[%s745 + $0xe8] sm:$0xff]
                  %806 = vst [vmem:[%s746 + $0x1d0] sm:$0xff] %v805
                  %v807 = vld [vmem:[%s745 + $0xf0] sm:$0xff]
                  %808 = vst [vmem:[%s746 + $0x1e0] sm:$0xff] %v807
                  %v809 = vld [vmem:[%s745 + $0xf8] sm:$0xff]
                  %810 = vst [vmem:[%s746 + $0x1f0] sm:$0xff] %v809
                $region64: #{inception_b_forward.4} parent=58 // loop_footer
                  %s744 = sadd.s32 1, %s740
                $region65: #{inception_b_forward.4} parent=58 // loop_footer_branch
                  %739 = sbr.rel target = $region61
                $region66: #{inception_b_forward.4} parent=58 // loop_exit
                  _
              $region59: #{inception_b_forward.4} parent=43 // pred_fallthru
                _
              // Predicated region
              $region67: #{inception_b_forward.4} parent=43 // pred_check
                _
              $region68: #{inception_b_forward.4} parent=43 // pred_check_branch
                %812 = sbr.rel target = $region70
              $region69: #{inception_b_forward.4} parent=43 // pred_region
                _
              $region70: #{inception_b_forward.4} parent=43 // pred_fallthru
                _
            $region44: #{inception_b_forward.4} parent=39 // pred_fallthru
              _
            // Predicated region
            $region45: #{inception_b_forward.4} parent=39 // pred_check
              _
            $region46: #{inception_b_forward.4} parent=39 // pred_check_branch
              %662 = sbr.rel target = $region48
            $region47: #{inception_b_forward.4} parent=39 // pred_region
              %s664 = ssub.s32 256, 1
              loop: start=0, step=1, limit=1
              $region49: #{inception_b_forward.4} parent=47 // loop_pre_header
                _
              $region50: #{inception_b_forward.4} parent=47 // loop_header
                %s666 = sphi 0, %s670
                %p667 = scmp.ge.s32.totalorder %s666, 1
                %s671 = sphi %s647, %s647
                %s672 = sphi %s656, %s656
              $region51: #{inception_b_forward.4} parent=47 // loop_header_branch
                %669 = sbr.rel (%p667) target = $region55
              $region52: #{inception_b_forward.4} parent=47 // loop_body
                %v673 = vld [vmem:[%s671] sm:%s664]
                %674 = vst [vmem:[%s672] sm:%s664] %v673
                %v675 = vld [vmem:[%s671 + $0x8] sm:%s664]
                %676 = vst [vmem:[%s672 + $0x10] sm:%s664] %v675
                %v677 = vld [vmem:[%s671 + $0x10] sm:%s664]
                %678 = vst [vmem:[%s672 + $0x20] sm:%s664] %v677
                %v679 = vld [vmem:[%s671 + $0x18] sm:%s664]
                %680 = vst [vmem:[%s672 + $0x30] sm:%s664] %v679
                %v681 = vld [vmem:[%s671 + $0x20] sm:%s664]
                %682 = vst [vmem:[%s672 + $0x40] sm:%s664] %v681
                %v683 = vld [vmem:[%s671 + $0x28] sm:%s664]
                %684 = vst [vmem:[%s672 + $0x50] sm:%s664] %v683
                %v685 = vld [vmem:[%s671 + $0x30] sm:%s664]
                %686 = vst [vmem:[%s672 + $0x60] sm:%s664] %v685
                %v687 = vld [vmem:[%s671 + $0x38] sm:%s664]
                %688 = vst [vmem:[%s672 + $0x70] sm:%s664] %v687
                %v689 = vld [vmem:[%s671 + $0x40] sm:%s664]
                %690 = vst [vmem:[%s672 + $0x80] sm:%s664] %v689
                %v691 = vld [vmem:[%s671 + $0x48] sm:%s664]
                %692 = vst [vmem:[%s672 + $0x90] sm:%s664] %v691
                %v693 = vld [vmem:[%s671 + $0x50] sm:%s664]
                %694 = vst [vmem:[%s672 + $0xa0] sm:%s664] %v693
                %v695 = vld [vmem:[%s671 + $0x58] sm:%s664]
                %696 = vst [vmem:[%s672 + $0xb0] sm:%s664] %v695
                %v697 = vld [vmem:[%s671 + $0x60] sm:%s664]
                %698 = vst [vmem:[%s672 + $0xc0] sm:%s664] %v697
                %v699 = vld [vmem:[%s671 + $0x68] sm:%s664]
                %700 = vst [vmem:[%s672 + $0xd0] sm:%s664] %v699
                %v701 = vld [vmem:[%s671 + $0x70] sm:%s664]
                %702 = vst [vmem:[%s672 + $0xe0] sm:%s664] %v701
                %v703 = vld [vmem:[%s671 + $0x78] sm:%s664]
                %704 = vst [vmem:[%s672 + $0xf0] sm:%s664] %v703
                %v705 = vld [vmem:[%s671 + $0x80] sm:%s664]
                %706 = vst [vmem:[%s672 + $0x100] sm:%s664] %v705
                %v707 = vld [vmem:[%s671 + $0x88] sm:%s664]
                %708 = vst [vmem:[%s672 + $0x110] sm:%s664] %v707
                %v709 = vld [vmem:[%s671 + $0x90] sm:%s664]
                %710 = vst [vmem:[%s672 + $0x120] sm:%s664] %v709
                %v711 = vld [vmem:[%s671 + $0x98] sm:%s664]
                %712 = vst [vmem:[%s672 + $0x130] sm:%s664] %v711
                %v713 = vld [vmem:[%s671 + $0xa0] sm:%s664]
                %714 = vst [vmem:[%s672 + $0x140] sm:%s664] %v713
                %v715 = vld [vmem:[%s671 + $0xa8] sm:%s664]
                %716 = vst [vmem:[%s672 + $0x150] sm:%s664] %v715
                %v717 = vld [vmem:[%s671 + $0xb0] sm:%s664]
                %718 = vst [vmem:[%s672 + $0x160] sm:%s664] %v717
                %v719 = vld [vmem:[%s671 + $0xb8] sm:%s664]
                %720 = vst [vmem:[%s672 + $0x170] sm:%s664] %v719
                %v721 = vld [vmem:[%s671 + $0xc0] sm:%s664]
                %722 = vst [vmem:[%s672 + $0x180] sm:%s664] %v721
                %v723 = vld [vmem:[%s671 + $0xc8] sm:%s664]
                %724 = vst [vmem:[%s672 + $0x190] sm:%s664] %v723
                %v725 = vld [vmem:[%s671 + $0xd0] sm:%s664]
                %726 = vst [vmem:[%s672 + $0x1a0] sm:%s664] %v725
                %v727 = vld [vmem:[%s671 + $0xd8] sm:%s664]
                %728 = vst [vmem:[%s672 + $0x1b0] sm:%s664] %v727
                %v729 = vld [vmem:[%s671 + $0xe0] sm:%s664]
                %730 = vst [vmem:[%s672 + $0x1c0] sm:%s664] %v729
                %v731 = vld [vmem:[%s671 + $0xe8] sm:%s664]
                %732 = vst [vmem:[%s672 + $0x1d0] sm:%s664] %v731
                %v733 = vld [vmem:[%s671 + $0xf0] sm:%s664]
                %734 = vst [vmem:[%s672 + $0x1e0] sm:%s664] %v733
                %v735 = vld [vmem:[%s671 + $0xf8] sm:%s664]
                %736 = vst [vmem:[%s672 + $0x1f0] sm:%s664] %v735
              $region53: #{inception_b_forward.4} parent=47 // loop_footer
                %s670 = sadd.s32 1, %s666
              $region54: #{inception_b_forward.4} parent=47 // loop_footer_branch
                %665 = sbr.rel target = $region50
              $region55: #{inception_b_forward.4} parent=47 // loop_exit
                _
            $region48: #{inception_b_forward.4} parent=39 // pred_fallthru
              _
          $region40: #{inception_b_forward.4} parent=35 // pred_fallthru
            _
          %813 = vnop
        $region36: #{inception_b_forward.4} parent=31 // pred_fallthru
          _
      $region32: #{inception_b_forward.4} parent=5 // pred_fallthru
        _
      %p814 = scmp.le.s32.totalorder 2, %s9
      // Predicated region
      $region71: #{inception_b_forward.4} parent=5 // pred_check
        %p815 = pneg %p814
      $region72: #{inception_b_forward.4} parent=5 // pred_check_branch
        %817 = sbr.rel (%p815) target = $region74
      $region73: #{inception_b_forward.4} parent=5 // pred_region
        %s818 = ssub.s32 %s9, 2
        // Predicated region
        $region75: #{inception_b_forward.4} parent=73 // pred_check
          %p819 = pneg %p130
        $region76: #{inception_b_forward.4} parent=73 // pred_check_branch
          %821 = sbr.rel (%p819) target = $region78
        $region77: #{inception_b_forward.4} parent=73 // pred_region
          %s822 = sand.u32 %s115, 1
          %s823 = sand.u32 %s115, 1
          %s824 = smul.addr %s823, 256
          %s825 = scalar_lea.vmem [#allocation2], %s824
        $region78: #{inception_b_forward.4} parent=73 // pred_fallthru
          _
      $region74: #{inception_b_forward.4} parent=5 // pred_fallthru
        _
    $region6: #{inception_b_forward.4} parent=1 // loop_footer
      %s13 = sadd.s32 1, %s9
    $region7: #{inception_b_forward.4} parent=1 // loop_footer_branch
      %8 = sbr.rel target = $region3
    $region8: #{inception_b_forward.4} parent=1 // loop_exit
      _

// kernel: inception_b_forward.5
$region0: #{inception_b_forward.5}
  #allocation0 [shape = 'u32[]', space=smem, size = 0x4, offset = 0x4, fixed_abs, tag = 'smem constant byte address 0x4 - core index']
  #allocation1 [shape = 'u32[72,128]{1,0:T(1,128)}', space=vmem, size = 0x9000, scoped, tag = 'internal scratch']
  %s0 = inlined_call_operand.vmem [shape: bf16[2,18,18,64], index: 0, kind: input, shape index: {}]
  %s1 = inlined_call_operand.vmem [shape: bf16[9,64,128], index: 1, kind: input, shape index: {}]
  %s2 = inlined_call_operand.vmem [shape: f32[1,128], index: 2, kind: input, shape index: {}]
  %s3 = inlined_call_operand.vmem [shape: bf16[2,16,16,128], index: 3, kind: output, shape index: {}]
  %s4 = sld [smem:[#allocation0]]
  $region45: #{inception_b_forward.5} parent=0
    _
  %s6 = ssub.s32 1, %s4
  %s7 = scalar_select 0, %s6, %s4
  loop: start=0, step=1, limit=4
  $region2: #{inception_b_forward.5} parent=0 // loop_pre_header
    _
  $region3: #{inception_b_forward.5} parent=0 // loop_header
    %s9 = sphi 0, %s13
    %p10 = scmp.ge.s32.totalorder %s9, 4
    %s19 = sphi 0, %s21
    %s22 = sphi 0, %s19
    %s23 = sphi 0, %s22
    %s39 = sphi 0, %s23
    %s43 = sphi 0, %s43
    %s45 = sphi 0, %s43
    %s46 = sphi 0, %s45
    %s60 = sphi 0, %s46
    %s64 = sphi 0, %s64
    %s66 = sphi 0, %s64
    %s67 = sphi 0, %s66
    %s81 = sphi 0, %s67
    %s87 = sphi 0, %s89
    %s90 = sphi 0, %s87
    %s91 = sphi 0, %s90
    %s107 = sphi 0, %s91
  $region4: #{inception_b_forward.5} parent=0 // loop_header_branch
    %12 = sbr.rel (%p10) target = $region8
  $region5: #{inception_b_forward.5} parent=0 // loop_body
    %s14 = ssub.s32 %s9, 1
    %s15 = ssub.s32 %s9, 2
    %s16 = sadd.s32 %s9, 1
    %s17 = ssub.s32 %s9, %s16
    %p18 = scmp.eq.s32.totalorder %s17, 0
    %s20 = sadd.s32 %s19, 1
    %s21 = scalar_select %p18, %s19, %s20
    %p24 = pneg %p18
    %p25 = scmp.eq.s32.totalorder %s9, 1
    %p26 = por %p24, %p25
    %p27 = scmp.ne.s32.totalorder %s19, %s22
    %p28 = scmp.eq.s32.totalorder %s9, 0
    %p29 = por %p27, %p28
    %p30 = scmp.ne.s32.totalorder %s19, %s22
    %p31 = scmp.eq.s32.totalorder %s14, 1
    %p32 = por %p30, %p31
    %p33 = scmp.ne.s32.totalorder %s22, %s23
    %p34 = scmp.eq.s32.totalorder %s14, 0
    %p35 = por %p33, %p34
    %p36 = scmp.ne.s32.totalorder %s22, %s23
    %p37 = scmp.eq.s32.totalorder %s15, 1
    %p38 = por %p36, %p37
    %p40 = scmp.ne.s32.totalorder %s23, %s39
    %p41 = scmp.eq.s32.totalorder %s15, 0
    %p42 = por %p40, %p41
    %s44 = sadd.s32 %s43, 1
    %p47 = scmp.eq.s32.totalorder %s9, 1
    %p48 = scmp.ne.s32.totalorder %s43, %s45
    %p49 = scmp.eq.s32.totalorder %s9, 0
    %p50 = por %p48, %p49
    %p51 = scmp.ne.s32.totalorder %s43, %s45
    %p52 = scmp.eq.s32.totalorder %s14, 1
    %p53 = por %p51, %p52
    %p54 = scmp.ne.s32.totalorder %s45, %s46
    %p55 = scmp.eq.s32.totalorder %s14, 0
    %p56 = por %p54, %p55
    %p57 = scmp.ne.s32.totalorder %s45, %s46
    %p58 = scmp.eq.s32.totalorder %s15, 1
    %p59 = por %p57, %p58
    %p61 = scmp.ne.s32.totalorder %s46, %s60
    %p62 = scmp.eq.s32.totalorder %s15, 0
    %p63 = por %p61, %p62
    %s65 = sadd.s32 %s64, 1
    %p68 = scmp.eq.s32.totalorder %s9, 1
    %p69 = scmp.ne.s32.totalorder %s64, %s66
    %p70 = scmp.eq.s32.totalorder %s9, 0
    %p71 = por %p69, %p70
    %p72 = scmp.ne.s32.totalorder %s64, %s66
    %p73 = scmp.eq.s32.totalorder %s14, 1
    %p74 = por %p72, %p73
    %p75 = scmp.ne.s32.totalorder %s66, %s67
    %p76 = scmp.eq.s32.totalorder %s14, 0
    %p77 = por %p75, %p76
    %p78 = scmp.ne.s32.totalorder %s66, %s67
    %p79 = scmp.eq.s32.totalorder %s15, 1
    %p80 = por %p78, %p79
    %p82 = scmp.ne.s32.totalorder %s67, %s81
    %p83 = scmp.eq.s32.totalorder %s15, 0
    %p84 = por %p82, %p83
    %s85 = ssub.s32 %s9, %s16
    %p86 = scmp.eq.s32.totalorder %s85, 0
    %s88 = sadd.s32 %s87, 1
    %s89 = scalar_select %p86, %s87, %s88
    %p92 = pneg %p86
    %p93 = scmp.eq.s32.totalorder %s9, 1
    %p94 = por %p92, %p93
    %p95 = scmp.ne.s32.totalorder %s87, %s90
    %p96 = scmp.eq.s32.totalorder %s9, 0
    %p97 = por %p95, %p96
    %p98 = scmp.ne.s32.totalorder %s87, %s90
    %p99 = scmp.eq.s32.totalorder %s14, 1
    %p100 = por %p98, %p99
    %p101 = scmp.ne.s32.totalorder %s90, %s91
    %p102 = scmp.eq.s32.totalorder %s14, 0
    %p103 = por %p101, %p102
    %p104 = scmp.ne.s32.totalorder %s90, %s91
    %p105 = scmp.eq.s32.totalorder %s15, 1
    %p106 = por %p104, %p105
    %p108 = scmp.ne.s32.totalorder %s91, %s107
    %p109 = scmp.eq.s32.totalorder %s15, 0
    %p110 = por %p108, %p109
    %p111 = scmp.le.s32.totalorder 1, %s9
    %p112 = scmp.lt.s32.totalorder %s9, 3
    %p113 = pnand %p111, %p112
    %p114 = pneg %p113
    // Predicated region
    $region9: #{inception_b_forward.5} parent=5 // pred_check
      _
    $region10: #{inception_b_forward.5} parent=5 // pred_check_branch
      %116 = sbr.rel (%p113) target = $region12
    $region11: #{inception_b_forward.5} parent=5 // pred_region
      %s117 = ssub.s32 %s9, 1
      // Predicated region
      $region13: #{inception_b_forward.5} parent=11 // pred_check
        %p118 = pneg %p56
      $region14: #{inception_b_forward.5} parent=11 // pred_check_branch
        %120 = sbr.rel (%p118) target = $region16
      $region15: #{inception_b_forward.5} parent=11 // pred_region
        _
      $region16: #{inception_b_forward.5} parent=11 // pred_fallthru
        _
      // Predicated region
      $region17: #{inception_b_forward.5} parent=11 // pred_check
        %p121 = pneg %p77
      $region18: #{inception_b_forward.5} parent=11 // pred_check_branch
        %123 = sbr.rel (%p121) target = $region20
      $region19: #{inception_b_forward.5} parent=11 // pred_region
        _
      $region20: #{inception_b_forward.5} parent=11 // pred_fallthru
        _
    $region12: #{inception_b_forward.5} parent=5 // pred_fallthru
      _
    %p124 = scmp.lt.s32.totalorder %s9, 2
    // Predicated region
    $region21: #{inception_b_forward.5} parent=5 // pred_check
      %p125 = pneg %p124
    $region22: #{inception_b_forward.5} parent=5 // pred_check_branch
      %127 = sbr.rel (%p125) target = $region24
    $region23: #{inception_b_forward.5} parent=5 // pred_region
      // Predicated region
      $region25: #{inception_b_forward.5} parent=23 // pred_check
        %p128 = pneg %p29
      $region26: #{inception_b_forward.5} parent=23 // pred_check_branch
        %130 = sbr.rel (%p128) target = $region28
      $region27: #{inception_b_forward.5} parent=23 // pred_region
        %p131 = scmp.lt.s32.totalorder %s9, 1
        %s132 = scalar_select %p131, %s9, 1
        %s133 = smul.addr %s132, 54
        %s134 = smul.addr %s133, 4
        %s135 = scalar_lea.vmem %s0, %s134
      $region28: #{inception_b_forward.5} parent=23 // pred_fallthru
        _
    $region24: #{inception_b_forward.5} parent=5 // pred_fallthru
      _
    %p136 = scmp.le.s32.totalorder 1, %s9
    %p137 = scmp.lt.s32.totalorder %s9, 3
    %p138 = pnand %p136, %p137
    %p139 = pneg %p138
    // Predicated region
    $region29: #{inception_b_forward.5} parent=5 // pred_check
      _
    $region30: #{inception_b_forward.5} parent=5 // pred_check_branch
      %141 = sbr.rel (%p138) target = $region32
    $region31: #{inception_b_forward.5} parent=5 // pred_region
      %s142 = ssub.s32 %s9, 1
      %p143 = scmp.lt.s32.totalorder %s14, 1
      %s144 = scalar_select %p143, %s14, 1
      %s145 = smul.addr %s144, 54
      %s146 = smul.addr %s145, 4
      %s147 = scalar_lea.vmem %s0, %s146
      %p148 = pneg %p35
      %p149 = pneg %p32
      %p150 = pneg %p56
      %p151 = pneg %p53
      %p152 = pneg %p77
      %p153 = pneg %p74
      %p154 = pneg %p103
      %p155 = pneg %p100
      %p156 = scmp.lt.s32.totalorder %s14, 1
      %s157 = scalar_select %p156, %s14, 1
      %s158 = smul.addr %s157, 32
      %s159 = smul.addr %s158, 4
      %s160 = scalar_lea.vmem %s3, %s159
      %p161 = scmp.lt.s32.totalorder %s14, 1
      %s162 = scalar_select %p161, %s14, 1
      %s163 = smul.addr %s162, 54
      %s164 = smul.addr %s163, 4
      %s165 = scalar_lea.vmem %s0, %s164
      %p166 = scmp.lt.s32.totalorder %s14, 1
      %s167 = scalar_select %p166, %s14, 1
      %s168 = smul.addr %s167, 32
      %s169 = smul.addr %s168, 4
      %s170 = scalar_lea.vmem %s3, %s169
      %v172 = vld [vmem:[%s165] sm:$0xf]
      %v173 = vld [vmem:[%s165 + $0x4] sm:$0xf]
      %v174 = vld [vmem:[%s165 + $0x8] sm:$0x1]
      %v175 = vld [vmem:[%s165 + $0xc] sm:$0xf]
      %v176 = vld [vmem:[%s165 + $0x10] sm:$0xf]
      %v177 = vld [vmem:[%s165 + $0x14] sm:$0x1]
      %v178 = vld [vmem:[%s165 + $0x18] sm:$0xf]
      %v179 = vld [vmem:[%s165 + $0x1c] sm:$0xf]
      %v180 = vld [vmem:[%s165 + $0x20] sm:$0x1]
      %v181 = vld [vmem:[%s165 + $0x24] sm:$0xf]
      %v182 = vld [vmem:[%s165 + $0x28] sm:$0xf]
      %v183 = vld [vmem:[%s165 + $0x2c] sm:$0x1]
      %v184 = vld [vmem:[%s165 + $0x30] sm:$0xf]
      %v185 = vld [vmem:[%s165 + $0x34] sm:$0xf]
      %v186 = vld [vmem:[%s165 + $0x38] sm:$0x1]
      %v187 = vld [vmem:[%s165 + $0x3c] sm:$0xf]
      %v188 = vld [vmem:[%s165 + $0x40] sm:$0xf]
      %v189 = vld [vmem:[%s165 + $0x44] sm:$0x1]
      %v190 = vld [vmem:[%s165 + $0x48] sm:$0xf]
      %v191 = vld [vmem:[%s165 + $0x4c] sm:$0xf]
      %v192 = vld [vmem:[%s165 + $0x50] sm:$0x1]
      %v193 = vld [vmem:[%s165 + $0x54] sm:$0xf]
      %v194 = vld [vmem:[%s165 + $0x58] sm:$0xf]
      %v195 = vld [vmem:[%s165 + $0x5c] sm:$0x1]
      %v196 = vld [vmem:[%s165 + $0x60] sm:$0xf]
      %v197 = vld [vmem:[%s165 + $0x64] sm:$0xf]
      %v198 = vld [vmem:[%s165 + $0x68] sm:$0x1]
      %v199 = vld [vmem:[%s165 + $0x6c] sm:$0xf]
      %v200 = vld [vmem:[%s165 + $0x70] sm:$0xf]
      %v201 = vld [vmem:[%s165 + $0x74] sm:$0x1]
      %v202 = vld [vmem:[%s165 + $0x78] sm:$0xf]
      %v203 = vld [vmem:[%s165 + $0x7c] sm:$0xf]
      %v204 = vld [vmem:[%s165 + $0x80] sm:$0x1]
      %v205 = vld [vmem:[%s165 + $0x84] sm:$0xf]
      %v206 = vld [vmem:[%s165 + $0x88] sm:$0xf]
      %v207 = vld [vmem:[%s165 + $0x8c] sm:$0x1]
      %v208 = vld [vmem:[%s165 + $0x90] sm:$0xf]
      %v209 = vld [vmem:[%s165 + $0x94] sm:$0xf]
      %v210 = vld [vmem:[%s165 + $0x98] sm:$0x1]
      %v211 = vld [vmem:[%s165 + $0x9c] sm:$0xf]
      %v212 = vld [vmem:[%s165 + $0xa0] sm:$0xf]
      %v213 = vld [vmem:[%s165 + $0xa4] sm:$0x1]
      %v214 = vld [vmem:[%s165 + $0xa8] sm:$0xf]
      %v215 = vld [vmem:[%s165 + $0xac] sm:$0xf]
      %v216 = vld [vmem:[%s165 + $0xb0] sm:$0x1]
      %v217 = vld [vmem:[%s165 + $0xb4] sm:$0xf]
      %v218 = vld [vmem:[%s165 + $0xb8] sm:$0xf]
      %v219 = vld [vmem:[%s165 + $0xbc] sm:$0x1]
      %v220 = vld [vmem:[%s165 + $0xc0] sm:$0xf]
      %v221 = vld [vmem:[%s165 + $0xc4] sm:$0xf]
      %v222 = vld [vmem:[%s165 + $0xc8] sm:$0x1]
      %v223 = vld [vmem:[%s165 + $0xcc] sm:$0xf]
      %v224 = vld [vmem:[%s165 + $0xd0] sm:$0xf]
      %v225 = vld [vmem:[%s165 + $0xd4] sm:$0x1]
      %v226 = vld [vmem:[%s1] sm:$0xf]
      %v227 = vld [vmem:[%s1 + $0x4] sm:$0xf]
      %v228 = vld [vmem:[%s1 + $0x8] sm:$0xf]
      %v229 = vld [vmem:[%s1 + $0xc] sm:$0xf]
      %v230 = vld [vmem:[%s1 + $0x10] sm:$0xf]
      %v231 = vld [vmem:[%s1 + $0x14] sm:$0xf]
      %v232 = vld [vmem:[%s1 + $0x18] sm:$0xf]
      %v233 = vld [vmem:[%s1 + $0x1c] sm:$0xf]
      %vm234 = vsmask.f32 3328
      %vm235 = vsmask.f32 7440
      %vm236 = vmor %vm234, %vm235
      %v238 = vshrl.u32 %v172, 16
      %v240 = vrot.slane %v238, 4
      %v241 = vshll.u32 %v172, 16
      %v243 = vrot.slane %v241, 5
      %v244 = vor.u32 %v240, %v243
      %v245 = vrot.slane %v244, 4
      %v247 = vshll.u32 %v173, 16
      %v249 = vrot.slane %v247, 5
      %v250 = vsel %vm236, %v245, %v249
      %v251 = vshrl.u32 %v173, 16
      %v253 = vrot.slane %v251, 4
      %v254 = vor.u32 %v253, %v249
      %v255 = vrot.slane %v254, 4
      %v257 = vshll.u32 %v174, 16
      %v259 = vrot.slane %v257, 5
      %v260 = vsel %vm236, %v255, %v259
      %v262 = vshrl.u32 %v175, 16
      %v264 = vrot.slane %v262, 4
      %v265 = vshll.u32 %v175, 16
      %v267 = vrot.slane %v265, 5
      %v268 = vor.u32 %v264, %v267
      %v269 = vrot.slane %v268, 4
      %v271 = vshll.u32 %v176, 16
      %v273 = vrot.slane %v271, 5
      %v274 = vsel %vm236, %v269, %v273
      %v275 = vshrl.u32 %v176, 16
      %v277 = vrot.slane %v275, 4
      %v278 = vor.u32 %v277, %v273
      %v279 = vrot.slane %v278, 4
      %v281 = vshll.u32 %v177, 16
      %v283 = vrot.slane %v281, 5
      %v284 = vsel %vm236, %v279, %v283
      %v286 = vshrl.u32 %v178, 16
      %v288 = vrot.slane %v286, 4
      %v289 = vshll.u32 %v178, 16
      %v291 = vrot.slane %v289, 5
      %v292 = vor.u32 %v288, %v291
      %v293 = vrot.slane %v292, 4
      %v295 = vshll.u32 %v179, 16
      %v297 = vrot.slane %v295, 5
      %v298 = vsel %vm236, %v293, %v297
      %v299 = vshrl.u32 %v179, 16
      %v301 = vrot.slane %v299, 4
      %v302 = vor.u32 %v301, %v297
      %v303 = vrot.slane %v302, 4
      %v305 = vshll.u32 %v180, 16
      %v307 = vrot.slane %v305, 5
      %v308 = vsel %vm236, %v303, %v307
      %v310 = vshrl.u32 %v181, 16
      %v312 = vrot.slane %v310, 4
      %v313 = vshll.u32 %v181, 16
      %v315 = vrot.slane %v313, 5
      %v316 = vor.u32 %v312, %v315
      %v317 = vrot.slane %v316, 4
      %v319 = vshll.u32 %v182, 16
      %v321 = vrot.slane %v319, 5
      %v322 = vsel %vm236, %v317, %v321
      %v323 = vshrl.u32 %v182, 16
      %v325 = vrot.slane %v323, 4
      %v326 = vor.u32 %v325, %v321
      %v327 = vrot.slane %v326, 4
      %v329 = vshll.u32 %v183, 16
      %v331 = vrot.slane %v329, 5
      %v332 = vsel %vm236, %v327, %v331
      %v334 = vshrl.u32 %v184, 16
      %v336 = vrot.slane %v334, 4
      %v337 = vshll.u32 %v184, 16
      %v339 = vrot.slane %v337, 5
      %v340 = vor.u32 %v336, %v339
      %v341 = vrot.slane %v340, 4
      %v343 = vshll.u32 %v185, 16
      %v345 = vrot.slane %v343, 5
      %v346 = vsel %vm236, %v341, %v345
      %v347 = vshrl.u32 %v185, 16
      %v349 = vrot.slane %v347, 4
      %v350 = vor.u32 %v349, %v345
      %v351 = vrot.slane %v350, 4
      %v353 = vshll.u32 %v186, 16
      %v355 = vrot.slane %v353, 5
      %v356 = vsel %vm236, %v351, %v355
      %v358 = vshrl.u32 %v187, 16
      %v360 = vrot.slane %v358, 4
      %v361 = vshll.u32 %v187, 16
      %v363 = vrot.slane %v361, 5
      %v364 = vor.u32 %v360, %v363
      %v365 = vrot.slane %v364, 4
      %v367 = vshll.u32 %v188, 16
      %v369 = vrot.slane %v367, 5
      %v370 = vsel %vm236, %v365, %v369
      %v371 = vshrl.u32 %v188, 16
      %v373 = vrot.slane %v371, 4
      %v374 = vor.u32 %v373, %v369
      %v375 = vrot.slane %v374, 4
      %v377 = vshll.u32 %v189, 16
      %v379 = vrot.slane %v377, 5
      %v380 = vsel %vm236, %v375, %v379
      %v382 = vshrl.u32 %v190, 16
      %v384 = vrot.slane %v382, 4
      %v385 = vshll.u32 %v190, 16
      %v387 = vrot.slane %v385, 5
      %v388 = vor.u32 %v384, %v387
      %v389 = vrot.slane %v388, 4
      %v391 = vshll.u32 %v191, 16
      %v393 = vrot.slane %v391, 5
      %v394 = vsel %vm236, %v389, %v393
      %v395 = vshrl.u32 %v191, 16
      %v397 = vrot.slane %v395, 4
      %v398 = vor.u32 %v397, %v393
      %v399 = vrot.slane %v398, 4
      %v401 = vshll.u32 %v192, 16
      %v403 = vrot.slane %v401, 5
      %v404 = vsel %vm236, %v399, %v403
      %v406 = vshrl.u32 %v193, 16
      %v408 = vrot.slane %v406, 4
      %v409 = vshll.u32 %v193, 16
      %v411 = vrot.slane %v409, 5
      %v412 = vor.u32 %v408, %v411
      %v413 = vrot.slane %v412, 4
      %v415 = vshll.u32 %v194, 16
      %v417 = vrot.slane %v415, 5
      %v418 = vsel %vm236, %v413, %v417
      %v419 = vshrl.u32 %v194, 16
      %v421 = vrot.slane %v419, 4
      %v422 = vor.u32 %v421, %v417
      %v423 = vrot.slane %v422, 4
      %v425 = vshll.u32 %v195, 16
      %v427 = vrot.slane %v425, 5
      %v428 = vsel %vm236, %v423, %v427
      %v430 = vshrl.u32 %v196, 16
      %v432 = vrot.slane %v430, 4
      %v433 = vshll.u32 %v196, 16
      %v435 = vrot.slane %v433, 5
      %v436 = vor.u32 %v432, %v435
      %v437 = vrot.slane %v436, 4
      %v439 = vshll.u32 %v197, 16
      %v441 = vrot.slane %v439, 5
      %v442 = vsel %vm236, %v437, %v441
      %v443 = vshrl.u32 %v197, 16
      %v445 = vrot.slane %v443, 4
      %v446 = vor.u32 %v445, %v441
      %v447 = vrot.slane %v446, 4
      %v449 = vshll.u32 %v198, 16
      %v451 = vrot.slane %v449, 5
      %v452 = vsel %vm236, %v447, %v451
      %v454 = vshrl.u32 %v199, 16
      %v456 = vrot.slane %v454, 4
      %v457 = vshll.u32 %v199, 16
      %v459 = vrot.slane %v457, 5
      %v460 = vor.u32 %v456, %v459
      %v461 = vrot.slane %v460, 4
      %v463 = vshll.u32 %v200, 16
      %v465 = vrot.slane %v463, 5
      %v466 = vsel %vm236, %v461, %v465
      %v467 = vshrl.u32 %v200, 16
      %v469 = vrot.slane %v467, 4
      %v470 = vor.u32 %v469, %v465
      %v471 = vrot.slane %v470, 4
      %v473 = vshll.u32 %v201, 16
      %v475 = vrot.slane %v473, 5
      %v476 = vsel %vm236, %v471, %v475
      %v478 = vshrl.u32 %v202, 16
      %v480 = vrot.slane %v478, 4
      %v481 = vshll.u32 %v202, 16
      %v483 = vrot.slane %v481, 5
      %v484 = vor.u32 %v480, %v483
      %v485 = vrot.slane %v484, 4
      %v487 = vshll.u32 %v203, 16
      %v489 = vrot.slane %v487, 5
      %v490 = vsel %vm236, %v485, %v489
      %v491 = vshrl.u32 %v203, 16
      %v493 = vrot.slane %v491, 4
      %v494 = vor.u32 %v493, %v489
      %v495 = vrot.slane %v494, 4
      %v497 = vshll.u32 %v204, 16
      %v499 = vrot.slane %v497, 5
      %v500 = vsel %vm236, %v495, %v499
      %v502 = vshrl.u32 %v205, 16
      %v504 = vrot.slane %v502, 4
      %v505 = vshll.u32 %v205, 16
      %v507 = vrot.slane %v505, 5
      %v508 = vor.u32 %v504, %v507
      %v509 = vrot.slane %v508, 4
      %v511 = vshll.u32 %v206, 16
      %v513 = vrot.slane %v511, 5
      %v514 = vsel %vm236, %v509, %v513
      %v515 = vshrl.u32 %v206, 16
      %v517 = vrot.slane %v515, 4
      %v518 = vor.u32 %v517, %v513
      %v519 = vrot.slane %v518, 4
      %v521 = vshll.u32 %v207, 16
      %v523 = vrot.slane %v521, 5
      %v524 = vsel %vm236, %v519, %v523
      %v526 = vshrl.u32 %v208, 16
      %v528 = vrot.slane %v526, 4
      %v529 = vshll.u32 %v208, 16
      %v531 = vrot.slane %v529, 5
      %v532 = vor.u32 %v528, %v531
      %v533 = vrot.slane %v532, 4
      %v535 = vshll.u32 %v209, 16
      %v537 = vrot.slane %v535, 5
      %v538 = vsel %vm236, %v533, %v537
      %v539 = vshrl.u32 %v209, 16
      %v541 = vrot.slane %v539, 4
      %v542 = vor.u32 %v541, %v537
      %v543 = vrot.slane %v542, 4
      %v545 = vshll.u32 %v210, 16
      %v547 = vrot.slane %v545, 5
      %v548 = vsel %vm236, %v543, %v547
      %v550 = vshrl.u32 %v211, 16
      %v552 = vrot.slane %v550, 4
      %v553 = vshll.u32 %v211, 16
      %v555 = vrot.slane %v553, 5
      %v556 = vor.u32 %v552, %v555
      %v557 = vrot.slane %v556, 4
      %v559 = vshll.u32 %v212, 16
      %v561 = vrot.slane %v559, 5
      %v562 = vsel %vm236, %v557, %v561
      %v563 = vshrl.u32 %v212, 16
      %v565 = vrot.slane %v563, 4
      %v566 = vor.u32 %v565, %v561
      %v567 = vrot.slane %v566, 4
      %v569 = vshll.u32 %v213, 16
      %v571 = vrot.slane %v569, 5
      %v572 = vsel %vm236, %v567, %v571
      %v574 = vshrl.u32 %v214, 16
      %v576 = vrot.slane %v574, 4
      %v577 = vshll.u32 %v214, 16
      %v579 = vrot.slane %v577, 5
      %v580 = vor.u32 %v576, %v579
      %v581 = vrot.slane %v580, 4
      %v583 = vshll.u32 %v215, 16
      %v585 = vrot.slane %v583, 5
      %v586 = vsel %vm236, %v581, %v585
      %v587 = vshrl.u32 %v215, 16
      %v589 = vrot.slane %v587, 4
      %v590 = vor.u32 %v589, %v585
      %v591 = vrot.slane %v590, 4
      %v593 = vshll.u32 %v216, 16
      %v595 = vrot.slane %v593, 5
      %v596 = vsel %vm236, %v591, %v595
      %v598 = vshrl.u32 %v217, 16
      %v600 = vrot.slane %v598, 4
      %v601 = vshll.u32 %v217, 16
      %v603 = vrot.slane %v601, 5
      %v604 = vor.u32 %v600, %v603
      %v605 = vrot.slane %v604, 4
      %v607 = vshll.u32 %v218, 16
      %v609 = vrot.slane %v607, 5
      %v610 = vsel %vm236, %v605, %v609
      %v611 = vshrl.u32 %v218, 16
      %v613 = vrot.slane %v611, 4
      %v614 = vor.u32 %v613, %v609
      %v615 = vrot.slane %v614, 4
      %v617 = vshll.u32 %v219, 16
      %v619 = vrot.slane %v617, 5
      %v620 = vsel %vm236, %v615, %v619
      %s621 = scalar_lea.vmem %s1, 32
      %v622 = vld [vmem:[%s621] sm:$0xf]
      %v623 = vld [vmem:[%s621 + $0x4] sm:$0xf]
      %v624 = vld [vmem:[%s621 + $0x8] sm:$0xf]
      %v625 = vld [vmem:[%s621 + $0xc] sm:$0xf]
      %v626 = vld [vmem:[%s621 + $0x10] sm:$0xf]
      %v627 = vld [vmem:[%s621 + $0x14] sm:$0xf]
      %v628 = vld [vmem:[%s621 + $0x18] sm:$0xf]
      %v629 = vld [vmem:[%s621 + $0x1c] sm:$0xf]
      %v630 = vunpack.c.l.b16 %v250
      %v631 = vunpack.c.l.b16 %v260
      %v632 = vunpack.c.l.b16 %v274
      %v633 = vunpack.c.l.b16 %v284
      %v634 = vunpack.c.l.b16 %v298
      %v635 = vunpack.c.l.b16 %v308
      %v636 = vunpack.c.l.b16 %v322
      %v637 = vunpack.c.l.b16 %v332
      %v638 = vunpack.c.l.b16 %v346
      %v639 = vunpack.c.l.b16 %v356
      %v640 = vunpack.c.l.b16 %v370
      %v641 = vunpack.c.l.b16 %v380
      %v642 = vunpack.c.l.b16 %v394
      %v643 = vunpack.c.l.b16 %v404
      %v644 = vunpack.c.l.b16 %v418
      %v645 = vunpack.c.l.b16 %v428
      %v646 = vunpack.c.l.b16 %v442
      %v647 = vunpack.c.l.b16 %v452
      %v648 = vunpack.c.l.b16 %v466
      %v649 = vunpack.c.l.b16 %v476
      %v650 = vunpack.c.l.b16 %v490
      %v651 = vunpack.c.l.b16 %v500
      %v652 = vunpack.c.l.b16 %v514
      %v653 = vunpack.c.l.b16 %v524
      %v654 = vunpack.c.l.b16 %v538
      %v655 = vunpack.c.l.b16 %v548
      %v656 = vunpack.c.l.b16 %v562
      %v657 = vunpack.c.l.b16 %v572
      %v658 = vunpack.c.l.b16 %v586
      %v659 = vunpack.c.l.b16 %v596
      %v660 = vunpack.c.l.b16 %v610
      %v661 = vunpack.c.l.b16 %v620
      %v662 = vpack.c.b16 %v631, %v630
      %v663 = vpack.c.b16 %v633, %v632
      %v664 = vpack.c.b16 %v635, %v634
      %v665 = vpack.c.b16 %v637, %v636
      %v666 = vpack.c.b16 %v639, %v638
      %v667 = vpack.c.b16 %v641, %v640
      %v668 = vpack.c.b16 %v643, %v642
      %v669 = vpack.c.b16 %v645, %v644
      %v670 = vpack.c.b16 %v647, %v646
      %v671 = vpack.c.b16 %v649, %v648
      %v672 = vpack.c.b16 %v651, %v650
      %v673 = vpack.c.b16 %v653, %v652
      %v674 = vpack.c.b16 %v655, %v654
      %v675 = vpack.c.b16 %v657, %v656
      %v676 = vpack.c.b16 %v659, %v658
      %v677 = vpack.c.b16 %v661, %v660
      %v686 = vunpack.c.l.b16 %v622
      %v687 = vunpack.c.l.b16 %v623
      %v688 = vunpack.c.l.b16 %v624
      %v689 = vunpack.c.l.b16 %v625
      %v690 = vunpack.c.l.b16 %v626
      %v691 = vunpack.c.l.b16 %v627
      %v692 = vunpack.c.l.b16 %v628
      %v693 = vunpack.c.l.b16 %v629
      %v694 = vpack.c.b16 %v687, %v686
      %v695 = vpack.c.b16 %v689, %v688
      %v696 = vpack.c.b16 %v691, %v690
      %v697 = vpack.c.b16 %v693, %v692
      %vm702 = vcmask 523264
      %v704 = vsel %vm702, %v662, 0
      %v707 = vsel %vm702, %v663, 0
      %v710 = vsel %vm702, %v664, 0
      %v713 = vsel %vm702, %v665, 0
      %v716 = vsel %vm702, %v666, 0
      %v719 = vsel %vm702, %v667, 0
      %v722 = vsel %vm702, %v668, 0
      %v725 = vsel %vm702, %v669, 0
      %v728 = vsel %vm702, %v670, 0
      %v731 = vsel %vm702, %v671, 0
      %v734 = vsel %vm702, %v672, 0
      %v737 = vsel %vm702, %v673, 0
      %v740 = vsel %vm702, %v674, 0
      %v743 = vsel %vm702, %v675, 0
      %v746 = vsel %vm702, %v676, 0
      %v749 = vsel %vm702, %v677, 0
      %751 = vmatpush.bf16.msra.mxu0 0
      %752 = vmatpush.bf16.msra.mxu0 0
      %753 = vmatpush.bf16.msra.mxu0 0
      %754 = vmatpush.bf16.msra.mxu0 0
      %755 = vmatpush.bf16.msra.mxu0 %v697
      %756 = vmatpush.bf16.msra.mxu0 %v696
      %757 = vmatpush.bf16.msra.mxu0 %v695
      %758 = vmatpush.bf16.msra.mxu0 %v694
      %759 = vmatmul.bf16.gmra.mxu0 %v704
      %v760 = vpop.f32.mrf.mxu0
      %v761 = vadd.f32 0.0, %v760
      %v762 = vpop.f32.mrf.mxu0
      %v763 = vadd.f32 0.0, %v762
      %764 = vmatmul.bf16.gmra.mxu0 %v707
      %v765 = vpop.f32.mrf.mxu0
      %v766 = vadd.f32 0.0, %v765
      %v767 = vpop.f32.mrf.mxu0
      %v768 = vadd.f32 0.0, %v767
      %769 = vmatmul.bf16.gmra.mxu0 %v710
      %v770 = vpop.f32.mrf.mxu0
      %v771 = vadd.f32 0.0, %v770
      %v772 = vpop.f32.mrf.mxu0
      %v773 = vadd.f32 0.0, %v772
      %774 = vmatmul.bf16.gmra.mxu0 %v713
      %v775 = vpop.f32.mrf.mxu0
      %v776 = vadd.f32 0.0, %v775
      %v777 = vpop.f32.mrf.mxu0
      %v778 = vadd.f32 0.0, %v777
      %779 = vmatmul.bf16.gmra.mxu0 %v716
      %v780 = vpop.f32.mrf.mxu0
      %v781 = vadd.f32 0.0, %v780
      %v782 = vpop.f32.mrf.mxu0
      %v783 = vadd.f32 0.0, %v782
      %784 = vmatmul.bf16.gmra.mxu0 %v719
      %v785 = vpop.f32.mrf.mxu0
      %v786 = vadd.f32 0.0, %v785
      %v787 = vpop.f32.mrf.mxu0
      %v788 = vadd.f32 0.0, %v787
      %789 = vmatmul.bf16.gmra.mxu0 %v722
      %v790 = vpop.f32.mrf.mxu0
      %v791 = vadd.f32 0.0, %v790
      %v792 = vpop.f32.mrf.mxu0
      %v793 = vadd.f32 0.0, %v792
      %794 = vmatmul.bf16.gmra.mxu0 %v725
      %v795 = vpop.f32.mrf.mxu0
      %v796 = vadd.f32 0.0, %v795
      %v797 = vpop.f32.mrf.mxu0
      %v798 = vadd.f32 0.0, %v797
      %799 = vmatmul.bf16.gmra.mxu0 %v728
      %v800 = vpop.f32.mrf.mxu0
      %v801 = vadd.f32 0.0, %v800
      %v802 = vpop.f32.mrf.mxu0
      %v803 = vadd.f32 0.0, %v802
      %804 = vmatmul.bf16.gmra.mxu0 %v731
      %v805 = vpop.f32.mrf.mxu0
      %v806 = vadd.f32 0.0, %v805
      %v807 = vpop.f32.mrf.mxu0
      %v808 = vadd.f32 0.0, %v807
      %809 = vmatmul.bf16.gmra.mxu0 %v734
      %v810 = vpop.f32.mrf.mxu0
      %v811 = vadd.f32 0.0, %v810
      %v812 = vpop.f32.mrf.mxu0
      %v813 = vadd.f32 0.0, %v812
      %814 = vmatmul.bf16.gmra.mxu0 %v737
      %v815 = vpop.f32.mrf.mxu0
      %v816 = vadd.f32 0.0, %v815
      %v817 = vpop.f32.mrf.mxu0
      %v818 = vadd.f32 0.0, %v817
      %819 = vmatmul.bf16.gmra.mxu0 %v740
      %v820 = vpop.f32.mrf.mxu0
      %v821 = vadd.f32 0.0, %v820
      %v822 = vpop.f32.mrf.mxu0
      %v823 = vadd.f32 0.0, %v822
      %824 = vmatmul.bf16.gmra.mxu0 %v743
      %v825 = vpop.f32.mrf.mxu0
      %v826 = vadd.f32 0.0, %v825
      %v827 = vpop.f32.mrf.mxu0
      %v828 = vadd.f32 0.0, %v827
      %829 = vmatmul.bf16.gmra.mxu0 %v746
      %v830 = vpop.f32.mrf.mxu0
      %v831 = vadd.f32 0.0, %v830
      %v832 = vpop.f32.mrf.mxu0
      %v833 = vadd.f32 0.0, %v832
      %834 = vmatmul.bf16.gmra.mxu0 %v749
      %v835 = vpop.f32.mrf.mxu0
      %v836 = vadd.f32 0.0, %v835
      %v837 = vpop.f32.mrf.mxu0
      %v838 = vadd.f32 0.0, %v837
      %839 = vdwg.mxu0
      %v872 = vunpack.c.l.b16 %v172
      %v873 = vunpack.c.l.b16 %v173
      %v874 = vunpack.c.l.b16 %v175
      %v875 = vunpack.c.l.b16 %v176
      %v876 = vunpack.c.l.b16 %v178
      %v877 = vunpack.c.l.b16 %v179
      %v878 = vunpack.c.l.b16 %v181
      %v879 = vunpack.c.l.b16 %v182
      %v880 = vunpack.c.l.b16 %v184
      %v881 = vunpack.c.l.b16 %v185
      %v882 = vunpack.c.l.b16 %v187
      %v883 = vunpack.c.l.b16 %v188
      %v884 = vunpack.c.l.b16 %v190
      %v885 = vunpack.c.l.b16 %v191
      %v886 = vunpack.c.l.b16 %v193
      %v887 = vunpack.c.l.b16 %v194
      %v888 = vunpack.c.l.b16 %v196
      %v889 = vunpack.c.l.b16 %v197
      %v890 = vunpack.c.l.b16 %v199
      %v891 = vunpack.c.l.b16 %v200
      %v892 = vunpack.c.l.b16 %v202
      %v893 = vunpack.c.l.b16 %v203
      %v894 = vunpack.c.l.b16 %v205
      %v895 = vunpack.c.l.b16 %v206
      %v896 = vunpack.c.l.b16 %v208
      %v897 = vunpack.c.l.b16 %v209
      %v898 = vunpack.c.l.b16 %v211
      %v899 = vunpack.c.l.b16 %v212
      %v900 = vunpack.c.l.b16 %v214
      %v901 = vunpack.c.l.b16 %v215
      %v902 = vunpack.c.l.b16 %v217
      %v903 = vunpack.c.l.b16 %v218
      %v904 = vpack.c.b16 %v873, %v872
      %v905 = vpack.c.b16 %v875, %v874
      %v906 = vpack.c.b16 %v877, %v876
      %v907 = vpack.c.b16 %v879, %v878
      %v908 = vpack.c.b16 %v881, %v880
      %v909 = vpack.c.b16 %v883, %v882
      %v910 = vpack.c.b16 %v885, %v884
      %v911 = vpack.c.b16 %v887, %v886
      %v912 = vpack.c.b16 %v889, %v888
      %v913 = vpack.c.b16 %v891, %v890
      %v914 = vpack.c.b16 %v893, %v892
      %v915 = vpack.c.b16 %v895, %v894
      %v916 = vpack.c.b16 %v897, %v896
      %v917 = vpack.c.b16 %v899, %v898
      %v918 = vpack.c.b16 %v901, %v900
      %v919 = vpack.c.b16 %v903, %v902
      %v928 = vunpack.c.l.b16 %v226
      %v929 = vunpack.c.l.b16 %v227
      %v930 = vunpack.c.l.b16 %v228
      %v931 = vunpack.c.l.b16 %v229
      %v932 = vunpack.c.l.b16 %v230
      %v933 = vunpack.c.l.b16 %v231
      %v934 = vunpack.c.l.b16 %v232
      %v935 = vunpack.c.l.b16 %v233
      %v936 = vpack.c.b16 %v929, %v928
      %v937 = vpack.c.b16 %v931, %v930
      %v938 = vpack.c.b16 %v933, %v932
      %v939 = vpack.c.b16 %v935, %v934
      %v945 = vsel %vm702, %v904, 0
      %v948 = vsel %vm702, %v905, 0
      %v951 = vsel %vm702, %v906, 0
      %v954 = vsel %vm702, %v907, 0
      %v957 = vsel %vm702, %v908, 0
      %v960 = vsel %vm702, %v909, 0
      %v963 = vsel %vm702, %v910, 0
      %v966 = vsel %vm702, %v911, 0
      %v969 = vsel %vm702, %v912, 0
      %v972 = vsel %vm702, %v913, 0
      %v975 = vsel %vm702, %v914, 0
      %v978 = vsel %vm702, %v915, 0
      %v981 = vsel %vm702, %v916, 0
      %v984 = vsel %vm702, %v917, 0
      %v987 = vsel %vm702, %v918, 0
      %v990 = vsel %vm702, %v919, 0
      %992 = vmatpush.bf16.msra.mxu0 0
      %993 = vmatpush.bf16.msra.mxu0 0
      %994 = vmatpush.bf16.msra.mxu0 0
      %995 = vmatpush.bf16.msra.mxu0 0
      %996 = vmatpush.bf16.msra.mxu0 %v939
      %997 = vmatpush.bf16.msra.mxu0 %v938
      %998 = vmatpush.bf16.msra.mxu0 %v937
      %999 = vmatpush.bf16.msra.mxu0 %v936
      %1000 = vmatmul.bf16.gmra.mxu0 %v945
      %v1001 = vpop.f32.mrf.mxu0
      %v1002 = vadd.f32 %v761, %v1001
      %v1003 = vpop.f32.mrf.mxu0
      %v1004 = vadd.f32 %v763, %v1003
      %1005 = vmatmul.bf16.gmra.mxu0 %v948
      %v1006 = vpop.f32.mrf.mxu0
      %v1007 = vadd.f32 %v766, %v1006
      %v1008 = vpop.f32.mrf.mxu0
      %v1009 = vadd.f32 %v768, %v1008
      %1010 = vmatmul.bf16.gmra.mxu0 %v951
      %v1011 = vpop.f32.mrf.mxu0
      %v1012 = vadd.f32 %v771, %v1011
      %v1013 = vpop.f32.mrf.mxu0
      %v1014 = vadd.f32 %v773, %v1013
      %1015 = vmatmul.bf16.gmra.mxu0 %v954
      %v1016 = vpop.f32.mrf.mxu0
      %v1017 = vadd.f32 %v776, %v1016
      %v1018 = vpop.f32.mrf.mxu0
      %v1019 = vadd.f32 %v778, %v1018
      %1020 = vmatmul.bf16.gmra.mxu0 %v957
      %v1021 = vpop.f32.mrf.mxu0
      %v1022 = vadd.f32 %v781, %v1021
      %v1023 = vpop.f32.mrf.mxu0
      %v1024 = vadd.f32 %v783, %v1023
      %1025 = vmatmul.bf16.gmra.mxu0 %v960
      %v1026 = vpop.f32.mrf.mxu0
      %v1027 = vadd.f32 %v786, %v1026
      %v1028 = vpop.f32.mrf.mxu0
      %v1029 = vadd.f32 %v788, %v1028
      %1030 = vmatmul.bf16.gmra.mxu0 %v963
      %v1031 = vpop.f32.mrf.mxu0
      %v1032 = vadd.f32 %v791, %v1031
      %v1033 = vpop.f32.mrf.mxu0
      %v1034 = vadd.f32 %v793, %v1033
      %1035 = vmatmul.bf16.gmra.mxu0 %v966
      %v1036 = vpop.f32.mrf.mxu0
      %v1037 = vadd.f32 %v796, %v1036
      %v1038 = vpop.f32.mrf.mxu0
      %v1039 = vadd.f32 %v798, %v1038
      %1040 = vmatmul.bf16.gmra.mxu0 %v969
      %v1041 = vpop.f32.mrf.mxu0
      %v1042 = vadd.f32 %v801, %v1041
      %v1043 = vpop.f32.mrf.mxu0
      %v1044 = vadd.f32 %v803, %v1043
      %1045 = vmatmul.bf16.gmra.mxu0 %v972
      %v1046 = vpop.f32.mrf.mxu0
      %v1047 = vadd.f32 %v806, %v1046
      %v1048 = vpop.f32.mrf.mxu0
      %v1049 = vadd.f32 %v808, %v1048
      %1050 = vmatmul.bf16.gmra.mxu0 %v975
      %v1051 = vpop.f32.mrf.mxu0
      %v1052 = vadd.f32 %v811, %v1051
      %v1053 = vpop.f32.mrf.mxu0
      %v1054 = vadd.f32 %v813, %v1053
      %1055 = vmatmul.bf16.gmra.mxu0 %v978
      %v1056 = vpop.f32.mrf.mxu0
      %v1057 = vadd.f32 %v816, %v1056
      %v1058 = vpop.f32.mrf.mxu0
      %v1059 = vadd.f32 %v818, %v1058
      %1060 = vmatmul.bf16.gmra.mxu0 %v981
      %v1061 = vpop.f32.mrf.mxu0
      %v1062 = vadd.f32 %v821, %v1061
      %v1063 = vpop.f32.mrf.mxu0
      %v1064 = vadd.f32 %v823, %v1063
      %1065 = vmatmul.bf16.gmra.mxu0 %v984
      %v1066 = vpop.f32.mrf.mxu0
      %v1067 = vadd.f32 %v826, %v1066
      %v1068 = vpop.f32.mrf.mxu0
      %v1069 = vadd.f32 %v828, %v1068
      %1070 = vmatmul.bf16.gmra.mxu0 %v987
      %v1071 = vpop.f32.mrf.mxu0
      %v1072 = vadd.f32 %v831, %v1071
      %v1073 = vpop.f32.mrf.mxu0
      %v1074 = vadd.f32 %v833, %v1073
      %1075 = vmatmul.bf16.gmra.mxu0 %v990
      %v1076 = vpop.f32.mrf.mxu0
      %v1077 = vadd.f32 %v836, %v1076
      %v1078 = vpop.f32.mrf.mxu0
      %v1079 = vadd.f32 %v838, %v1078
      %1080 = vdwg.mxu0
      %vm1097 = vcmask 1042432
      %vm1098 = vcmask 1046532
      %vm1099 = vmor %vm1097, %vm1098
      %v1100 = vrot.slane %v172, 5
      %v1101 = vrot.slane %v1100, 4
      %v1102 = vrot.slane %v173, 5
      %v1103 = vsel %vm1099, %v1101, %v1102
      %v1104 = vrot.slane %v1102, 4
      %v1105 = vrot.slane %v174, 5
      %v1106 = vsel %vm1099, %v1104, %v1105
      %v1107 = vrot.slane %v175, 5
      %v1108 = vrot.slane %v1107, 4
      %v1109 = vrot.slane %v176, 5
      %v1110 = vsel %vm1099, %v1108, %v1109
      %v1111 = vrot.slane %v1109, 4
      %v1112 = vrot.slane %v177, 5
      %v1113 = vsel %vm1099, %v1111, %v1112
      %v1114 = vrot.slane %v178, 5
      %v1115 = vrot.slane %v1114, 4
      %v1116 = vrot.slane %v179, 5
      %v1117 = vsel %vm1099, %v1115, %v1116
      %v1118 = vrot.slane %v1116, 4
      %v1119 = vrot.slane %v180, 5
      %v1120 = vsel %vm1099, %v1118, %v1119
      %v1121 = vrot.slane %v181, 5
      %v1122 = vrot.slane %v1121, 4
      %v1123 = vrot.slane %v182, 5
      %v1124 = vsel %vm1099, %v1122, %v1123
      %v1125 = vrot.slane %v1123, 4
      %v1126 = vrot.slane %v183, 5
      %v1127 = vsel %vm1099, %v1125, %v1126
      %v1128 = vrot.slane %v184, 5
      %v1129 = vrot.slane %v1128, 4
      %v1130 = vrot.slane %v185, 5
      %v1131 = vsel %vm1099, %v1129, %v1130
      %v1132 = vrot.slane %v1130, 4
      %v1133 = vrot.slane %v186, 5
      %v1134 = vsel %vm1099, %v1132, %v1133
      %v1135 = vrot.slane %v187, 5
      %v1136 = vrot.slane %v1135, 4
      %v1137 = vrot.slane %v188, 5
      %v1138 = vsel %vm1099, %v1136, %v1137
      %v1139 = vrot.slane %v1137, 4
      %v1140 = vrot.slane %v189, 5
      %v1141 = vsel %vm1099, %v1139, %v1140
      %v1142 = vrot.slane %v190, 5
      %v1143 = vrot.slane %v1142, 4
      %v1144 = vrot.slane %v191, 5
      %v1145 = vsel %vm1099, %v1143, %v1144
      %v1146 = vrot.slane %v1144, 4
      %v1147 = vrot.slane %v192, 5
      %v1148 = vsel %vm1099, %v1146, %v1147
      %v1149 = vrot.slane %v193, 5
      %v1150 = vrot.slane %v1149, 4
      %v1151 = vrot.slane %v194, 5
      %v1152 = vsel %vm1099, %v1150, %v1151
      %v1153 = vrot.slane %v1151, 4
      %v1154 = vrot.slane %v195, 5
      %v1155 = vsel %vm1099, %v1153, %v1154
      %v1156 = vrot.slane %v196, 5
      %v1157 = vrot.slane %v1156, 4
      %v1158 = vrot.slane %v197, 5
      %v1159 = vsel %vm1099, %v1157, %v1158
      %v1160 = vrot.slane %v1158, 4
      %v1161 = vrot.slane %v198, 5
      %v1162 = vsel %vm1099, %v1160, %v1161
      %v1163 = vrot.slane %v199, 5
      %v1164 = vrot.slane %v1163, 4
      %v1165 = vrot.slane %v200, 5
      %v1166 = vsel %vm1099, %v1164, %v1165
      %v1167 = vrot.slane %v1165, 4
      %v1168 = vrot.slane %v201, 5
      %v1169 = vsel %vm1099, %v1167, %v1168
      %v1170 = vrot.slane %v202, 5
      %v1171 = vrot.slane %v1170, 4
      %v1172 = vrot.slane %v203, 5
      %v1173 = vsel %vm1099, %v1171, %v1172
      %v1174 = vrot.slane %v1172, 4
      %v1175 = vrot.slane %v204, 5
      %v1176 = vsel %vm1099, %v1174, %v1175
      %v1177 = vrot.slane %v205, 5
      %v1178 = vrot.slane %v1177, 4
      %v1179 = vrot.slane %v206, 5
      %v1180 = vsel %vm1099, %v1178, %v1179
      %v1181 = vrot.slane %v1179, 4
      %v1182 = vrot.slane %v207, 5
      %v1183 = vsel %vm1099, %v1181, %v1182
      %v1184 = vrot.slane %v208, 5
      %v1185 = vrot.slane %v1184, 4
      %v1186 = vrot.slane %v209, 5
      %v1187 = vsel %vm1099, %v1185, %v1186
      %v1188 = vrot.slane %v1186, 4
      %v1189 = vrot.slane %v210, 5
      %v1190 = vsel %vm1099, %v1188, %v1189
      %v1191 = vrot.slane %v211, 5
      %v1192 = vrot.slane %v1191, 4
      %v1193 = vrot.slane %v212, 5
      %v1194 = vsel %vm1099, %v1192, %v1193
      %v1195 = vrot.slane %v1193, 4
      %v1196 = vrot.slane %v213, 5
      %v1197 = vsel %vm1099, %v1195, %v1196
      %v1198 = vrot.slane %v214, 5
      %v1199 = vrot.slane %v1198, 4
      %v1200 = vrot.slane %v215, 5
      %v1201 = vsel %vm1099, %v1199, %v1200
      %v1202 = vrot.slane %v1200, 4
      %v1203 = vrot.slane %v216, 5
      %v1204 = vsel %vm1099, %v1202, %v1203
      %v1205 = vrot.slane %v217, 5
      %v1206 = vrot.slane %v1205, 4
      %v1207 = vrot.slane %v218, 5
      %v1208 = vsel %vm1099, %v1206, %v1207
      %v1209 = vrot.slane %v1207, 4
      %v1210 = vrot.slane %v219, 5
      %v1211 = vsel %vm1099, %v1209, %v1210
      %s1212 = scalar_lea.vmem %s1, 64
      %v1213 = vld [vmem:[%s1212] sm:$0xf]
      %v1214 = vld [vmem:[%s1212 + $0x4] sm:$0xf]
      %v1215 = vld [vmem:[%s1212 + $0x8] sm:$0xf]
      %v1216 = vld [vmem:[%s1212 + $0xc] sm:$0xf]
      %v1217 = vld [vmem:[%s1212 + $0x10] sm:$0xf]
      %v1218 = vld [vmem:[%s1212 + $0x14] sm:$0xf]
      %v1219 = vld [vmem:[%s1212 + $0x18] sm:$0xf]
      %v1220 = vld [vmem:[%s1212 + $0x1c] sm:$0xf]
      %v1221 = vunpack.c.l.b16 %v1103
      %v1222 = vunpack.c.l.b16 %v1106
      %v1223 = vunpack.c.l.b16 %v1110
      %v1224 = vunpack.c.l.b16 %v1113
      %v1225 = vunpack.c.l.b16 %v1117
      %v1226 = vunpack.c.l.b16 %v1120
      %v1227 = vunpack.c.l.b16 %v1124
      %v1228 = vunpack.c.l.b16 %v1127
      %v1229 = vunpack.c.l.b16 %v1131
      %v1230 = vunpack.c.l.b16 %v1134
      %v1231 = vunpack.c.l.b16 %v1138
      %v1232 = vunpack.c.l.b16 %v1141
      %v1233 = vunpack.c.l.b16 %v1145
      %v1234 = vunpack.c.l.b16 %v1148
      %v1235 = vunpack.c.l.b16 %v1152
      %v1236 = vunpack.c.l.b16 %v1155
      %v1237 = vunpack.c.l.b16 %v1159
      %v1238 = vunpack.c.l.b16 %v1162
      %v1239 = vunpack.c.l.b16 %v1166
      %v1240 = vunpack.c.l.b16 %v1169
      %v1241 = vunpack.c.l.b16 %v1173
      %v1242 = vunpack.c.l.b16 %v1176
      %v1243 = vunpack.c.l.b16 %v1180
      %v1244 = vunpack.c.l.b16 %v1183
      %v1245 = vunpack.c.l.b16 %v1187
      %v1246 = vunpack.c.l.b16 %v1190
      %v1247 = vunpack.c.l.b16 %v1194
      %v1248 = vunpack.c.l.b16 %v1197
      %v1249 = vunpack.c.l.b16 %v1201
      %v1250 = vunpack.c.l.b16 %v1204
      %v1251 = vunpack.c.l.b16 %v1208
      %v1252 = vunpack.c.l.b16 %v1211
      %v1253 = vpack.c.b16 %v1222, %v1221
      %v1254 = vpack.c.b16 %v1224, %v1223
      %v1255 = vpack.c.b16 %v1226, %v1225
      %v1256 = vpack.c.b16 %v1228, %v1227
      %v1257 = vpack.c.b16 %v1230, %v1229
      %v1258 = vpack.c.b16 %v1232, %v1231
      %v1259 = vpack.c.b16 %v1234, %v1233
      %v1260 = vpack.c.b16 %v1236, %v1235
      %v1261 = vpack.c.b16 %v1238, %v1237
      %v1262 = vpack.c.b16 %v1240, %v1239
      %v1263 = vpack.c.b16 %v1242, %v1241
      %v1264 = vpack.c.b16 %v1244, %v1243
      %v1265 = vpack.c.b16 %v1246, %v1245
      %v1266 = vpack.c.b16 %v1248, %v1247
      %v1267 = vpack.c.b16 %v1250, %v1249
      %v1268 = vpack.c.b16 %v1252, %v1251
      %v1277 = vunpack.c.l.b16 %v1213
      %v1278 = vunpack.c.l.b16 %v1214
      %v1279 = vunpack.c.l.b16 %v1215
      %v1280 = vunpack.c.l.b16 %v1216
      %v1281 = vunpack.c.l.b16 %v1217
      %v1282 = vunpack.c.l.b16 %v1218
      %v1283 = vunpack.c.l.b16 %v1219
      %v1284 = vunpack.c.l.b16 %v1220
      %v1285 = vpack.c.b16 %v1278, %v1277
      %v1286 = vpack.c.b16 %v1280, %v1279
      %v1287 = vpack.c.b16 %v1282, %v1281
      %v1288 = vpack.c.b16 %v1284, %v1283
      %v1294 = vsel %vm702, %v1253, 0
      %v1297 = vsel %vm702, %v1254, 0
      %v1300 = vsel %vm702, %v1255, 0
      %v1303 = vsel %vm702, %v1256, 0
      %v1306 = vsel %vm702, %v1257, 0
      %v1309 = vsel %vm702, %v1258, 0
      %v1312 = vsel %vm702, %v1259, 0
      %v1315 = vsel %vm702, %v1260, 0
      %v1318 = vsel %vm702, %v1261, 0
      %v1321 = vsel %vm702, %v1262, 0
      %v1324 = vsel %vm702, %v1263, 0
      %v1327 = vsel %vm702, %v1264, 0
      %v1330 = vsel %vm702, %v1265, 0
      %v1333 = vsel %vm702, %v1266, 0
      %v1336 = vsel %vm702, %v1267, 0
      %v1339 = vsel %vm702, %v1268, 0
      %1341 = vmatpush.bf16.msra.mxu0 0
      %1342 = vmatpush.bf16.msra.mxu0 0
      %1343 = vmatpush.bf16.msra.mxu0 0
      %1344 = vmatpush.bf16.msra.mxu0 0
      %1345 = vmatpush.bf16.msra.mxu0 %v1288
      %1346 = vmatpush.bf16.msra.mxu0 %v1287
      %1347 = vmatpush.bf16.msra.mxu0 %v1286
      %1348 = vmatpush.bf16.msra.mxu0 %v1285
      %1349 = vmatmul.bf16.gmra.mxu0 %v1294
      %v1350 = vpop.f32.mrf.mxu0
      %v1351 = vadd.f32 0.0, %v1350
      %v1352 = vpop.f32.mrf.mxu0
      %v1353 = vadd.f32 0.0, %v1352
      %1354 = vmatmul.bf16.gmra.mxu0 %v1297
      %v1355 = vpop.f32.mrf.mxu0
      %v1356 = vadd.f32 0.0, %v1355
      %v1357 = vpop.f32.mrf.mxu0
      %v1358 = vadd.f32 0.0, %v1357
      %1359 = vmatmul.bf16.gmra.mxu0 %v1300
      %v1360 = vpop.f32.mrf.mxu0
      %v1361 = vadd.f32 0.0, %v1360
      %v1362 = vpop.f32.mrf.mxu0
      %v1363 = vadd.f32 0.0, %v1362
      %1364 = vmatmul.bf16.gmra.mxu0 %v1303
      %v1365 = vpop.f32.mrf.mxu0
      %v1366 = vadd.f32 0.0, %v1365
      %v1367 = vpop.f32.mrf.mxu0
      %v1368 = vadd.f32 0.0, %v1367
      %1369 = vmatmul.bf16.gmra.mxu0 %v1306
      %v1370 = vpop.f32.mrf.mxu0
      %v1371 = vadd.f32 0.0, %v1370
      %v1372 = vpop.f32.mrf.mxu0
      %v1373 = vadd.f32 0.0, %v1372
      %1374 = vmatmul.bf16.gmra.mxu0 %v1309
      %v1375 = vpop.f32.mrf.mxu0
      %v1376 = vadd.f32 0.0, %v1375
      %v1377 = vpop.f32.mrf.mxu0
      %v1378 = vadd.f32 0.0, %v1377
      %1379 = vmatmul.bf16.gmra.mxu0 %v1312
      %v1380 = vpop.f32.mrf.mxu0
      %v1381 = vadd.f32 0.0, %v1380
      %v1382 = vpop.f32.mrf.mxu0
      %v1383 = vadd.f32 0.0, %v1382
      %1384 = vmatmul.bf16.gmra.mxu0 %v1315
      %v1385 = vpop.f32.mrf.mxu0
      %v1386 = vadd.f32 0.0, %v1385
      %v1387 = vpop.f32.mrf.mxu0
      %v1388 = vadd.f32 0.0, %v1387
      %1389 = vmatmul.bf16.gmra.mxu0 %v1318
      %v1390 = vpop.f32.mrf.mxu0
      %v1391 = vadd.f32 0.0, %v1390
      %v1392 = vpop.f32.mrf.mxu0
      %v1393 = vadd.f32 0.0, %v1392
      %1394 = vmatmul.bf16.gmra.mxu0 %v1321
      %v1395 = vpop.f32.mrf.mxu0
      %v1396 = vadd.f32 0.0, %v1395
      %v1397 = vpop.f32.mrf.mxu0
      %v1398 = vadd.f32 0.0, %v1397
      %1399 = vmatmul.bf16.gmra.mxu0 %v1324
      %v1400 = vpop.f32.mrf.mxu0
      %v1401 = vadd.f32 0.0, %v1400
      %v1402 = vpop.f32.mrf.mxu0
      %v1403 = vadd.f32 0.0, %v1402
      %1404 = vmatmul.bf16.gmra.mxu0 %v1327
      %v1405 = vpop.f32.mrf.mxu0
      %v1406 = vadd.f32 0.0, %v1405
      %v1407 = vpop.f32.mrf.mxu0
      %v1408 = vadd.f32 0.0, %v1407
      %1409 = vmatmul.bf16.gmra.mxu0 %v1330
      %v1410 = vpop.f32.mrf.mxu0
      %v1411 = vadd.f32 0.0, %v1410
      %v1412 = vpop.f32.mrf.mxu0
      %v1413 = vadd.f32 0.0, %v1412
      %1414 = vmatmul.bf16.gmra.mxu0 %v1333
      %v1415 = vpop.f32.mrf.mxu0
      %v1416 = vadd.f32 0.0, %v1415
      %v1417 = vpop.f32.mrf.mxu0
      %v1418 = vadd.f32 0.0, %v1417
      %1419 = vmatmul.bf16.gmra.mxu0 %v1336
      %v1420 = vpop.f32.mrf.mxu0
      %v1421 = vadd.f32 0.0, %v1420
      %v1422 = vpop.f32.mrf.mxu0
      %v1423 = vadd.f32 0.0, %v1422
      %1424 = vmatmul.bf16.gmra.mxu0 %v1339
      %v1425 = vpop.f32.mrf.mxu0
      %v1426 = vadd.f32 0.0, %v1425
      %v1427 = vpop.f32.mrf.mxu0
      %v1428 = vadd.f32 0.0, %v1427
      %1429 = vdwg.mxu0
      %v1430 = vadd.f32 %v1002, %v1351
      %v1431 = vadd.f32 %v1004, %v1353
      %v1432 = vadd.f32 %v1007, %v1356
      %v1433 = vadd.f32 %v1009, %v1358
      %v1434 = vadd.f32 %v1012, %v1361
      %v1435 = vadd.f32 %v1014, %v1363
      %v1436 = vadd.f32 %v1017, %v1366
      %v1437 = vadd.f32 %v1019, %v1368
      %v1438 = vadd.f32 %v1022, %v1371
      %v1439 = vadd.f32 %v1024, %v1373
      %v1440 = vadd.f32 %v1027, %v1376
      %v1441 = vadd.f32 %v1029, %v1378
      %v1442 = vadd.f32 %v1032, %v1381
      %v1443 = vadd.f32 %v1034, %v1383
      %v1444 = vadd.f32 %v1037, %v1386
      %v1445 = vadd.f32 %v1039, %v1388
      %v1446 = vadd.f32 %v1042, %v1391
      %v1447 = vadd.f32 %v1044, %v1393
      %v1448 = vadd.f32 %v1047, %v1396
      %v1449 = vadd.f32 %v1049, %v1398
      %v1450 = vadd.f32 %v1052, %v1401
      %v1451 = vadd.f32 %v1054, %v1403
      %v1452 = vadd.f32 %v1057, %v1406
      %v1453 = vadd.f32 %v1059, %v1408
      %v1454 = vadd.f32 %v1062, %v1411
      %v1455 = vadd.f32 %v1064, %v1413
      %v1456 = vadd.f32 %v1067, %v1416
      %v1457 = vadd.f32 %v1069, %v1418
      %v1458 = vadd.f32 %v1072, %v1421
      %v1459 = vadd.f32 %v1074, %v1423
      %v1460 = vadd.f32 %v1077, %v1426
      %v1461 = vadd.f32 %v1079, %v1428
      %s1462 = scalar_lea.vmem %s1, 96
      %v1463 = vld [vmem:[%s1462] sm:$0xf]
      %v1464 = vld [vmem:[%s1462 + $0x4] sm:$0xf]
      %v1465 = vld [vmem:[%s1462 + $0x8] sm:$0xf]
      %v1466 = vld [vmem:[%s1462 + $0xc] sm:$0xf]
      %v1467 = vld [vmem:[%s1462 + $0x10] sm:$0xf]
      %v1468 = vld [vmem:[%s1462 + $0x14] sm:$0xf]
      %v1469 = vld [vmem:[%s1462 + $0x18] sm:$0xf]
      %v1470 = vld [vmem:[%s1462 + $0x1c] sm:$0xf]
      %v1473 = vunpack.c.l.b16 %v220
      %v1474 = vunpack.c.l.b16 %v221
      %v1475 = vpack.c.b16 %v1474, %v1473
      %v1484 = vunpack.c.l.b16 %v1463
      %v1485 = vunpack.c.l.b16 %v1464
      %v1486 = vunpack.c.l.b16 %v1465
      %v1487 = vunpack.c.l.b16 %v1466
      %v1488 = vunpack.c.l.b16 %v1467
      %v1489 = vunpack.c.l.b16 %v1468
      %v1490 = vunpack.c.l.b16 %v1469
      %v1491 = vunpack.c.l.b16 %v1470
      %v1492 = vpack.c.b16 %v1485, %v1484
      %v1493 = vpack.c.b16 %v1487, %v1486
      %v1494 = vpack.c.b16 %v1489, %v1488
      %v1495 = vpack.c.b16 %v1491, %v1490
      %v1501 = vsel %vm702, %v1475, 0
      %1503 = vmatpush.bf16.msra.mxu0 0
      %1504 = vmatpush.bf16.msra.mxu0 0
      %1505 = vmatpush.bf16.msra.mxu0 0
      %1506 = vmatpush.bf16.msra.mxu0 0
      %1507 = vmatpush.bf16.msra.mxu0 %v1495
      %1508 = vmatpush.bf16.msra.mxu0 %v1494
      %1509 = vmatpush.bf16.msra.mxu0 %v1493
      %1510 = vmatpush.bf16.msra.mxu0 %v1492
      %1511 = vmatmul.bf16.gmra.mxu0 %v948
      %v1512 = vpop.f32.mrf.mxu0
      %v1513 = vadd.f32 0.0, %v1512
      %v1514 = vpop.f32.mrf.mxu0
      %v1515 = vadd.f32 0.0, %v1514
      %1516 = vmatmul.bf16.gmra.mxu0 %v951
      %v1517 = vpop.f32.mrf.mxu0
      %v1518 = vadd.f32 0.0, %v1517
      %v1519 = vpop.f32.mrf.mxu0
      %v1520 = vadd.f32 0.0, %v1519
      %1521 = vmatmul.bf16.gmra.mxu0 %v954
      %v1522 = vpop.f32.mrf.mxu0
      %v1523 = vadd.f32 0.0, %v1522
      %v1524 = vpop.f32.mrf.mxu0
      %v1525 = vadd.f32 0.0, %v1524
      %1526 = vmatmul.bf16.gmra.mxu0 %v957
      %v1527 = vpop.f32.mrf.mxu0
      %v1528 = vadd.f32 0.0, %v1527
      %v1529 = vpop.f32.mrf.mxu0
      %v1530 = vadd.f32 0.0, %v1529
      %1531 = vmatmul.bf16.gmra.mxu0 %v960
      %v1532 = vpop.f32.mrf.mxu0
      %v1533 = vadd.f32 0.0, %v1532
      %v1534 = vpop.f32.mrf.mxu0
      %v1535 = vadd.f32 0.0, %v1534
      %1536 = vmatmul.bf16.gmra.mxu0 %v963
      %v1537 = vpop.f32.mrf.mxu0
      %v1538 = vadd.f32 0.0, %v1537
      %v1539 = vpop.f32.mrf.mxu0
      %v1540 = vadd.f32 0.0, %v1539
      %1541 = vmatmul.bf16.gmra.mxu0 %v966
      %v1542 = vpop.f32.mrf.mxu0
      %v1543 = vadd.f32 0.0, %v1542
      %v1544 = vpop.f32.mrf.mxu0
      %v1545 = vadd.f32 0.0, %v1544
      %1546 = vmatmul.bf16.gmra.mxu0 %v969
      %v1547 = vpop.f32.mrf.mxu0
      %v1548 = vadd.f32 0.0, %v1547
      %v1549 = vpop.f32.mrf.mxu0
      %v1550 = vadd.f32 0.0, %v1549
      %1551 = vmatmul.bf16.gmra.mxu0 %v972
      %v1552 = vpop.f32.mrf.mxu0
      %v1553 = vadd.f32 0.0, %v1552
      %v1554 = vpop.f32.mrf.mxu0
      %v1555 = vadd.f32 0.0, %v1554
      %1556 = vmatmul.bf16.gmra.mxu0 %v975
      %v1557 = vpop.f32.mrf.mxu0
      %v1558 = vadd.f32 0.0, %v1557
      %v1559 = vpop.f32.mrf.mxu0
      %v1560 = vadd.f32 0.0, %v1559
      %1561 = vmatmul.bf16.gmra.mxu0 %v978
      %v1562 = vpop.f32.mrf.mxu0
      %v1563 = vadd.f32 0.0, %v1562
      %v1564 = vpop.f32.mrf.mxu0
      %v1565 = vadd.f32 0.0, %v1564
      %1566 = vmatmul.bf16.gmra.mxu0 %v981
      %v1567 = vpop.f32.mrf.mxu0
      %v1568 = vadd.f32 0.0, %v1567
      %v1569 = vpop.f32.mrf.mxu0
      %v1570 = vadd.f32 0.0, %v1569
      %1571 = vmatmul.bf16.gmra.mxu0 %v984
      %v1572 = vpop.f32.mrf.mxu0
      %v1573 = vadd.f32 0.0, %v1572
      %v1574 = vpop.f32.mrf.mxu0
      %v1575 = vadd.f32 0.0, %v1574
      %1576 = vmatmul.bf16.gmra.mxu0 %v987
      %v1577 = vpop.f32.mrf.mxu0
      %v1578 = vadd.f32 0.0, %v1577
      %v1579 = vpop.f32.mrf.mxu0
      %v1580 = vadd.f32 0.0, %v1579
      %1581 = vmatmul.bf16.gmra.mxu0 %v990
      %v1582 = vpop.f32.mrf.mxu0
      %v1583 = vadd.f32 0.0, %v1582
      %v1584 = vpop.f32.mrf.mxu0
      %v1585 = vadd.f32 0.0, %v1584
      %1586 = vmatmul.bf16.gmra.mxu0 %v1501
      %v1587 = vpop.f32.mrf.mxu0
      %v1588 = vadd.f32 0.0, %v1587
      %v1589 = vpop.f32.mrf.mxu0
      %v1590 = vadd.f32 0.0, %v1589
      %1591 = vdwg.mxu0
      %v1592 = vadd.f32 %v1430, %v1513
      %v1593 = vadd.f32 %v1431, %v1515
      %v1594 = vadd.f32 %v1432, %v1518
      %v1595 = vadd.f32 %v1433, %v1520
      %v1596 = vadd.f32 %v1434, %v1523
      %v1597 = vadd.f32 %v1435, %v1525
      %v1598 = vadd.f32 %v1436, %v1528
      %v1599 = vadd.f32 %v1437, %v1530
      %v1600 = vadd.f32 %v1438, %v1533
      %v1601 = vadd.f32 %v1439, %v1535
      %v1602 = vadd.f32 %v1440, %v1538
      %v1603 = vadd.f32 %v1441, %v1540
      %v1604 = vadd.f32 %v1442, %v1543
      %v1605 = vadd.f32 %v1443, %v1545
      %v1606 = vadd.f32 %v1444, %v1548
      %v1607 = vadd.f32 %v1445, %v1550
      %v1608 = vadd.f32 %v1446, %v1553
      %v1609 = vadd.f32 %v1447, %v1555
      %v1610 = vadd.f32 %v1448, %v1558
      %v1611 = vadd.f32 %v1449, %v1560
      %v1612 = vadd.f32 %v1450, %v1563
      %v1613 = vadd.f32 %v1451, %v1565
      %v1614 = vadd.f32 %v1452, %v1568
      %v1615 = vadd.f32 %v1453, %v1570
      %v1616 = vadd.f32 %v1454, %v1573
      %v1617 = vadd.f32 %v1455, %v1575
      %v1618 = vadd.f32 %v1456, %v1578
      %v1619 = vadd.f32 %v1457, %v1580
      %v1620 = vadd.f32 %v1458, %v1583
      %v1621 = vadd.f32 %v1459, %v1585
      %v1622 = vadd.f32 %v1460, %v1588
      %v1623 = vadd.f32 %v1461, %v1590
      %v1625 = vshrl.u32 %v220, 16
      %v1627 = vrot.slane %v1625, 4
      %v1628 = vshll.u32 %v220, 16
      %v1630 = vrot.slane %v1628, 5
      %v1631 = vor.u32 %v1627, %v1630
      %v1632 = vrot.slane %v1631, 4
      %v1634 = vshll.u32 %v221, 16
      %v1636 = vrot.slane %v1634, 5
      %v1637 = vsel %vm236, %v1632, %v1636
      %v1638 = vshrl.u32 %v221, 16
      %v1640 = vrot.slane %v1638, 4
      %v1641 = vor.u32 %v1640, %v1636
      %v1642 = vrot.slane %v1641, 4
      %v1644 = vshll.u32 %v222, 16
      %v1646 = vrot.slane %v1644, 5
      %v1647 = vsel %vm236, %v1642, %v1646
      %s1648 = scalar_lea.vmem %s1, 128
      %v1649 = vld [vmem:[%s1648] sm:$0xf]
      %v1650 = vld [vmem:[%s1648 + $0x4] sm:$0xf]
      %v1651 = vld [vmem:[%s1648 + $0x8] sm:$0xf]
      %v1652 = vld [vmem:[%s1648 + $0xc] sm:$0xf]
      %v1653 = vld [vmem:[%s1648 + $0x10] sm:$0xf]
      %v1654 = vld [vmem:[%s1648 + $0x14] sm:$0xf]
      %v1655 = vld [vmem:[%s1648 + $0x18] sm:$0xf]
      %v1656 = vld [vmem:[%s1648 + $0x1c] sm:$0xf]
      %v1657 = vunpack.c.l.b16 %v1637
      %v1658 = vunpack.c.l.b16 %v1647
      %v1659 = vpack.c.b16 %v1658, %v1657
      %v1668 = vunpack.c.l.b16 %v1649
      %v1669 = vunpack.c.l.b16 %v1650
      %v1670 = vunpack.c.l.b16 %v1651
      %v1671 = vunpack.c.l.b16 %v1652
      %v1672 = vunpack.c.l.b16 %v1653
      %v1673 = vunpack.c.l.b16 %v1654
      %v1674 = vunpack.c.l.b16 %v1655
      %v1675 = vunpack.c.l.b16 %v1656
      %v1676 = vpack.c.b16 %v1669, %v1668
      %v1677 = vpack.c.b16 %v1671, %v1670
      %v1678 = vpack.c.b16 %v1673, %v1672
      %v1679 = vpack.c.b16 %v1675, %v1674
      %v1685 = vsel %vm702, %v1659, 0
      %1687 = vmatpush.bf16.msra.mxu0 0
      %1688 = vmatpush.bf16.msra.mxu0 0
      %1689 = vmatpush.bf16.msra.mxu0 0
      %1690 = vmatpush.bf16.msra.mxu0 0
      %1691 = vmatpush.bf16.msra.mxu0 %v1679
      %1692 = vmatpush.bf16.msra.mxu0 %v1678
      %1693 = vmatpush.bf16.msra.mxu0 %v1677
      %1694 = vmatpush.bf16.msra.mxu0 %v1676
      %1695 = vmatmul.bf16.gmra.mxu0 %v707
      %v1696 = vpop.f32.mrf.mxu0
      %v1697 = vadd.f32 0.0, %v1696
      %v1698 = vpop.f32.mrf.mxu0
      %v1699 = vadd.f32 0.0, %v1698
      %1700 = vmatmul.bf16.gmra.mxu0 %v710
      %v1701 = vpop.f32.mrf.mxu0
      %v1702 = vadd.f32 0.0, %v1701
      %v1703 = vpop.f32.mrf.mxu0
      %v1704 = vadd.f32 0.0, %v1703
      %1705 = vmatmul.bf16.gmra.mxu0 %v713
      %v1706 = vpop.f32.mrf.mxu0
      %v1707 = vadd.f32 0.0, %v1706
      %v1708 = vpop.f32.mrf.mxu0
      %v1709 = vadd.f32 0.0, %v1708
      %1710 = vmatmul.bf16.gmra.mxu0 %v716
      %v1711 = vpop.f32.mrf.mxu0
      %v1712 = vadd.f32 0.0, %v1711
      %v1713 = vpop.f32.mrf.mxu0
      %v1714 = vadd.f32 0.0, %v1713
      %1715 = vmatmul.bf16.gmra.mxu0 %v719
      %v1716 = vpop.f32.mrf.mxu0
      %v1717 = vadd.f32 0.0, %v1716
      %v1718 = vpop.f32.mrf.mxu0
      %v1719 = vadd.f32 0.0, %v1718
      %1720 = vmatmul.bf16.gmra.mxu0 %v722
      %v1721 = vpop.f32.mrf.mxu0
      %v1722 = vadd.f32 0.0, %v1721
      %v1723 = vpop.f32.mrf.mxu0
      %v1724 = vadd.f32 0.0, %v1723
      %1725 = vmatmul.bf16.gmra.mxu0 %v725
      %v1726 = vpop.f32.mrf.mxu0
      %v1727 = vadd.f32 0.0, %v1726
      %v1728 = vpop.f32.mrf.mxu0
      %v1729 = vadd.f32 0.0, %v1728
      %1730 = vmatmul.bf16.gmra.mxu0 %v728
      %v1731 = vpop.f32.mrf.mxu0
      %v1732 = vadd.f32 0.0, %v1731
      %v1733 = vpop.f32.mrf.mxu0
      %v1734 = vadd.f32 0.0, %v1733
      %1735 = vmatmul.bf16.gmra.mxu0 %v731
      %v1736 = vpop.f32.mrf.mxu0
      %v1737 = vadd.f32 0.0, %v1736
      %v1738 = vpop.f32.mrf.mxu0
      %v1739 = vadd.f32 0.0, %v1738
      %1740 = vmatmul.bf16.gmra.mxu0 %v734
      %v1741 = vpop.f32.mrf.mxu0
      %v1742 = vadd.f32 0.0, %v1741
      %v1743 = vpop.f32.mrf.mxu0
      %v1744 = vadd.f32 0.0, %v1743
      %1745 = vmatmul.bf16.gmra.mxu0 %v737
      %v1746 = vpop.f32.mrf.mxu0
      %v1747 = vadd.f32 0.0, %v1746
      %v1748 = vpop.f32.mrf.mxu0
      %v1749 = vadd.f32 0.0, %v1748
      %1750 = vmatmul.bf16.gmra.mxu0 %v740
      %v1751 = vpop.f32.mrf.mxu0
      %v1752 = vadd.f32 0.0, %v1751
      %v1753 = vpop.f32.mrf.mxu0
      %v1754 = vadd.f32 0.0, %v1753
      %1755 = vmatmul.bf16.gmra.mxu0 %v743
      %v1756 = vpop.f32.mrf.mxu0
      %v1757 = vadd.f32 0.0, %v1756
      %v1758 = vpop.f32.mrf.mxu0
      %v1759 = vadd.f32 0.0, %v1758
      %1760 = vmatmul.bf16.gmra.mxu0 %v746
      %v1761 = vpop.f32.mrf.mxu0
      %v1762 = vadd.f32 0.0, %v1761
      %v1763 = vpop.f32.mrf.mxu0
      %v1764 = vadd.f32 0.0, %v1763
      %1765 = vmatmul.bf16.gmra.mxu0 %v749
      %v1766 = vpop.f32.mrf.mxu0
      %v1767 = vadd.f32 0.0, %v1766
      %v1768 = vpop.f32.mrf.mxu0
      %v1769 = vadd.f32 0.0, %v1768
      %1770 = vmatmul.bf16.gmra.mxu0 %v1685
      %v1771 = vpop.f32.mrf.mxu0
      %v1772 = vadd.f32 0.0, %v1771
      %v1773 = vpop.f32.mrf.mxu0
      %v1774 = vadd.f32 0.0, %v1773
      %1775 = vdwg.mxu0
      %v1776 = vadd.f32 %v1592, %v1697
      %v1777 = vadd.f32 %v1593, %v1699
      %v1778 = vadd.f32 %v1594, %v1702
      %v1779 = vadd.f32 %v1595, %v1704
      %v1780 = vadd.f32 %v1596, %v1707
      %v1781 = vadd.f32 %v1597, %v1709
      %v1782 = vadd.f32 %v1598, %v1712
      %v1783 = vadd.f32 %v1599, %v1714
      %v1784 = vadd.f32 %v1600, %v1717
      %v1785 = vadd.f32 %v1601, %v1719
      %v1786 = vadd.f32 %v1602, %v1722
      %v1787 = vadd.f32 %v1603, %v1724
      %v1788 = vadd.f32 %v1604, %v1727
      %v1789 = vadd.f32 %v1605, %v1729
      %v1790 = vadd.f32 %v1606, %v1732
      %v1791 = vadd.f32 %v1607, %v1734
      %v1792 = vadd.f32 %v1608, %v1737
      %v1793 = vadd.f32 %v1609, %v1739
      %v1794 = vadd.f32 %v1610, %v1742
      %v1795 = vadd.f32 %v1611, %v1744
      %v1796 = vadd.f32 %v1612, %v1747
      %v1797 = vadd.f32 %v1613, %v1749
      %v1798 = vadd.f32 %v1614, %v1752
      %v1799 = vadd.f32 %v1615, %v1754
      %v1800 = vadd.f32 %v1616, %v1757
      %v1801 = vadd.f32 %v1617, %v1759
      %v1802 = vadd.f32 %v1618, %v1762
      %v1803 = vadd.f32 %v1619, %v1764
      %v1804 = vadd.f32 %v1620, %v1767
      %v1805 = vadd.f32 %v1621, %v1769
      %v1806 = vadd.f32 %v1622, %v1772
      %v1807 = vadd.f32 %v1623, %v1774
      %v1809 = vrot.slane %v220, 5
      %v1810 = vrot.slane %v1809, 4
      %v1811 = vrot.slane %v221, 5
      %v1812 = vsel %vm1099, %v1810, %v1811
      %v1813 = vrot.slane %v1811, 4
      %v1814 = vrot.slane %v222, 5
      %v1815 = vsel %vm1099, %v1813, %v1814
      %s1816 = scalar_lea.vmem %s1, 160
      %v1817 = vld [vmem:[%s1816] sm:$0xf]
      %v1818 = vld [vmem:[%s1816 + $0x4] sm:$0xf]
      %v1819 = vld [vmem:[%s1816 + $0x8] sm:$0xf]
      %v1820 = vld [vmem:[%s1816 + $0xc] sm:$0xf]
      %v1821 = vld [vmem:[%s1816 + $0x10] sm:$0xf]
      %v1822 = vld [vmem:[%s1816 + $0x14] sm:$0xf]
      %v1823 = vld [vmem:[%s1816 + $0x18] sm:$0xf]
      %v1824 = vld [vmem:[%s1816 + $0x1c] sm:$0xf]
      %v1825 = vunpack.c.l.b16 %v1812
      %v1826 = vunpack.c.l.b16 %v1815
      %v1827 = vpack.c.b16 %v1826, %v1825
      %v1836 = vunpack.c.l.b16 %v1817
      %v1837 = vunpack.c.l.b16 %v1818
      %v1838 = vunpack.c.l.b16 %v1819
      %v1839 = vunpack.c.l.b16 %v1820
      %v1840 = vunpack.c.l.b16 %v1821
      %v1841 = vunpack.c.l.b16 %v1822
      %v1842 = vunpack.c.l.b16 %v1823
      %v1843 = vunpack.c.l.b16 %v1824
      %v1844 = vpack.c.b16 %v1837, %v1836
      %v1845 = vpack.c.b16 %v1839, %v1838
      %v1846 = vpack.c.b16 %v1841, %v1840
      %v1847 = vpack.c.b16 %v1843, %v1842
      %v1853 = vsel %vm702, %v1827, 0
      %1855 = vmatpush.bf16.msra.mxu0 0
      %1856 = vmatpush.bf16.msra.mxu0 0
      %1857 = vmatpush.bf16.msra.mxu0 0
      %1858 = vmatpush.bf16.msra.mxu0 0
      %1859 = vmatpush.bf16.msra.mxu0 %v1847
      %1860 = vmatpush.bf16.msra.mxu0 %v1846
      %1861 = vmatpush.bf16.msra.mxu0 %v1845
      %1862 = vmatpush.bf16.msra.mxu0 %v1844
      %1863 = vmatmul.bf16.gmra.mxu0 %v1297
      %v1864 = vpop.f32.mrf.mxu0
      %v1865 = vadd.f32 0.0, %v1864
      %v1866 = vpop.f32.mrf.mxu0
      %v1867 = vadd.f32 0.0, %v1866
      %1868 = vmatmul.bf16.gmra.mxu0 %v1300
      %v1869 = vpop.f32.mrf.mxu0
      %v1870 = vadd.f32 0.0, %v1869
      %v1871 = vpop.f32.mrf.mxu0
      %v1872 = vadd.f32 0.0, %v1871
      %1873 = vmatmul.bf16.gmra.mxu0 %v1303
      %v1874 = vpop.f32.mrf.mxu0
      %v1875 = vadd.f32 0.0, %v1874
      %v1876 = vpop.f32.mrf.mxu0
      %v1877 = vadd.f32 0.0, %v1876
      %1878 = vmatmul.bf16.gmra.mxu0 %v1306
      %v1879 = vpop.f32.mrf.mxu0
      %v1880 = vadd.f32 0.0, %v1879
      %v1881 = vpop.f32.mrf.mxu0
      %v1882 = vadd.f32 0.0, %v1881
      %1883 = vmatmul.bf16.gmra.mxu0 %v1309
      %v1884 = vpop.f32.mrf.mxu0
      %v1885 = vadd.f32 0.0, %v1884
      %v1886 = vpop.f32.mrf.mxu0
      %v1887 = vadd.f32 0.0, %v1886
      %1888 = vmatmul.bf16.gmra.mxu0 %v1312
      %v1889 = vpop.f32.mrf.mxu0
      %v1890 = vadd.f32 0.0, %v1889
      %v1891 = vpop.f32.mrf.mxu0
      %v1892 = vadd.f32 0.0, %v1891
      %1893 = vmatmul.bf16.gmra.mxu0 %v1315
      %v1894 = vpop.f32.mrf.mxu0
      %v1895 = vadd.f32 0.0, %v1894
      %v1896 = vpop.f32.mrf.mxu0
      %v1897 = vadd.f32 0.0, %v1896
      %1898 = vmatmul.bf16.gmra.mxu0 %v1318
      %v1899 = vpop.f32.mrf.mxu0
      %v1900 = vadd.f32 0.0, %v1899
      %v1901 = vpop.f32.mrf.mxu0
      %v1902 = vadd.f32 0.0, %v1901
      %1903 = vmatmul.bf16.gmra.mxu0 %v1321
      %v1904 = vpop.f32.mrf.mxu0
      %v1905 = vadd.f32 0.0, %v1904
      %v1906 = vpop.f32.mrf.mxu0
      %v1907 = vadd.f32 0.0, %v1906
      %1908 = vmatmul.bf16.gmra.mxu0 %v1324
      %v1909 = vpop.f32.mrf.mxu0
      %v1910 = vadd.f32 0.0, %v1909
      %v1911 = vpop.f32.mrf.mxu0
      %v1912 = vadd.f32 0.0, %v1911
      %1913 = vmatmul.bf16.gmra.mxu0 %v1327
      %v1914 = vpop.f32.mrf.mxu0
      %v1915 = vadd.f32 0.0, %v1914
      %v1916 = vpop.f32.mrf.mxu0
      %v1917 = vadd.f32 0.0, %v1916
      %1918 = vmatmul.bf16.gmra.mxu0 %v1330
      %v1919 = vpop.f32.mrf.mxu0
      %v1920 = vadd.f32 0.0, %v1919
      %v1921 = vpop.f32.mrf.mxu0
      %v1922 = vadd.f32 0.0, %v1921
      %1923 = vmatmul.bf16.gmra.mxu0 %v1333
      %v1924 = vpop.f32.mrf.mxu0
      %v1925 = vadd.f32 0.0, %v1924
      %v1926 = vpop.f32.mrf.mxu0
      %v1927 = vadd.f32 0.0, %v1926
      %1928 = vmatmul.bf16.gmra.mxu0 %v1336
      %v1929 = vpop.f32.mrf.mxu0
      %v1930 = vadd.f32 0.0, %v1929
      %v1931 = vpop.f32.mrf.mxu0
      %v1932 = vadd.f32 0.0, %v1931
      %1933 = vmatmul.bf16.gmra.mxu0 %v1339
      %v1934 = vpop.f32.mrf.mxu0
      %v1935 = vadd.f32 0.0, %v1934
      %v1936 = vpop.f32.mrf.mxu0
      %v1937 = vadd.f32 0.0, %v1936
      %1938 = vmatmul.bf16.gmra.mxu0 %v1853
      %v1939 = vpop.f32.mrf.mxu0
      %v1940 = vadd.f32 0.0, %v1939
      %v1941 = vpop.f32.mrf.mxu0
      %v1942 = vadd.f32 0.0, %v1941
      %1943 = vdwg.mxu0
      %v1944 = vadd.f32 %v1776, %v1865
      %v1945 = vadd.f32 %v1777, %v1867
      %v1946 = vadd.f32 %v1778, %v1870
      %v1947 = vadd.f32 %v1779, %v1872
      %v1948 = vadd.f32 %v1780, %v1875
      %v1949 = vadd.f32 %v1781, %v1877
      %v1950 = vadd.f32 %v1782, %v1880
      %v1951 = vadd.f32 %v1783, %v1882
      %v1952 = vadd.f32 %v1784, %v1885
      %v1953 = vadd.f32 %v1785, %v1887
      %v1954 = vadd.f32 %v1786, %v1890
      %v1955 = vadd.f32 %v1787, %v1892
      %v1956 = vadd.f32 %v1788, %v1895
      %v1957 = vadd.f32 %v1789, %v1897
      %v1958 = vadd.f32 %v1790, %v1900
      %v1959 = vadd.f32 %v1791, %v1902
      %v1960 = vadd.f32 %v1792, %v1905
      %v1961 = vadd.f32 %v1793, %v1907
      %v1962 = vadd.f32 %v1794, %v1910
      %v1963 = vadd.f32 %v1795, %v1912
      %v1964 = vadd.f32 %v1796, %v1915
      %v1965 = vadd.f32 %v1797, %v1917
      %v1966 = vadd.f32 %v1798, %v1920
      %v1967 = vadd.f32 %v1799, %v1922
      %v1968 = vadd.f32 %v1800, %v1925
      %v1969 = vadd.f32 %v1801, %v1927
      %v1970 = vadd.f32 %v1802, %v1930
      %v1971 = vadd.f32 %v1803, %v1932
      %v1972 = vadd.f32 %v1804, %v1935
      %v1973 = vadd.f32 %v1805, %v1937
      %v1974 = vadd.f32 %v1806, %v1940
      %v1975 = vadd.f32 %v1807, %v1942
      %s1976 = scalar_lea.vmem %s1, 192
      %v1977 = vld [vmem:[%s1976] sm:$0xf]
      %v1978 = vld [vmem:[%s1976 + $0x4] sm:$0xf]
      %v1979 = vld [vmem:[%s1976 + $0x8] sm:$0xf]
      %v1980 = vld [vmem:[%s1976 + $0xc] sm:$0xf]
      %v1981 = vld [vmem:[%s1976 + $0x10] sm:$0xf]
      %v1982 = vld [vmem:[%s1976 + $0x14] sm:$0xf]
      %v1983 = vld [vmem:[%s1976 + $0x18] sm:$0xf]
      %v1984 = vld [vmem:[%s1976 + $0x1c] sm:$0xf]
      %v1987 = vunpack.c.l.b16 %v223
      %v1988 = vunpack.c.l.b16 %v224
      %v1989 = vpack.c.b16 %v1988, %v1987
      %v1998 = vunpack.c.l.b16 %v1977
      %v1999 = vunpack.c.l.b16 %v1978
      %v2000 = vunpack.c.l.b16 %v1979
      %v2001 = vunpack.c.l.b16 %v1980
      %v2002 = vunpack.c.l.b16 %v1981
      %v2003 = vunpack.c.l.b16 %v1982
      %v2004 = vunpack.c.l.b16 %v1983
      %v2005 = vunpack.c.l.b16 %v1984
      %v2006 = vpack.c.b16 %v1999, %v1998
      %v2007 = vpack.c.b16 %v2001, %v2000
      %v2008 = vpack.c.b16 %v2003, %v2002
      %v2009 = vpack.c.b16 %v2005, %v2004
      %v2015 = vsel %vm702, %v1989, 0
      %2017 = vmatpush.bf16.msra.mxu0 0
      %2018 = vmatpush.bf16.msra.mxu0 0
      %2019 = vmatpush.bf16.msra.mxu0 0
      %2020 = vmatpush.bf16.msra.mxu0 0
      %2021 = vmatpush.bf16.msra.mxu0 %v2009
      %2022 = vmatpush.bf16.msra.mxu0 %v2008
      %2023 = vmatpush.bf16.msra.mxu0 %v2007
      %2024 = vmatpush.bf16.msra.mxu0 %v2006
      %2025 = vmatmul.bf16.gmra.mxu0 %v951
      %v2026 = vpop.f32.mrf.mxu0
      %v2027 = vadd.f32 0.0, %v2026
      %v2028 = vpop.f32.mrf.mxu0
      %v2029 = vadd.f32 0.0, %v2028
      %2030 = vmatmul.bf16.gmra.mxu0 %v954
      %v2031 = vpop.f32.mrf.mxu0
      %v2032 = vadd.f32 0.0, %v2031
      %v2033 = vpop.f32.mrf.mxu0
      %v2034 = vadd.f32 0.0, %v2033
      %2035 = vmatmul.bf16.gmra.mxu0 %v957
      %v2036 = vpop.f32.mrf.mxu0
      %v2037 = vadd.f32 0.0, %v2036
      %v2038 = vpop.f32.mrf.mxu0
      %v2039 = vadd.f32 0.0, %v2038
      %2040 = vmatmul.bf16.gmra.mxu0 %v960
      %v2041 = vpop.f32.mrf.mxu0
      %v2042 = vadd.f32 0.0, %v2041
      %v2043 = vpop.f32.mrf.mxu0
      %v2044 = vadd.f32 0.0, %v2043
      %2045 = vmatmul.bf16.gmra.mxu0 %v963
      %v2046 = vpop.f32.mrf.mxu0
      %v2047 = vadd.f32 0.0, %v2046
      %v2048 = vpop.f32.mrf.mxu0
      %v2049 = vadd.f32 0.0, %v2048
      %2050 = vmatmul.bf16.gmra.mxu0 %v966
      %v2051 = vpop.f32.mrf.mxu0
      %v2052 = vadd.f32 0.0, %v2051
      %v2053 = vpop.f32.mrf.mxu0
      %v2054 = vadd.f32 0.0, %v2053
      %2055 = vmatmul.bf16.gmra.mxu0 %v969
      %v2056 = vpop.f32.mrf.mxu0
      %v2057 = vadd.f32 0.0, %v2056
      %v2058 = vpop.f32.mrf.mxu0
      %v2059 = vadd.f32 0.0, %v2058
      %2060 = vmatmul.bf16.gmra.mxu0 %v972
      %v2061 = vpop.f32.mrf.mxu0
      %v2062 = vadd.f32 0.0, %v2061
      %v2063 = vpop.f32.mrf.mxu0
      %v2064 = vadd.f32 0.0, %v2063
      %2065 = vmatmul.bf16.gmra.mxu0 %v975
      %v2066 = vpop.f32.mrf.mxu0
      %v2067 = vadd.f32 0.0, %v2066
      %v2068 = vpop.f32.mrf.mxu0
      %v2069 = vadd.f32 0.0, %v2068
      %2070 = vmatmul.bf16.gmra.mxu0 %v978
      %v2071 = vpop.f32.mrf.mxu0
      %v2072 = vadd.f32 0.0, %v2071
      %v2073 = vpop.f32.mrf.mxu0
      %v2074 = vadd.f32 0.0, %v2073
      %2075 = vmatmul.bf16.gmra.mxu0 %v981
      %v2076 = vpop.f32.mrf.mxu0
      %v2077 = vadd.f32 0.0, %v2076
      %v2078 = vpop.f32.mrf.mxu0
      %v2079 = vadd.f32 0.0, %v2078
      %2080 = vmatmul.bf16.gmra.mxu0 %v984
      %v2081 = vpop.f32.mrf.mxu0
      %v2082 = vadd.f32 0.0, %v2081
      %v2083 = vpop.f32.mrf.mxu0
      %v2084 = vadd.f32 0.0, %v2083
      %2085 = vmatmul.bf16.gmra.mxu0 %v987
      %v2086 = vpop.f32.mrf.mxu0
      %v2087 = vadd.f32 0.0, %v2086
      %v2088 = vpop.f32.mrf.mxu0
      %v2089 = vadd.f32 0.0, %v2088
      %2090 = vmatmul.bf16.gmra.mxu0 %v990
      %v2091 = vpop.f32.mrf.mxu0
      %v2092 = vadd.f32 0.0, %v2091
      %v2093 = vpop.f32.mrf.mxu0
      %v2094 = vadd.f32 0.0, %v2093
      %2095 = vmatmul.bf16.gmra.mxu0 %v1501
      %v2096 = vpop.f32.mrf.mxu0
      %v2097 = vadd.f32 0.0, %v2096
      %v2098 = vpop.f32.mrf.mxu0
      %v2099 = vadd.f32 0.0, %v2098
      %2100 = vmatmul.bf16.gmra.mxu0 %v2015
      %v2101 = vpop.f32.mrf.mxu0
      %v2102 = vadd.f32 0.0, %v2101
      %v2103 = vpop.f32.mrf.mxu0
      %v2104 = vadd.f32 0.0, %v2103
      %2105 = vdwg.mxu0
      %v2106 = vadd.f32 %v1944, %v2027
      %v2107 = vadd.f32 %v1945, %v2029
      %v2108 = vadd.f32 %v1946, %v2032
      %v2109 = vadd.f32 %v1947, %v2034
      %v2110 = vadd.f32 %v1948, %v2037
      %v2111 = vadd.f32 %v1949, %v2039
      %v2112 = vadd.f32 %v1950, %v2042
      %v2113 = vadd.f32 %v1951, %v2044
      %v2114 = vadd.f32 %v1952, %v2047
      %v2115 = vadd.f32 %v1953, %v2049
      %v2116 = vadd.f32 %v1954, %v2052
      %v2117 = vadd.f32 %v1955, %v2054
      %v2118 = vadd.f32 %v1956, %v2057
      %v2119 = vadd.f32 %v1957, %v2059
      %v2120 = vadd.f32 %v1958, %v2062
      %v2121 = vadd.f32 %v1959, %v2064
      %v2122 = vadd.f32 %v1960, %v2067
      %v2123 = vadd.f32 %v1961, %v2069
      %v2124 = vadd.f32 %v1962, %v2072
      %v2125 = vadd.f32 %v1963, %v2074
      %v2126 = vadd.f32 %v1964, %v2077
      %v2127 = vadd.f32 %v1965, %v2079
      %v2128 = vadd.f32 %v1966, %v2082
      %v2129 = vadd.f32 %v1967, %v2084
      %v2130 = vadd.f32 %v1968, %v2087
      %v2131 = vadd.f32 %v1969, %v2089
      %v2132 = vadd.f32 %v1970, %v2092
      %v2133 = vadd.f32 %v1971, %v2094
      %v2134 = vadd.f32 %v1972, %v2097
      %v2135 = vadd.f32 %v1973, %v2099
      %v2136 = vadd.f32 %v1974, %v2102
      %v2137 = vadd.f32 %v1975, %v2104
      %v2139 = vshrl.u32 %v223, 16
      %v2141 = vrot.slane %v2139, 4
      %v2142 = vshll.u32 %v223, 16
      %v2144 = vrot.slane %v2142, 5
      %v2145 = vor.u32 %v2141, %v2144
      %v2146 = vrot.slane %v2145, 4
      %v2148 = vshll.u32 %v224, 16
      %v2150 = vrot.slane %v2148, 5
      %v2151 = vsel %vm236, %v2146, %v2150
      %v2152 = vshrl.u32 %v224, 16
      %v2154 = vrot.slane %v2152, 4
      %v2155 = vor.u32 %v2154, %v2150
      %v2156 = vrot.slane %v2155, 4
      %v2158 = vshll.u32 %v225, 16
      %v2160 = vrot.slane %v2158, 5
      %v2161 = vsel %vm236, %v2156, %v2160
      %s2162 = scalar_lea.vmem %s1, 224
      %v2163 = vld [vmem:[%s2162] sm:$0xf]
      %v2164 = vld [vmem:[%s2162 + $0x4] sm:$0xf]
      %v2165 = vld [vmem:[%s2162 + $0x8] sm:$0xf]
      %v2166 = vld [vmem:[%s2162 + $0xc] sm:$0xf]
      %v2167 = vld [vmem:[%s2162 + $0x10] sm:$0xf]
      %v2168 = vld [vmem:[%s2162 + $0x14] sm:$0xf]
      %v2169 = vld [vmem:[%s2162 + $0x18] sm:$0xf]
      %v2170 = vld [vmem:[%s2162 + $0x1c] sm:$0xf]
      %v2171 = vunpack.c.l.b16 %v2151
      %v2172 = vunpack.c.l.b16 %v2161
      %v2173 = vpack.c.b16 %v2172, %v2171
      %v2182 = vunpack.c.l.b16 %v2163
      %v2183 = vunpack.c.l.b16 %v2164
      %v2184 = vunpack.c.l.b16 %v2165
      %v2185 = vunpack.c.l.b16 %v2166
      %v2186 = vunpack.c.l.b16 %v2167
      %v2187 = vunpack.c.l.b16 %v2168
      %v2188 = vunpack.c.l.b16 %v2169
      %v2189 = vunpack.c.l.b16 %v2170
      %v2190 = vpack.c.b16 %v2183, %v2182
      %v2191 = vpack.c.b16 %v2185, %v2184
      %v2192 = vpack.c.b16 %v2187, %v2186
      %v2193 = vpack.c.b16 %v2189, %v2188
      %v2199 = vsel %vm702, %v2173, 0
      %2201 = vmatpush.bf16.msra.mxu0 0
      %2202 = vmatpush.bf16.msra.mxu0 0
      %2203 = vmatpush.bf16.msra.mxu0 0
      %2204 = vmatpush.bf16.msra.mxu0 0
      %2205 = vmatpush.bf16.msra.mxu0 %v2193
      %2206 = vmatpush.bf16.msra.mxu0 %v2192
      %2207 = vmatpush.bf16.msra.mxu0 %v2191
      %2208 = vmatpush.bf16.msra.mxu0 %v2190
      %2209 = vmatmul.bf16.gmra.mxu0 %v710
      %v2210 = vpop.f32.mrf.mxu0
      %v2211 = vadd.f32 0.0, %v2210
      %v2212 = vpop.f32.mrf.mxu0
      %v2213 = vadd.f32 0.0, %v2212
      %2214 = vmatmul.bf16.gmra.mxu0 %v713
      %v2215 = vpop.f32.mrf.mxu0
      %v2216 = vadd.f32 0.0, %v2215
      %v2217 = vpop.f32.mrf.mxu0
      %v2218 = vadd.f32 0.0, %v2217
      %2219 = vmatmul.bf16.gmra.mxu0 %v716
      %v2220 = vpop.f32.mrf.mxu0
      %v2221 = vadd.f32 0.0, %v2220
      %v2222 = vpop.f32.mrf.mxu0
      %v2223 = vadd.f32 0.0, %v2222
      %2224 = vmatmul.bf16.gmra.mxu0 %v719
      %v2225 = vpop.f32.mrf.mxu0
      %v2226 = vadd.f32 0.0, %v2225
      %v2227 = vpop.f32.mrf.mxu0
      %v2228 = vadd.f32 0.0, %v2227
      %2229 = vmatmul.bf16.gmra.mxu0 %v722
      %v2230 = vpop.f32.mrf.mxu0
      %v2231 = vadd.f32 0.0, %v2230
      %v2232 = vpop.f32.mrf.mxu0
      %v2233 = vadd.f32 0.0, %v2232
      %2234 = vmatmul.bf16.gmra.mxu0 %v725
      %v2235 = vpop.f32.mrf.mxu0
      %v2236 = vadd.f32 0.0, %v2235
      %v2237 = vpop.f32.mrf.mxu0
      %v2238 = vadd.f32 0.0, %v2237
      %2239 = vmatmul.bf16.gmra.mxu0 %v728
      %v2240 = vpop.f32.mrf.mxu0
      %v2241 = vadd.f32 0.0, %v2240
      %v2242 = vpop.f32.mrf.mxu0
      %v2243 = vadd.f32 0.0, %v2242
      %2244 = vmatmul.bf16.gmra.mxu0 %v731
      %v2245 = vpop.f32.mrf.mxu0
      %v2246 = vadd.f32 0.0, %v2245
      %v2247 = vpop.f32.mrf.mxu0
      %v2248 = vadd.f32 0.0, %v2247
      %2249 = vmatmul.bf16.gmra.mxu0 %v734
      %v2250 = vpop.f32.mrf.mxu0
      %v2251 = vadd.f32 0.0, %v2250
      %v2252 = vpop.f32.mrf.mxu0
      %v2253 = vadd.f32 0.0, %v2252
      %2254 = vmatmul.bf16.gmra.mxu0 %v737
      %v2255 = vpop.f32.mrf.mxu0
      %v2256 = vadd.f32 0.0, %v2255
      %v2257 = vpop.f32.mrf.mxu0
      %v2258 = vadd.f32 0.0, %v2257
      %2259 = vmatmul.bf16.gmra.mxu0 %v740
      %v2260 = vpop.f32.mrf.mxu0
      %v2261 = vadd.f32 0.0, %v2260
      %v2262 = vpop.f32.mrf.mxu0
      %v2263 = vadd.f32 0.0, %v2262
      %2264 = vmatmul.bf16.gmra.mxu0 %v743
      %v2265 = vpop.f32.mrf.mxu0
      %v2266 = vadd.f32 0.0, %v2265
      %v2267 = vpop.f32.mrf.mxu0
      %v2268 = vadd.f32 0.0, %v2267
      %2269 = vmatmul.bf16.gmra.mxu0 %v746
      %v2270 = vpop.f32.mrf.mxu0
      %v2271 = vadd.f32 0.0, %v2270
      %v2272 = vpop.f32.mrf.mxu0
      %v2273 = vadd.f32 0.0, %v2272
      %2274 = vmatmul.bf16.gmra.mxu0 %v749
      %v2275 = vpop.f32.mrf.mxu0
      %v2276 = vadd.f32 0.0, %v2275
      %v2277 = vpop.f32.mrf.mxu0
      %v2278 = vadd.f32 0.0, %v2277
      %2279 = vmatmul.bf16.gmra.mxu0 %v1685
      %v2280 = vpop.f32.mrf.mxu0
      %v2281 = vadd.f32 0.0, %v2280
      %v2282 = vpop.f32.mrf.mxu0
      %v2283 = vadd.f32 0.0, %v2282
      %2284 = vmatmul.bf16.gmra.mxu0 %v2199
      %v2285 = vpop.f32.mrf.mxu0
      %v2286 = vadd.f32 0.0, %v2285
      %v2287 = vpop.f32.mrf.mxu0
      %v2288 = vadd.f32 0.0, %v2287
      %2289 = vdwg.mxu0
      %v2290 = vadd.f32 %v2106, %v2211
      %v2291 = vadd.f32 %v2107, %v2213
      %v2292 = vadd.f32 %v2108, %v2216
      %v2293 = vadd.f32 %v2109, %v2218
      %v2294 = vadd.f32 %v2110, %v2221
      %v2295 = vadd.f32 %v2111, %v2223
      %v2296 = vadd.f32 %v2112, %v2226
      %v2297 = vadd.f32 %v2113, %v2228
      %v2298 = vadd.f32 %v2114, %v2231
      %v2299 = vadd.f32 %v2115, %v2233
      %v2300 = vadd.f32 %v2116, %v2236
      %v2301 = vadd.f32 %v2117, %v2238
      %v2302 = vadd.f32 %v2118, %v2241
      %v2303 = vadd.f32 %v2119, %v2243
      %v2304 = vadd.f32 %v2120, %v2246
      %v2305 = vadd.f32 %v2121, %v2248
      %v2306 = vadd.f32 %v2122, %v2251
      %v2307 = vadd.f32 %v2123, %v2253
      %v2308 = vadd.f32 %v2124, %v2256
      %v2309 = vadd.f32 %v2125, %v2258
      %v2310 = vadd.f32 %v2126, %v2261
      %v2311 = vadd.f32 %v2127, %v2263
      %v2312 = vadd.f32 %v2128, %v2266
      %v2313 = vadd.f32 %v2129, %v2268
      %v2314 = vadd.f32 %v2130, %v2271
      %v2315 = vadd.f32 %v2131, %v2273
      %v2316 = vadd.f32 %v2132, %v2276
      %v2317 = vadd.f32 %v2133, %v2278
      %v2318 = vadd.f32 %v2134, %v2281
      %v2319 = vadd.f32 %v2135, %v2283
      %v2320 = vadd.f32 %v2136, %v2286
      %v2321 = vadd.f32 %v2137, %v2288
      %v2323 = vrot.slane %v223, 5
      %v2324 = vrot.slane %v2323, 4
      %v2325 = vrot.slane %v224, 5
      %v2326 = vsel %vm1099, %v2324, %v2325
      %v2327 = vrot.slane %v2325, 4
      %v2328 = vrot.slane %v225, 5
      %v2329 = vsel %vm1099, %v2327, %v2328
      %s2330 = scalar_lea.vmem %s1, 256
      %v2331 = vld [vmem:[%s2330] sm:$0xf]
      %v2332 = vld [vmem:[%s2330 + $0x4] sm:$0xf]
      %v2333 = vld [vmem:[%s2330 + $0x8] sm:$0xf]
      %v2334 = vld [vmem:[%s2330 + $0xc] sm:$0xf]
      %v2335 = vld [vmem:[%s2330 + $0x10] sm:$0xf]
      %v2336 = vld [vmem:[%s2330 + $0x14] sm:$0xf]
      %v2337 = vld [vmem:[%s2330 + $0x18] sm:$0xf]
      %v2338 = vld [vmem:[%s2330 + $0x1c] sm:$0xf]
      %v2339 = vunpack.c.l.b16 %v2326
      %v2340 = vunpack.c.l.b16 %v2329
      %v2341 = vpack.c.b16 %v2340, %v2339
      %v2350 = vunpack.c.l.b16 %v2331
      %v2351 = vunpack.c.l.b16 %v2332
      %v2352 = vunpack.c.l.b16 %v2333
      %v2353 = vunpack.c.l.b16 %v2334
      %v2354 = vunpack.c.l.b16 %v2335
      %v2355 = vunpack.c.l.b16 %v2336
      %v2356 = vunpack.c.l.b16 %v2337
      %v2357 = vunpack.c.l.b16 %v2338
      %v2358 = vpack.c.b16 %v2351, %v2350
      %v2359 = vpack.c.b16 %v2353, %v2352
      %v2360 = vpack.c.b16 %v2355, %v2354
      %v2361 = vpack.c.b16 %v2357, %v2356
      %v2367 = vsel %vm702, %v2341, 0
      %2369 = vmatpush.bf16.msra.mxu0 0
      %2370 = vmatpush.bf16.msra.mxu0 0
      %2371 = vmatpush.bf16.msra.mxu0 0
      %2372 = vmatpush.bf16.msra.mxu0 0
      %2373 = vmatpush.bf16.msra.mxu0 %v2361
      %2374 = vmatpush.bf16.msra.mxu0 %v2360
      %2375 = vmatpush.bf16.msra.mxu0 %v2359
      %2376 = vmatpush.bf16.msra.mxu0 %v2358
      %2377 = vmatmul.bf16.gmra.mxu0 %v1300
      %v2378 = vpop.f32.mrf.mxu0
      %v2379 = vadd.f32 0.0, %v2378
      %v2380 = vpop.f32.mrf.mxu0
      %v2381 = vadd.f32 0.0, %v2380
      %2382 = vmatmul.bf16.gmra.mxu0 %v1303
      %v2383 = vpop.f32.mrf.mxu0
      %v2384 = vadd.f32 0.0, %v2383
      %v2385 = vpop.f32.mrf.mxu0
      %v2386 = vadd.f32 0.0, %v2385
      %2387 = vmatmul.bf16.gmra.mxu0 %v1306
      %v2388 = vpop.f32.mrf.mxu0
      %v2389 = vadd.f32 0.0, %v2388
      %v2390 = vpop.f32.mrf.mxu0
      %v2391 = vadd.f32 0.0, %v2390
      %2392 = vmatmul.bf16.gmra.mxu0 %v1309
      %v2393 = vpop.f32.mrf.mxu0
      %v2394 = vadd.f32 0.0, %v2393
      %v2395 = vpop.f32.mrf.mxu0
      %v2396 = vadd.f32 0.0, %v2395
      %2397 = vmatmul.bf16.gmra.mxu0 %v1312
      %v2398 = vpop.f32.mrf.mxu0
      %v2399 = vadd.f32 0.0, %v2398
      %v2400 = vpop.f32.mrf.mxu0
      %v2401 = vadd.f32 0.0, %v2400
      %2402 = vmatmul.bf16.gmra.mxu0 %v1315
      %v2403 = vpop.f32.mrf.mxu0
      %v2404 = vadd.f32 0.0, %v2403
      %v2405 = vpop.f32.mrf.mxu0
      %v2406 = vadd.f32 0.0, %v2405
      %2407 = vmatmul.bf16.gmra.mxu0 %v1318
      %v2408 = vpop.f32.mrf.mxu0
      %v2409 = vadd.f32 0.0, %v2408
      %v2410 = vpop.f32.mrf.mxu0
      %v2411 = vadd.f32 0.0, %v2410
      %2412 = vmatmul.bf16.gmra.mxu0 %v1321
      %v2413 = vpop.f32.mrf.mxu0
      %v2414 = vadd.f32 0.0, %v2413
      %v2415 = vpop.f32.mrf.mxu0
      %v2416 = vadd.f32 0.0, %v2415
      %2417 = vmatmul.bf16.gmra.mxu0 %v1324
      %v2418 = vpop.f32.mrf.mxu0
      %v2419 = vadd.f32 0.0, %v2418
      %v2420 = vpop.f32.mrf.mxu0
      %v2421 = vadd.f32 0.0, %v2420
      %2422 = vmatmul.bf16.gmra.mxu0 %v1327
      %v2423 = vpop.f32.mrf.mxu0
      %v2424 = vadd.f32 0.0, %v2423
      %v2425 = vpop.f32.mrf.mxu0
      %v2426 = vadd.f32 0.0, %v2425
      %2427 = vmatmul.bf16.gmra.mxu0 %v1330
      %v2428 = vpop.f32.mrf.mxu0
      %v2429 = vadd.f32 0.0, %v2428
      %v2430 = vpop.f32.mrf.mxu0
      %v2431 = vadd.f32 0.0, %v2430
      %2432 = vmatmul.bf16.gmra.mxu0 %v1333
      %v2433 = vpop.f32.mrf.mxu0
      %v2434 = vadd.f32 0.0, %v2433
      %v2435 = vpop.f32.mrf.mxu0
      %v2436 = vadd.f32 0.0, %v2435
      %2437 = vmatmul.bf16.gmra.mxu0 %v1336
      %v2438 = vpop.f32.mrf.mxu0
      %v2439 = vadd.f32 0.0, %v2438
      %v2440 = vpop.f32.mrf.mxu0
      %v2441 = vadd.f32 0.0, %v2440
      %2442 = vmatmul.bf16.gmra.mxu0 %v1339
      %v2443 = vpop.f32.mrf.mxu0
      %v2444 = vadd.f32 0.0, %v2443
      %v2445 = vpop.f32.mrf.mxu0
      %v2446 = vadd.f32 0.0, %v2445
      %2447 = vmatmul.bf16.gmra.mxu0 %v1853
      %v2448 = vpop.f32.mrf.mxu0
      %v2449 = vadd.f32 0.0, %v2448
      %v2450 = vpop.f32.mrf.mxu0
      %v2451 = vadd.f32 0.0, %v2450
      %2452 = vmatmul.bf16.gmra.mxu0 %v2367
      %v2453 = vpop.f32.mrf.mxu0
      %v2454 = vadd.f32 0.0, %v2453
      %v2455 = vpop.f32.mrf.mxu0
      %v2456 = vadd.f32 0.0, %v2455
      %2457 = vdwg.mxu0
      %v2458 = vadd.f32 %v2290, %v2379
      %v2459 = vadd.f32 %v2291, %v2381
      %v2460 = vadd.f32 %v2292, %v2384
      %v2461 = vadd.f32 %v2293, %v2386
      %v2462 = vadd.f32 %v2294, %v2389
      %v2463 = vadd.f32 %v2295, %v2391
      %v2464 = vadd.f32 %v2296, %v2394
      %v2465 = vadd.f32 %v2297, %v2396
      %v2466 = vadd.f32 %v2298, %v2399
      %v2467 = vadd.f32 %v2299, %v2401
      %v2468 = vadd.f32 %v2300, %v2404
      %v2469 = vadd.f32 %v2301, %v2406
      %v2470 = vadd.f32 %v2302, %v2409
      %v2471 = vadd.f32 %v2303, %v2411
      %v2472 = vadd.f32 %v2304, %v2414
      %v2473 = vadd.f32 %v2305, %v2416
      %v2474 = vadd.f32 %v2306, %v2419
      %v2475 = vadd.f32 %v2307, %v2421
      %v2476 = vadd.f32 %v2308, %v2424
      %v2477 = vadd.f32 %v2309, %v2426
      %v2478 = vadd.f32 %v2310, %v2429
      %v2479 = vadd.f32 %v2311, %v2431
      %v2480 = vadd.f32 %v2312, %v2434
      %v2481 = vadd.f32 %v2313, %v2436
      %v2482 = vadd.f32 %v2314, %v2439
      %v2483 = vadd.f32 %v2315, %v2441
      %v2484 = vadd.f32 %v2316, %v2444
      %v2485 = vadd.f32 %v2317, %v2446
      %v2486 = vadd.f32 %v2318, %v2449
      %v2487 = vadd.f32 %v2319, %v2451
      %v2488 = vadd.f32 %v2320, %v2454
      %v2489 = vadd.f32 %v2321, %v2456
      %v2490 = vld [vmem:[%s2] sm:$0x1]
      %v2492 = vperm.slane %v2490, 0
      %v2494 = vadd.f32 %v2458, %v2492
      %v2495 = vadd.f32 %v2459, %v2492
      %v2496 = vadd.f32 %v2460, %v2492
      %v2497 = vadd.f32 %v2461, %v2492
      %v2498 = vadd.f32 %v2462, %v2492
      %v2499 = vadd.f32 %v2463, %v2492
      %v2500 = vadd.f32 %v2464, %v2492
      %v2501 = vadd.f32 %v2465, %v2492
      %v2502 = vadd.f32 %v2466, %v2492
      %v2503 = vadd.f32 %v2467, %v2492
      %v2504 = vadd.f32 %v2468, %v2492
      %v2505 = vadd.f32 %v2469, %v2492
      %v2506 = vadd.f32 %v2470, %v2492
      %v2507 = vadd.f32 %v2471, %v2492
      %v2508 = vadd.f32 %v2472, %v2492
      %v2509 = vadd.f32 %v2473, %v2492
      %v2510 = vadd.f32 %v2474, %v2492
      %v2511 = vadd.f32 %v2475, %v2492
      %v2512 = vadd.f32 %v2476, %v2492
      %v2513 = vadd.f32 %v2477, %v2492
      %v2514 = vadd.f32 %v2478, %v2492
      %v2515 = vadd.f32 %v2479, %v2492
      %v2516 = vadd.f32 %v2480, %v2492
      %v2517 = vadd.f32 %v2481, %v2492
      %v2518 = vadd.f32 %v2482, %v2492
      %v2519 = vadd.f32 %v2483, %v2492
      %v2520 = vadd.f32 %v2484, %v2492
      %v2521 = vadd.f32 %v2485, %v2492
      %v2522 = vadd.f32 %v2486, %v2492
      %v2523 = vadd.f32 %v2487, %v2492
      %v2524 = vadd.f32 %v2488, %v2492
      %v2525 = vadd.f32 %v2489, %v2492
      %v2526 = vpack.c.bf16 %v2494, %v2494
      %v2527 = vpack.c.bf16 %v2495, %v2495
      %v2528 = vpack.c.bf16 %v2496, %v2496
      %v2529 = vpack.c.bf16 %v2497, %v2497
      %v2530 = vpack.c.bf16 %v2498, %v2498
      %v2531 = vpack.c.bf16 %v2499, %v2499
      %v2532 = vpack.c.bf16 %v2500, %v2500
      %v2533 = vpack.c.bf16 %v2501, %v2501
      %v2534 = vpack.c.bf16 %v2502, %v2502
      %v2535 = vpack.c.bf16 %v2503, %v2503
      %v2536 = vpack.c.bf16 %v2504, %v2504
      %v2537 = vpack.c.bf16 %v2505, %v2505
      %v2538 = vpack.c.bf16 %v2506, %v2506
      %v2539 = vpack.c.bf16 %v2507, %v2507
      %v2540 = vpack.c.bf16 %v2508, %v2508
      %v2541 = vpack.c.bf16 %v2509, %v2509
      %v2542 = vpack.c.bf16 %v2510, %v2510
      %v2543 = vpack.c.bf16 %v2511, %v2511
      %v2544 = vpack.c.bf16 %v2512, %v2512
      %v2545 = vpack.c.bf16 %v2513, %v2513
      %v2546 = vpack.c.bf16 %v2514, %v2514
      %v2547 = vpack.c.bf16 %v2515, %v2515
      %v2548 = vpack.c.bf16 %v2516, %v2516
      %v2549 = vpack.c.bf16 %v2517, %v2517
      %v2550 = vpack.c.bf16 %v2518, %v2518
      %v2551 = vpack.c.bf16 %v2519, %v2519
      %v2552 = vpack.c.bf16 %v2520, %v2520
      %v2553 = vpack.c.bf16 %v2521, %v2521
      %v2554 = vpack.c.bf16 %v2522, %v2522
      %v2555 = vpack.c.bf16 %v2523, %v2523
      %v2556 = vpack.c.bf16 %v2524, %v2524
      %v2557 = vpack.c.bf16 %v2525, %v2525
      %2558 = vst [vmem:[%s170] sm:$0xf] %v2526
      %2559 = vst [vmem:[%s170 + $0x4] sm:$0xf] %v2527
      %2560 = vst [vmem:[%s170 + $0x8] sm:$0xf] %v2528
      %2561 = vst [vmem:[%s170 + $0xc] sm:$0xf] %v2529
      %2562 = vst [vmem:[%s170 + $0x10] sm:$0xf] %v2530
      %2563 = vst [vmem:[%s170 + $0x14] sm:$0xf] %v2531
      %2564 = vst [vmem:[%s170 + $0x18] sm:$0xf] %v2532
      %2565 = vst [vmem:[%s170 + $0x1c] sm:$0xf] %v2533
      %2566 = vst [vmem:[%s170 + $0x20] sm:$0xf] %v2534
      %2567 = vst [vmem:[%s170 + $0x24] sm:$0xf] %v2535
      %2568 = vst [vmem:[%s170 + $0x28] sm:$0xf] %v2536
      %2569 = vst [vmem:[%s170 + $0x2c] sm:$0xf] %v2537
      %2570 = vst [vmem:[%s170 + $0x30] sm:$0xf] %v2538
      %2571 = vst [vmem:[%s170 + $0x34] sm:$0xf] %v2539
      %2572 = vst [vmem:[%s170 + $0x38] sm:$0xf] %v2540
      %2573 = vst [vmem:[%s170 + $0x3c] sm:$0xf] %v2541
      %2574 = vst [vmem:[%s170 + $0x40] sm:$0xf] %v2542
      %2575 = vst [vmem:[%s170 + $0x44] sm:$0xf] %v2543
      %2576 = vst [vmem:[%s170 + $0x48] sm:$0xf] %v2544
      %2577 = vst [vmem:[%s170 + $0x4c] sm:$0xf] %v2545
      %2578 = vst [vmem:[%s170 + $0x50] sm:$0xf] %v2546
      %2579 = vst [vmem:[%s170 + $0x54] sm:$0xf] %v2547
      %2580 = vst [vmem:[%s170 + $0x58] sm:$0xf] %v2548
      %2581 = vst [vmem:[%s170 + $0x5c] sm:$0xf] %v2549
      %2582 = vst [vmem:[%s170 + $0x60] sm:$0xf] %v2550
      %2583 = vst [vmem:[%s170 + $0x64] sm:$0xf] %v2551
      %2584 = vst [vmem:[%s170 + $0x68] sm:$0xf] %v2552
      %2585 = vst [vmem:[%s170 + $0x6c] sm:$0xf] %v2553
      %2586 = vst [vmem:[%s170 + $0x70] sm:$0xf] %v2554
      %2587 = vst [vmem:[%s170 + $0x74] sm:$0xf] %v2555
      %2588 = vst [vmem:[%s170 + $0x78] sm:$0xf] %v2556
      %2589 = vst [vmem:[%s170 + $0x7c] sm:$0xf] %v2557
      %p2590 = scmp.lt.s32.totalorder %s14, 1
      %s2591 = scalar_select %p2590, %s14, 1
      %s2592 = smul.addr %s2591, 32
      %s2593 = smul.addr %s2592, 4
      %s2594 = scalar_lea.vmem %s3, %s2593
      // Predicated region
      $region33: #{inception_b_forward.5} parent=31 // pred_check
        %p2595 = pneg %p100
      $region34: #{inception_b_forward.5} parent=31 // pred_check_branch
        %2597 = sbr.rel (%p2595) target = $region36
      $region35: #{inception_b_forward.5} parent=31 // pred_region
        _
      $region36: #{inception_b_forward.5} parent=31 // pred_fallthru
        _
    $region32: #{inception_b_forward.5} parent=5 // pred_fallthru
      _
    %p2598 = scmp.le.s32.totalorder 2, %s9
    // Predicated region
    $region37: #{inception_b_forward.5} parent=5 // pred_check
      %p2599 = pneg %p2598
    $region38: #{inception_b_forward.5} parent=5 // pred_check_branch
      %2601 = sbr.rel (%p2599) target = $region40
    $region39: #{inception_b_forward.5} parent=5 // pred_region
      %s2602 = ssub.s32 %s9, 2
      // Predicated region
      $region41: #{inception_b_forward.5} parent=39 // pred_check
        %p2603 = pneg %p106
      $region42: #{inception_b_forward.5} parent=39 // pred_check_branch
        %2605 = sbr.rel (%p2603) target = $region44
      $region43: #{inception_b_forward.5} parent=39 // pred_region
        %p2606 = scmp.lt.s32.totalorder %s15, 1
        %s2607 = scalar_select %p2606, %s15, 1
        %s2608 = smul.addr %s2607, 32
        %s2609 = smul.addr %s2608, 4
        %s2610 = scalar_lea.vmem %s3, %s2609
      $region44: #{inception_b_forward.5} parent=39 // pred_fallthru
        _
    $region40: #{inception_b_forward.5} parent=5 // pred_fallthru
      _
  $region6: #{inception_b_forward.5} parent=0 // loop_footer
    %s13 = sadd.s32 1, %s9
  $region7: #{inception_b_forward.5} parent=0 // loop_footer_branch
    %8 = sbr.rel target = $region3
  $region8: #{inception_b_forward.5} parent=0 // loop_exit
    _

// kernel: inception_b_forward.6
$region0: #{inception_b_forward.6}
  #allocation0 [shape = 'u32[]', space=smem, size = 0x4, offset = 0x4, fixed_abs, tag = 'smem constant byte address 0x4 - core index']
  #allocation1 [shape = 'u32[72,128]{1,0:T(1,128)}', space=vmem, size = 0x9000, scoped, tag = 'internal scratch']
  %s0 = inlined_call_operand.vmem [shape: bf16[2,8,9,128], index: 0, kind: input, shape index: {}]
  %s1 = inlined_call_operand.vmem [shape: bf16[2,8,9,128], index: 1, kind: input, shape index: {}]
  %s2 = inlined_call_operand.vmem [shape: bf16[2,8,9,128], index: 2, kind: input, shape index: {}]
  %s3 = inlined_call_operand.vmem [shape: bf16[2,8,9,128], index: 3, kind: input, shape index: {}]
  %s4 = inlined_call_operand.vmem [shape: bf16[9,128,128], index: 4, kind: input, shape index: {}]
  %s5 = inlined_call_operand.vmem [shape: f32[1,128], index: 5, kind: input, shape index: {}]
  %s6 = inlined_call_operand.vmem [shape: f32[2,7,8,128], index: 6, kind: output, shape index: {}]
  %s7 = sld [smem:[#allocation0]]
  $region57: #{inception_b_forward.6} parent=0
    _
  %s9 = ssub.s32 1, %s7
  %s10 = scalar_select 0, %s9, %s7
  loop: start=0, step=1, limit=4
  $region2: #{inception_b_forward.6} parent=0 // loop_pre_header
    _
  $region3: #{inception_b_forward.6} parent=0 // loop_header
    %s12 = sphi 0, %s16
    %p13 = scmp.ge.s32.totalorder %s12, 4
    %s22 = sphi 0, %s24
    %s25 = sphi 0, %s22
    %s26 = sphi 0, %s25
    %s42 = sphi 0, %s26
    %s48 = sphi 0, %s50
    %s51 = sphi 0, %s48
    %s52 = sphi 0, %s51
    %s68 = sphi 0, %s52
    %s74 = sphi 0, %s76
    %s77 = sphi 0, %s74
    %s78 = sphi 0, %s77
    %s94 = sphi 0, %s78
    %s100 = sphi 0, %s102
    %s103 = sphi 0, %s100
    %s104 = sphi 0, %s103
    %s120 = sphi 0, %s104
    %s124 = sphi 0, %s124
    %s126 = sphi 0, %s124
    %s127 = sphi 0, %s126
    %s141 = sphi 0, %s127
    %s145 = sphi 0, %s145
    %s147 = sphi 0, %s145
    %s148 = sphi 0, %s147
    %s162 = sphi 0, %s148
    %s168 = sphi 0, %s170
    %s171 = sphi 0, %s168
    %s172 = sphi 0, %s171
    %s188 = sphi 0, %s172
  $region4: #{inception_b_forward.6} parent=0 // loop_header_branch
    %15 = sbr.rel (%p13) target = $region8
  $region5: #{inception_b_forward.6} parent=0 // loop_body
    %s17 = ssub.s32 %s12, 1
    %s18 = ssub.s32 %s12, 2
    %s19 = sadd.s32 %s12, 1
    %s20 = ssub.s32 %s12, %s19
    %p21 = scmp.eq.s32.totalorder %s20, 0
    %s23 = sadd.s32 %s22, 1
    %s24 = scalar_select %p21, %s22, %s23
    %p27 = pneg %p21
    %p28 = scmp.eq.s32.totalorder %s12, 1
    %p29 = por %p27, %p28
    %p30 = scmp.ne.s32.totalorder %s22, %s25
    %p31 = scmp.eq.s32.totalorder %s12, 0
    %p32 = por %p30, %p31
    %p33 = scmp.ne.s32.totalorder %s22, %s25
    %p34 = scmp.eq.s32.totalorder %s17, 1
    %p35 = por %p33, %p34
    %p36 = scmp.ne.s32.totalorder %s25, %s26
    %p37 = scmp.eq.s32.totalorder %s17, 0
    %p38 = por %p36, %p37
    %p39 = scmp.ne.s32.totalorder %s25, %s26
    %p40 = scmp.eq.s32.totalorder %s18, 1
    %p41 = por %p39, %p40
    %p43 = scmp.ne.s32.totalorder %s26, %s42
    %p44 = scmp.eq.s32.totalorder %s18, 0
    %p45 = por %p43, %p44
    %s46 = ssub.s32 %s12, %s19
    %p47 = scmp.eq.s32.totalorder %s46, 0
    %s49 = sadd.s32 %s48, 1
    %s50 = scalar_select %p47, %s48, %s49
    %p53 = pneg %p47
    %p54 = scmp.eq.s32.totalorder %s12, 1
    %p55 = por %p53, %p54
    %p56 = scmp.ne.s32.totalorder %s48, %s51
    %p57 = scmp.eq.s32.totalorder %s12, 0
    %p58 = por %p56, %p57
    %p59 = scmp.ne.s32.totalorder %s48, %s51
    %p60 = scmp.eq.s32.totalorder %s17, 1
    %p61 = por %p59, %p60
    %p62 = scmp.ne.s32.totalorder %s51, %s52
    %p63 = scmp.eq.s32.totalorder %s17, 0
    %p64 = por %p62, %p63
    %p65 = scmp.ne.s32.totalorder %s51, %s52
    %p66 = scmp.eq.s32.totalorder %s18, 1
    %p67 = por %p65, %p66
    %p69 = scmp.ne.s32.totalorder %s52, %s68
    %p70 = scmp.eq.s32.totalorder %s18, 0
    %p71 = por %p69, %p70
    %s72 = ssub.s32 %s12, %s19
    %p73 = scmp.eq.s32.totalorder %s72, 0
    %s75 = sadd.s32 %s74, 1
    %s76 = scalar_select %p73, %s74, %s75
    %p79 = pneg %p73
    %p80 = scmp.eq.s32.totalorder %s12, 1
    %p81 = por %p79, %p80
    %p82 = scmp.ne.s32.totalorder %s74, %s77
    %p83 = scmp.eq.s32.totalorder %s12, 0
    %p84 = por %p82, %p83
    %p85 = scmp.ne.s32.totalorder %s74, %s77
    %p86 = scmp.eq.s32.totalorder %s17, 1
    %p87 = por %p85, %p86
    %p88 = scmp.ne.s32.totalorder %s77, %s78
    %p89 = scmp.eq.s32.totalorder %s17, 0
    %p90 = por %p88, %p89
    %p91 = scmp.ne.s32.totalorder %s77, %s78
    %p92 = scmp.eq.s32.totalorder %s18, 1
    %p93 = por %p91, %p92
    %p95 = scmp.ne.s32.totalorder %s78, %s94
    %p96 = scmp.eq.s32.totalorder %s18, 0
    %p97 = por %p95, %p96
    %s98 = ssub.s32 %s12, %s19
    %p99 = scmp.eq.s32.totalorder %s98, 0
    %s101 = sadd.s32 %s100, 1
    %s102 = scalar_select %p99, %s100, %s101
    %p105 = pneg %p99
    %p106 = scmp.eq.s32.totalorder %s12, 1
    %p107 = por %p105, %p106
    %p108 = scmp.ne.s32.totalorder %s100, %s103
    %p109 = scmp.eq.s32.totalorder %s12, 0
    %p110 = por %p108, %p109
    %p111 = scmp.ne.s32.totalorder %s100, %s103
    %p112 = scmp.eq.s32.totalorder %s17, 1
    %p113 = por %p111, %p112
    %p114 = scmp.ne.s32.totalorder %s103, %s104
    %p115 = scmp.eq.s32.totalorder %s17, 0
    %p116 = por %p114, %p115
    %p117 = scmp.ne.s32.totalorder %s103, %s104
    %p118 = scmp.eq.s32.totalorder %s18, 1
    %p119 = por %p117, %p118
    %p121 = scmp.ne.s32.totalorder %s104, %s120
    %p122 = scmp.eq.s32.totalorder %s18, 0
    %p123 = por %p121, %p122
    %s125 = sadd.s32 %s124, 1
    %p128 = scmp.eq.s32.totalorder %s12, 1
    %p129 = scmp.ne.s32.totalorder %s124, %s126
    %p130 = scmp.eq.s32.totalorder %s12, 0
    %p131 = por %p129, %p130
    %p132 = scmp.ne.s32.totalorder %s124, %s126
    %p133 = scmp.eq.s32.totalorder %s17, 1
    %p134 = por %p132, %p133
    %p135 = scmp.ne.s32.totalorder %s126, %s127
    %p136 = scmp.eq.s32.totalorder %s17, 0
    %p137 = por %p135, %p136
    %p138 = scmp.ne.s32.totalorder %s126, %s127
    %p139 = scmp.eq.s32.totalorder %s18, 1
    %p140 = por %p138, %p139
    %p142 = scmp.ne.s32.totalorder %s127, %s141
    %p143 = scmp.eq.s32.totalorder %s18, 0
    %p144 = por %p142, %p143
    %s146 = sadd.s32 %s145, 1
    %p149 = scmp.eq.s32.totalorder %s12, 1
    %p150 = scmp.ne.s32.totalorder %s145, %s147
    %p151 = scmp.eq.s32.totalorder %s12, 0
    %p152 = por %p150, %p151
    %p153 = scmp.ne.s32.totalorder %s145, %s147
    %p154 = scmp.eq.s32.totalorder %s17, 1
    %p155 = por %p153, %p154
    %p156 = scmp.ne.s32.totalorder %s147, %s148
    %p157 = scmp.eq.s32.totalorder %s17, 0
    %p158 = por %p156, %p157
    %p159 = scmp.ne.s32.totalorder %s147, %s148
    %p160 = scmp.eq.s32.totalorder %s18, 1
    %p161 = por %p159, %p160
    %p163 = scmp.ne.s32.totalorder %s148, %s162
    %p164 = scmp.eq.s32.totalorder %s18, 0
    %p165 = por %p163, %p164
    %s166 = ssub.s32 %s12, %s19
    %p167 = scmp.eq.s32.totalorder %s166, 0
    %s169 = sadd.s32 %s168, 1
    %s170 = scalar_select %p167, %s168, %s169
    %p173 = pneg %p167
    %p174 = scmp.eq.s32.totalorder %s12, 1
    %p175 = por %p173, %p174
    %p176 = scmp.ne.s32.totalorder %s168, %s171
    %p177 = scmp.eq.s32.totalorder %s12, 0
    %p178 = por %p176, %p177
    %p179 = scmp.ne.s32.totalorder %s168, %s171
    %p180 = scmp.eq.s32.totalorder %s17, 1
    %p181 = por %p179, %p180
    %p182 = scmp.ne.s32.totalorder %s171, %s172
    %p183 = scmp.eq.s32.totalorder %s17, 0
    %p184 = por %p182, %p183
    %p185 = scmp.ne.s32.totalorder %s171, %s172
    %p186 = scmp.eq.s32.totalorder %s18, 1
    %p187 = por %p185, %p186
    %p189 = scmp.ne.s32.totalorder %s172, %s188
    %p190 = scmp.eq.s32.totalorder %s18, 0
    %p191 = por %p189, %p190
    %p192 = scmp.le.s32.totalorder 1, %s12
    %p193 = scmp.lt.s32.totalorder %s12, 3
    %p194 = pnand %p192, %p193
    %p195 = pneg %p194
    // Predicated region
    $region9: #{inception_b_forward.6} parent=5 // pred_check
      _
    $region10: #{inception_b_forward.6} parent=5 // pred_check_branch
      %197 = sbr.rel (%p194) target = $region12
    $region11: #{inception_b_forward.6} parent=5 // pred_region
      %s198 = ssub.s32 %s12, 1
      // Predicated region
      $region13: #{inception_b_forward.6} parent=11 // pred_check
        %p199 = pneg %p137
      $region14: #{inception_b_forward.6} parent=11 // pred_check_branch
        %201 = sbr.rel (%p199) target = $region16
      $region15: #{inception_b_forward.6} parent=11 // pred_region
        _
      $region16: #{inception_b_forward.6} parent=11 // pred_fallthru
        _
      // Predicated region
      $region17: #{inception_b_forward.6} parent=11 // pred_check
        %p202 = pneg %p158
      $region18: #{inception_b_forward.6} parent=11 // pred_check_branch
        %204 = sbr.rel (%p202) target = $region20
      $region19: #{inception_b_forward.6} parent=11 // pred_region
        _
      $region20: #{inception_b_forward.6} parent=11 // pred_fallthru
        _
    $region12: #{inception_b_forward.6} parent=5 // pred_fallthru
      _
    %p205 = scmp.lt.s32.totalorder %s12, 2
    // Predicated region
    $region21: #{inception_b_forward.6} parent=5 // pred_check
      %p206 = pneg %p205
    $region22: #{inception_b_forward.6} parent=5 // pred_check_branch
      %208 = sbr.rel (%p206) target = $region24
    $region23: #{inception_b_forward.6} parent=5 // pred_region
      // Predicated region
      $region25: #{inception_b_forward.6} parent=23 // pred_check
        %p209 = pneg %p32
      $region26: #{inception_b_forward.6} parent=23 // pred_check_branch
        %211 = sbr.rel (%p209) target = $region28
      $region27: #{inception_b_forward.6} parent=23 // pred_region
        %p212 = scmp.lt.s32.totalorder %s12, 1
        %s213 = scalar_select %p212, %s12, 1
        %s214 = smul.addr %s213, 16
        %s215 = smul.addr %s214, 4
        %s216 = scalar_lea.vmem %s0, %s215
      $region28: #{inception_b_forward.6} parent=23 // pred_fallthru
        _
      // Predicated region
      $region29: #{inception_b_forward.6} parent=23 // pred_check
        %p217 = pneg %p58
      $region30: #{inception_b_forward.6} parent=23 // pred_check_branch
        %219 = sbr.rel (%p217) target = $region32
      $region31: #{inception_b_forward.6} parent=23 // pred_region
        %p220 = scmp.lt.s32.totalorder %s12, 1
        %s221 = scalar_select %p220, %s12, 1
        %s222 = smul.addr %s221, 16
        %s223 = smul.addr %s222, 4
        %s224 = scalar_lea.vmem %s1, %s223
      $region32: #{inception_b_forward.6} parent=23 // pred_fallthru
        _
      // Predicated region
      $region33: #{inception_b_forward.6} parent=23 // pred_check
        %p225 = pneg %p84
      $region34: #{inception_b_forward.6} parent=23 // pred_check_branch
        %227 = sbr.rel (%p225) target = $region36
      $region35: #{inception_b_forward.6} parent=23 // pred_region
        %p228 = scmp.lt.s32.totalorder %s12, 1
        %s229 = scalar_select %p228, %s12, 1
        %s230 = smul.addr %s229, 16
        %s231 = smul.addr %s230, 4
        %s232 = scalar_lea.vmem %s2, %s231
      $region36: #{inception_b_forward.6} parent=23 // pred_fallthru
        _
      // Predicated region
      $region37: #{inception_b_forward.6} parent=23 // pred_check
        %p233 = pneg %p110
      $region38: #{inception_b_forward.6} parent=23 // pred_check_branch
        %235 = sbr.rel (%p233) target = $region40
      $region39: #{inception_b_forward.6} parent=23 // pred_region
        %p236 = scmp.lt.s32.totalorder %s12, 1
        %s237 = scalar_select %p236, %s12, 1
        %s238 = smul.addr %s237, 16
        %s239 = smul.addr %s238, 4
        %s240 = scalar_lea.vmem %s3, %s239
      $region40: #{inception_b_forward.6} parent=23 // pred_fallthru
        _
    $region24: #{inception_b_forward.6} parent=5 // pred_fallthru
      _
    %p241 = scmp.le.s32.totalorder 1, %s12
    %p242 = scmp.lt.s32.totalorder %s12, 3
    %p243 = pnand %p241, %p242
    %p244 = pneg %p243
    // Predicated region
    $region41: #{inception_b_forward.6} parent=5 // pred_check
      _
    $region42: #{inception_b_forward.6} parent=5 // pred_check_branch
      %246 = sbr.rel (%p243) target = $region44
    $region43: #{inception_b_forward.6} parent=5 // pred_region
      %s247 = ssub.s32 %s12, 1
      %p248 = scmp.lt.s32.totalorder %s17, 1
      %s249 = scalar_select %p248, %s17, 1
      %s250 = smul.addr %s249, 16
      %s251 = smul.addr %s250, 4
      %s252 = scalar_lea.vmem %s0, %s251
      %p253 = pneg %p38
      %p254 = pneg %p35
      %p255 = scmp.lt.s32.totalorder %s17, 1
      %s256 = scalar_select %p255, %s17, 1
      %s257 = smul.addr %s256, 16
      %s258 = smul.addr %s257, 4
      %s259 = scalar_lea.vmem %s1, %s258
      %p260 = pneg %p64
      %p261 = pneg %p61
      %p262 = scmp.lt.s32.totalorder %s17, 1
      %s263 = scalar_select %p262, %s17, 1
      %s264 = smul.addr %s263, 16
      %s265 = smul.addr %s264, 4
      %s266 = scalar_lea.vmem %s2, %s265
      %p267 = pneg %p90
      %p268 = pneg %p87
      %p269 = scmp.lt.s32.totalorder %s17, 1
      %s270 = scalar_select %p269, %s17, 1
      %s271 = smul.addr %s270, 16
      %s272 = smul.addr %s271, 4
      %s273 = scalar_lea.vmem %s3, %s272
      %p274 = pneg %p116
      %p275 = pneg %p113
      %p276 = pneg %p137
      %p277 = pneg %p134
      %p278 = pneg %p158
      %p279 = pneg %p155
      %p280 = pneg %p184
      %p281 = pneg %p181
      %p282 = scmp.lt.s32.totalorder %s17, 1
      %s283 = scalar_select %p282, %s17, 1
      %s284 = smul.addr %s283, 7
      %s285 = smul.addr %s284, 8
      %s286 = scalar_lea.vmem %s6, %s285
      %p287 = scmp.lt.s32.totalorder %s17, 1
      %s288 = scalar_select %p287, %s17, 1
      %s289 = smul.addr %s288, 16
      %s290 = smul.addr %s289, 4
      %s291 = scalar_lea.vmem %s0, %s290
      %p292 = scmp.lt.s32.totalorder %s17, 1
      %s293 = scalar_select %p292, %s17, 1
      %s294 = smul.addr %s293, 16
      %s295 = smul.addr %s294, 4
      %s296 = scalar_lea.vmem %s1, %s295
      %p297 = scmp.lt.s32.totalorder %s17, 1
      %s298 = scalar_select %p297, %s17, 1
      %s299 = smul.addr %s298, 16
      %s300 = smul.addr %s299, 4
      %s301 = scalar_lea.vmem %s2, %s300
      %p302 = scmp.lt.s32.totalorder %s17, 1
      %s303 = scalar_select %p302, %s17, 1
      %s304 = smul.addr %s303, 16
      %s305 = smul.addr %s304, 4
      %s306 = scalar_lea.vmem %s3, %s305
      %p307 = scmp.lt.s32.totalorder %s17, 1
      %s308 = scalar_select %p307, %s17, 1
      %s309 = smul.addr %s308, 7
      %s310 = smul.addr %s309, 8
      %s311 = scalar_lea.vmem %s6, %s310
      %v312 = vld [vmem:[%s291] sm:$0xf]
      %v313 = vld [vmem:[%s291 + $0x4] sm:$0x1]
      %v314 = vld [vmem:[%s291 + $0x8] sm:$0xf]
      %v315 = vld [vmem:[%s291 + $0xc] sm:$0x1]
      %v316 = vld [vmem:[%s291 + $0x10] sm:$0xf]
      %v317 = vld [vmem:[%s291 + $0x14] sm:$0x1]
      %v318 = vld [vmem:[%s291 + $0x18] sm:$0xf]
      %v319 = vld [vmem:[%s291 + $0x1c] sm:$0x1]
      %v320 = vld [vmem:[%s291 + $0x20] sm:$0xf]
      %v321 = vld [vmem:[%s291 + $0x24] sm:$0x1]
      %v322 = vld [vmem:[%s291 + $0x28] sm:$0xf]
      %v323 = vld [vmem:[%s291 + $0x2c] sm:$0x1]
      %v324 = vld [vmem:[%s291 + $0x30] sm:$0xf]
      %v325 = vld [vmem:[%s291 + $0x34] sm:$0x1]
      %v326 = vld [vmem:[%s291 + $0x38] sm:$0xf]
      %v327 = vld [vmem:[%s291 + $0x3c] sm:$0x1]
      %v328 = vld [vmem:[%s296] sm:$0xf]
      %v329 = vld [vmem:[%s296 + $0x8] sm:$0xf]
      %v330 = vld [vmem:[%s296 + $0x10] sm:$0xf]
      %v331 = vld [vmem:[%s296 + $0x18] sm:$0xf]
      %v332 = vld [vmem:[%s296 + $0x20] sm:$0xf]
      %v333 = vld [vmem:[%s296 + $0x28] sm:$0xf]
      %v334 = vld [vmem:[%s296 + $0x30] sm:$0xf]
      %v335 = vld [vmem:[%s296 + $0x38] sm:$0xf]
      %v336 = vld [vmem:[%s301] sm:$0xf]
      %v337 = vld [vmem:[%s301 + $0x4] sm:$0x1]
      %v338 = vld [vmem:[%s301 + $0x8] sm:$0xf]
      %v339 = vld [vmem:[%s301 + $0xc] sm:$0x1]
      %v340 = vld [vmem:[%s301 + $0x10] sm:$0xf]
      %v341 = vld [vmem:[%s301 + $0x14] sm:$0x1]
      %v342 = vld [vmem:[%s301 + $0x18] sm:$0xf]
      %v343 = vld [vmem:[%s301 + $0x1c] sm:$0x1]
      %v344 = vld [vmem:[%s301 + $0x20] sm:$0xf]
      %v345 = vld [vmem:[%s301 + $0x24] sm:$0x1]
      %v346 = vld [vmem:[%s301 + $0x28] sm:$0xf]
      %v347 = vld [vmem:[%s301 + $0x2c] sm:$0x1]
      %v348 = vld [vmem:[%s301 + $0x30] sm:$0xf]
      %v349 = vld [vmem:[%s301 + $0x34] sm:$0x1]
      %v350 = vld [vmem:[%s306] sm:$0xf]
      %v351 = vld [vmem:[%s306 + $0x8] sm:$0xf]
      %v352 = vld [vmem:[%s306 + $0x10] sm:$0xf]
      %v353 = vld [vmem:[%s306 + $0x18] sm:$0xf]
      %v354 = vld [vmem:[%s306 + $0x20] sm:$0xf]
      %v355 = vld [vmem:[%s306 + $0x28] sm:$0xf]
      %v356 = vld [vmem:[%s306 + $0x30] sm:$0xf]
      %v357 = vld [vmem:[%s4] sm:$0xf]
      %v358 = vld [vmem:[%s4 + $0x4] sm:$0xf]
      %v359 = vld [vmem:[%s4 + $0x8] sm:$0xf]
      %v360 = vld [vmem:[%s4 + $0xc] sm:$0xf]
      %v361 = vld [vmem:[%s4 + $0x10] sm:$0xf]
      %v362 = vld [vmem:[%s4 + $0x14] sm:$0xf]
      %v363 = vld [vmem:[%s4 + $0x18] sm:$0xf]
      %v364 = vld [vmem:[%s4 + $0x1c] sm:$0xf]
      %v365 = vld [vmem:[%s4 + $0x20] sm:$0xf]
      %v366 = vld [vmem:[%s4 + $0x24] sm:$0xf]
      %v367 = vld [vmem:[%s4 + $0x28] sm:$0xf]
      %v368 = vld [vmem:[%s4 + $0x2c] sm:$0xf]
      %v369 = vld [vmem:[%s4 + $0x30] sm:$0xf]
      %v370 = vld [vmem:[%s4 + $0x34] sm:$0xf]
      %v371 = vld [vmem:[%s4 + $0x38] sm:$0xf]
      %v372 = vld [vmem:[%s4 + $0x3c] sm:$0xf]
      %s373 = scalar_lea.vmem %s4, 64
      %v374 = vld [vmem:[%s373] sm:$0xf]
      %v375 = vld [vmem:[%s373 + $0x4] sm:$0xf]
      %v376 = vld [vmem:[%s373 + $0x8] sm:$0xf]
      %v377 = vld [vmem:[%s373 + $0xc] sm:$0xf]
      %v378 = vld [vmem:[%s373 + $0x10] sm:$0xf]
      %v379 = vld [vmem:[%s373 + $0x14] sm:$0xf]
      %v380 = vld [vmem:[%s373 + $0x18] sm:$0xf]
      %v381 = vld [vmem:[%s373 + $0x1c] sm:$0xf]
      %v382 = vld [vmem:[%s373 + $0x20] sm:$0xf]
      %v383 = vld [vmem:[%s373 + $0x24] sm:$0xf]
      %v384 = vld [vmem:[%s373 + $0x28] sm:$0xf]
      %v385 = vld [vmem:[%s373 + $0x2c] sm:$0xf]
      %v386 = vld [vmem:[%s373 + $0x30] sm:$0xf]
      %v387 = vld [vmem:[%s373 + $0x34] sm:$0xf]
      %v388 = vld [vmem:[%s373 + $0x38] sm:$0xf]
      %v389 = vld [vmem:[%s373 + $0x3c] sm:$0xf]
      %v397 = vunpack.c.l.b16 %v328
      %v398 = vunpack.c.l.b16 %v329
      %v399 = vunpack.c.l.b16 %v330
      %v400 = vunpack.c.l.b16 %v331
      %v401 = vunpack.c.l.b16 %v332
      %v402 = vunpack.c.l.b16 %v333
      %v403 = vunpack.c.l.b16 %v334
      %v404 = vpack.c.b16 %v398, %v397
      %v405 = vpack.c.b16 %v400, %v399
      %v406 = vpack.c.b16 %v402, %v401
      %v407 = vpack.c.b16 %v403, %v403
      %v428 = vunpack.c.l.b16 %v374
      %v429 = vunpack.c.l.b16 %v375
      %v430 = vunpack.c.l.b16 %v376
      %v431 = vunpack.c.l.b16 %v377
      %v432 = vunpack.c.l.b16 %v378
      %v433 = vunpack.c.l.b16 %v379
      %v434 = vunpack.c.l.b16 %v380
      %v435 = vunpack.c.l.b16 %v381
      %v436 = vunpack.c.l.b16 %v382
      %v437 = vunpack.c.l.b16 %v383
      %v438 = vunpack.c.l.b16 %v384
      %v439 = vunpack.c.l.b16 %v385
      %v440 = vunpack.c.l.b16 %v386
      %v441 = vunpack.c.l.b16 %v387
      %v442 = vunpack.c.l.b16 %v388
      %v443 = vunpack.c.l.b16 %v389
      %v444 = vpack.c.b16 %v429, %v428
      %v445 = vpack.c.b16 %v431, %v430
      %v446 = vpack.c.b16 %v433, %v432
      %v447 = vpack.c.b16 %v435, %v434
      %v448 = vpack.c.b16 %v437, %v436
      %v449 = vpack.c.b16 %v439, %v438
      %v450 = vpack.c.b16 %v441, %v440
      %v451 = vpack.c.b16 %v443, %v442
      %460 = vmatpush.bf16.msra.mxu0 %v451
      %461 = vmatpush.bf16.msra.mxu0 %v450
      %462 = vmatpush.bf16.msra.mxu0 %v449
      %463 = vmatpush.bf16.msra.mxu0 %v448
      %464 = vmatpush.bf16.msra.mxu0 %v447
      %465 = vmatpush.bf16.msra.mxu0 %v446
      %466 = vmatpush.bf16.msra.mxu0 %v445
      %467 = vmatpush.bf16.msra.mxu0 %v444
      %468 = vmatmul.bf16.gmra.mxu0 %v404
      %v469 = vpop.f32.mrf.mxu0
      %v470 = vadd.f32 0.0, %v469
      %v471 = vpop.f32.mrf.mxu0
      %v472 = vadd.f32 0.0, %v471
      %473 = vmatmul.bf16.gmra.mxu0 %v405
      %v474 = vpop.f32.mrf.mxu0
      %v475 = vadd.f32 0.0, %v474
      %v476 = vpop.f32.mrf.mxu0
      %v477 = vadd.f32 0.0, %v476
      %478 = vmatmul.bf16.gmra.mxu0 %v406
      %v479 = vpop.f32.mrf.mxu0
      %v480 = vadd.f32 0.0, %v479
      %v481 = vpop.f32.mrf.mxu0
      %v482 = vadd.f32 0.0, %v481
      %483 = vmatmul.bf16.gmra.mxu0 %v407
      %v484 = vpop.f32.mrf.mxu0
      %v485 = vadd.f32 0.0, %v484
      %v486 = vpop.f32.mrf.mxu0
      %487 = vdwg.mxu0
      %v495 = vunpack.c.l.b16 %v312
      %v496 = vunpack.c.l.b16 %v314
      %v497 = vunpack.c.l.b16 %v316
      %v498 = vunpack.c.l.b16 %v318
      %v499 = vunpack.c.l.b16 %v320
      %v500 = vunpack.c.l.b16 %v322
      %v501 = vunpack.c.l.b16 %v324
      %v502 = vpack.c.b16 %v496, %v495
      %v503 = vpack.c.b16 %v498, %v497
      %v504 = vpack.c.b16 %v500, %v499
      %v505 = vpack.c.b16 %v501, %v501
      %v526 = vunpack.c.l.b16 %v357
      %v527 = vunpack.c.l.b16 %v358
      %v528 = vunpack.c.l.b16 %v359
      %v529 = vunpack.c.l.b16 %v360
      %v530 = vunpack.c.l.b16 %v361
      %v531 = vunpack.c.l.b16 %v362
      %v532 = vunpack.c.l.b16 %v363
      %v533 = vunpack.c.l.b16 %v364
      %v534 = vunpack.c.l.b16 %v365
      %v535 = vunpack.c.l.b16 %v366
      %v536 = vunpack.c.l.b16 %v367
      %v537 = vunpack.c.l.b16 %v368
      %v538 = vunpack.c.l.b16 %v369
      %v539 = vunpack.c.l.b16 %v370
      %v540 = vunpack.c.l.b16 %v371
      %v541 = vunpack.c.l.b16 %v372
      %v542 = vpack.c.b16 %v527, %v526
      %v543 = vpack.c.b16 %v529, %v528
      %v544 = vpack.c.b16 %v531, %v530
      %v545 = vpack.c.b16 %v533, %v532
      %v546 = vpack.c.b16 %v535, %v534
      %v547 = vpack.c.b16 %v537, %v536
      %v548 = vpack.c.b16 %v539, %v538
      %v549 = vpack.c.b16 %v541, %v540
      %558 = vmatpush.bf16.msra.mxu0 %v549
      %559 = vmatpush.bf16.msra.mxu0 %v548
      %560 = vmatpush.bf16.msra.mxu0 %v547
      %561 = vmatpush.bf16.msra.mxu0 %v546
      %562 = vmatpush.bf16.msra.mxu0 %v545
      %563 = vmatpush.bf16.msra.mxu0 %v544
      %564 = vmatpush.bf16.msra.mxu0 %v543
      %565 = vmatpush.bf16.msra.mxu0 %v542
      %566 = vmatmul.bf16.gmra.mxu0 %v502
      %v567 = vpop.f32.mrf.mxu0
      %v568 = vadd.f32 %v470, %v567
      %v569 = vpop.f32.mrf.mxu0
      %v570 = vadd.f32 %v472, %v569
      %571 = vmatmul.bf16.gmra.mxu0 %v503
      %v572 = vpop.f32.mrf.mxu0
      %v573 = vadd.f32 %v475, %v572
      %v574 = vpop.f32.mrf.mxu0
      %v575 = vadd.f32 %v477, %v574
      %576 = vmatmul.bf16.gmra.mxu0 %v504
      %v577 = vpop.f32.mrf.mxu0
      %v578 = vadd.f32 %v480, %v577
      %v579 = vpop.f32.mrf.mxu0
      %v580 = vadd.f32 %v482, %v579
      %581 = vmatmul.bf16.gmra.mxu0 %v505
      %v582 = vpop.f32.mrf.mxu0
      %v583 = vadd.f32 %v485, %v582
      %v584 = vpop.f32.mrf.mxu0
      %585 = vdwg.mxu0
      %vm586 = vsmask.f32 3328
      %vm587 = vsmask.f32 7440
      %vm588 = vmor %vm586, %vm587
      %v590 = vshrl.u32 %v312, 16
      %v592 = vrot.slane %v590, 4
      %v593 = vshll.u32 %v312, 16
      %v595 = vrot.slane %v593, 5
      %v596 = vor.u32 %v592, %v595
      %v597 = vrot.slane %v596, 4
      %v599 = vshll.u32 %v313, 16
      %v601 = vrot.slane %v599, 5
      %v602 = vsel %vm588, %v597, %v601
      %v604 = vshrl.u32 %v314, 16
      %v606 = vrot.slane %v604, 4
      %v607 = vshll.u32 %v314, 16
      %v609 = vrot.slane %v607, 5
      %v610 = vor.u32 %v606, %v609
      %v611 = vrot.slane %v610, 4
      %v613 = vshll.u32 %v315, 16
      %v615 = vrot.slane %v613, 5
      %v616 = vsel %vm588, %v611, %v615
      %v618 = vshrl.u32 %v316, 16
      %v620 = vrot.slane %v618, 4
      %v621 = vshll.u32 %v316, 16
      %v623 = vrot.slane %v621, 5
      %v624 = vor.u32 %v620, %v623
      %v625 = vrot.slane %v624, 4
      %v627 = vshll.u32 %v317, 16
      %v629 = vrot.slane %v627, 5
      %v630 = vsel %vm588, %v625, %v629
      %v632 = vshrl.u32 %v318, 16
      %v634 = vrot.slane %v632, 4
      %v635 = vshll.u32 %v318, 16
      %v637 = vrot.slane %v635, 5
      %v638 = vor.u32 %v634, %v637
      %v639 = vrot.slane %v638, 4
      %v641 = vshll.u32 %v319, 16
      %v643 = vrot.slane %v641, 5
      %v644 = vsel %vm588, %v639, %v643
      %v646 = vshrl.u32 %v320, 16
      %v648 = vrot.slane %v646, 4
      %v649 = vshll.u32 %v320, 16
      %v651 = vrot.slane %v649, 5
      %v652 = vor.u32 %v648, %v651
      %v653 = vrot.slane %v652, 4
      %v655 = vshll.u32 %v321, 16
      %v657 = vrot.slane %v655, 5
      %v658 = vsel %vm588, %v653, %v657
      %v660 = vshrl.u32 %v322, 16
      %v662 = vrot.slane %v660, 4
      %v663 = vshll.u32 %v322, 16
      %v665 = vrot.slane %v663, 5
      %v666 = vor.u32 %v662, %v665
      %v667 = vrot.slane %v666, 4
      %v669 = vshll.u32 %v323, 16
      %v671 = vrot.slane %v669, 5
      %v672 = vsel %vm588, %v667, %v671
      %v674 = vshrl.u32 %v324, 16
      %v676 = vrot.slane %v674, 4
      %v677 = vshll.u32 %v324, 16
      %v679 = vrot.slane %v677, 5
      %v680 = vor.u32 %v676, %v679
      %v681 = vrot.slane %v680, 4
      %v683 = vshll.u32 %v325, 16
      %v685 = vrot.slane %v683, 5
      %v686 = vsel %vm588, %v681, %v685
      %s687 = scalar_lea.vmem %s4, 128
      %v688 = vld [vmem:[%s687] sm:$0xf]
      %v689 = vld [vmem:[%s687 + $0x4] sm:$0xf]
      %v690 = vld [vmem:[%s687 + $0x8] sm:$0xf]
      %v691 = vld [vmem:[%s687 + $0xc] sm:$0xf]
      %v692 = vld [vmem:[%s687 + $0x10] sm:$0xf]
      %v693 = vld [vmem:[%s687 + $0x14] sm:$0xf]
      %v694 = vld [vmem:[%s687 + $0x18] sm:$0xf]
      %v695 = vld [vmem:[%s687 + $0x1c] sm:$0xf]
      %v696 = vld [vmem:[%s687 + $0x20] sm:$0xf]
      %v697 = vld [vmem:[%s687 + $0x24] sm:$0xf]
      %v698 = vld [vmem:[%s687 + $0x28] sm:$0xf]
      %v699 = vld [vmem:[%s687 + $0x2c] sm:$0xf]
      %v700 = vld [vmem:[%s687 + $0x30] sm:$0xf]
      %v701 = vld [vmem:[%s687 + $0x34] sm:$0xf]
      %v702 = vld [vmem:[%s687 + $0x38] sm:$0xf]
      %v703 = vld [vmem:[%s687 + $0x3c] sm:$0xf]
      %v704 = vunpack.c.l.b16 %v602
      %v705 = vunpack.c.l.b16 %v616
      %v706 = vunpack.c.l.b16 %v630
      %v707 = vunpack.c.l.b16 %v644
      %v708 = vunpack.c.l.b16 %v658
      %v709 = vunpack.c.l.b16 %v672
      %v710 = vunpack.c.l.b16 %v686
      %v711 = vpack.c.b16 %v705, %v704
      %v712 = vpack.c.b16 %v707, %v706
      %v713 = vpack.c.b16 %v709, %v708
      %v714 = vpack.c.b16 %v710, %v710
      %v735 = vunpack.c.l.b16 %v688
      %v736 = vunpack.c.l.b16 %v689
      %v737 = vunpack.c.l.b16 %v690
      %v738 = vunpack.c.l.b16 %v691
      %v739 = vunpack.c.l.b16 %v692
      %v740 = vunpack.c.l.b16 %v693
      %v741 = vunpack.c.l.b16 %v694
      %v742 = vunpack.c.l.b16 %v695
      %v743 = vunpack.c.l.b16 %v696
      %v744 = vunpack.c.l.b16 %v697
      %v745 = vunpack.c.l.b16 %v698
      %v746 = vunpack.c.l.b16 %v699
      %v747 = vunpack.c.l.b16 %v700
      %v748 = vunpack.c.l.b16 %v701
      %v749 = vunpack.c.l.b16 %v702
      %v750 = vunpack.c.l.b16 %v703
      %v751 = vpack.c.b16 %v736, %v735
      %v752 = vpack.c.b16 %v738, %v737
      %v753 = vpack.c.b16 %v740, %v739
      %v754 = vpack.c.b16 %v742, %v741
      %v755 = vpack.c.b16 %v744, %v743
      %v756 = vpack.c.b16 %v746, %v745
      %v757 = vpack.c.b16 %v748, %v747
      %v758 = vpack.c.b16 %v750, %v749
      %767 = vmatpush.bf16.msra.mxu0 %v758
      %768 = vmatpush.bf16.msra.mxu0 %v757
      %769 = vmatpush.bf16.msra.mxu0 %v756
      %770 = vmatpush.bf16.msra.mxu0 %v755
      %771 = vmatpush.bf16.msra.mxu0 %v754
      %772 = vmatpush.bf16.msra.mxu0 %v753
      %773 = vmatpush.bf16.msra.mxu0 %v752
      %774 = vmatpush.bf16.msra.mxu0 %v751
      %775 = vmatmul.bf16.gmra.mxu0 %v711
      %v776 = vpop.f32.mrf.mxu0
      %v777 = vadd.f32 0.0, %v776
      %v778 = vpop.f32.mrf.mxu0
      %v779 = vadd.f32 0.0, %v778
      %780 = vmatmul.bf16.gmra.mxu0 %v712
      %v781 = vpop.f32.mrf.mxu0
      %v782 = vadd.f32 0.0, %v781
      %v783 = vpop.f32.mrf.mxu0
      %v784 = vadd.f32 0.0, %v783
      %785 = vmatmul.bf16.gmra.mxu0 %v713
      %v786 = vpop.f32.mrf.mxu0
      %v787 = vadd.f32 0.0, %v786
      %v788 = vpop.f32.mrf.mxu0
      %v789 = vadd.f32 0.0, %v788
      %790 = vmatmul.bf16.gmra.mxu0 %v714
      %v791 = vpop.f32.mrf.mxu0
      %v792 = vadd.f32 0.0, %v791
      %v793 = vpop.f32.mrf.mxu0
      %794 = vdwg.mxu0
      %v795 = vadd.f32 %v568, %v777
      %v796 = vadd.f32 %v570, %v779
      %v797 = vadd.f32 %v573, %v782
      %v798 = vadd.f32 %v575, %v784
      %v799 = vadd.f32 %v578, %v787
      %v800 = vadd.f32 %v580, %v789
      %v801 = vadd.f32 %v583, %v792
      %s802 = scalar_lea.vmem %s4, 192
      %v803 = vld [vmem:[%s802] sm:$0xf]
      %v804 = vld [vmem:[%s802 + $0x4] sm:$0xf]
      %v805 = vld [vmem:[%s802 + $0x8] sm:$0xf]
      %v806 = vld [vmem:[%s802 + $0xc] sm:$0xf]
      %v807 = vld [vmem:[%s802 + $0x10] sm:$0xf]
      %v808 = vld [vmem:[%s802 + $0x14] sm:$0xf]
      %v809 = vld [vmem:[%s802 + $0x18] sm:$0xf]
      %v810 = vld [vmem:[%s802 + $0x1c] sm:$0xf]
      %v811 = vld [vmem:[%s802 + $0x20] sm:$0xf]
      %v812 = vld [vmem:[%s802 + $0x24] sm:$0xf]
      %v813 = vld [vmem:[%s802 + $0x28] sm:$0xf]
      %v814 = vld [vmem:[%s802 + $0x2c] sm:$0xf]
      %v815 = vld [vmem:[%s802 + $0x30] sm:$0xf]
      %v816 = vld [vmem:[%s802 + $0x34] sm:$0xf]
      %v817 = vld [vmem:[%s802 + $0x38] sm:$0xf]
      %v818 = vld [vmem:[%s802 + $0x3c] sm:$0xf]
      %v826 = vunpack.c.l.b16 %v336
      %v827 = vunpack.c.l.b16 %v338
      %v828 = vunpack.c.l.b16 %v340
      %v829 = vunpack.c.l.b16 %v342
      %v830 = vunpack.c.l.b16 %v344
      %v831 = vunpack.c.l.b16 %v346
      %v832 = vunpack.c.l.b16 %v348
      %v833 = vpack.c.b16 %v827, %v826
      %v834 = vpack.c.b16 %v829, %v828
      %v835 = vpack.c.b16 %v831, %v830
      %v836 = vpack.c.b16 %v832, %v832
      %v857 = vunpack.c.l.b16 %v803
      %v858 = vunpack.c.l.b16 %v804
      %v859 = vunpack.c.l.b16 %v805
      %v860 = vunpack.c.l.b16 %v806
      %v861 = vunpack.c.l.b16 %v807
      %v862 = vunpack.c.l.b16 %v808
      %v863 = vunpack.c.l.b16 %v809
      %v864 = vunpack.c.l.b16 %v810
      %v865 = vunpack.c.l.b16 %v811
      %v866 = vunpack.c.l.b16 %v812
      %v867 = vunpack.c.l.b16 %v813
      %v868 = vunpack.c.l.b16 %v814
      %v869 = vunpack.c.l.b16 %v815
      %v870 = vunpack.c.l.b16 %v816
      %v871 = vunpack.c.l.b16 %v817
      %v872 = vunpack.c.l.b16 %v818
      %v873 = vpack.c.b16 %v858, %v857
      %v874 = vpack.c.b16 %v860, %v859
      %v875 = vpack.c.b16 %v862, %v861
      %v876 = vpack.c.b16 %v864, %v863
      %v877 = vpack.c.b16 %v866, %v865
      %v878 = vpack.c.b16 %v868, %v867
      %v879 = vpack.c.b16 %v870, %v869
      %v880 = vpack.c.b16 %v872, %v871
      %889 = vmatpush.bf16.msra.mxu0 %v880
      %890 = vmatpush.bf16.msra.mxu0 %v879
      %891 = vmatpush.bf16.msra.mxu0 %v878
      %892 = vmatpush.bf16.msra.mxu0 %v877
      %893 = vmatpush.bf16.msra.mxu0 %v876
      %894 = vmatpush.bf16.msra.mxu0 %v875
      %895 = vmatpush.bf16.msra.mxu0 %v874
      %896 = vmatpush.bf16.msra.mxu0 %v873
      %897 = vmatmul.bf16.gmra.mxu0 %v833
      %v898 = vpop.f32.mrf.mxu0
      %v899 = vadd.f32 0.0, %v898
      %v900 = vpop.f32.mrf.mxu0
      %v901 = vadd.f32 0.0, %v900
      %902 = vmatmul.bf16.gmra.mxu0 %v834
      %v903 = vpop.f32.mrf.mxu0
      %v904 = vadd.f32 0.0, %v903
      %v905 = vpop.f32.mrf.mxu0
      %v906 = vadd.f32 0.0, %v905
      %907 = vmatmul.bf16.gmra.mxu0 %v835
      %v908 = vpop.f32.mrf.mxu0
      %v909 = vadd.f32 0.0, %v908
      %v910 = vpop.f32.mrf.mxu0
      %v911 = vadd.f32 0.0, %v910
      %912 = vmatmul.bf16.gmra.mxu0 %v836
      %v913 = vpop.f32.mrf.mxu0
      %v914 = vadd.f32 0.0, %v913
      %v915 = vpop.f32.mrf.mxu0
      %916 = vdwg.mxu0
      %v917 = vadd.f32 %v795, %v899
      %v918 = vadd.f32 %v796, %v901
      %v919 = vadd.f32 %v797, %v904
      %v920 = vadd.f32 %v798, %v906
      %v921 = vadd.f32 %v799, %v909
      %v922 = vadd.f32 %v800, %v911
      %v923 = vadd.f32 %v801, %v914
      %s924 = scalar_lea.vmem %s4, 256
      %v925 = vld [vmem:[%s924] sm:$0xf]
      %v926 = vld [vmem:[%s924 + $0x4] sm:$0xf]
      %v927 = vld [vmem:[%s924 + $0x8] sm:$0xf]
      %v928 = vld [vmem:[%s924 + $0xc] sm:$0xf]
      %v929 = vld [vmem:[%s924 + $0x10] sm:$0xf]
      %v930 = vld [vmem:[%s924 + $0x14] sm:$0xf]
      %v931 = vld [vmem:[%s924 + $0x18] sm:$0xf]
      %v932 = vld [vmem:[%s924 + $0x1c] sm:$0xf]
      %v933 = vld [vmem:[%s924 + $0x20] sm:$0xf]
      %v934 = vld [vmem:[%s924 + $0x24] sm:$0xf]
      %v935 = vld [vmem:[%s924 + $0x28] sm:$0xf]
      %v936 = vld [vmem:[%s924 + $0x2c] sm:$0xf]
      %v937 = vld [vmem:[%s924 + $0x30] sm:$0xf]
      %v938 = vld [vmem:[%s924 + $0x34] sm:$0xf]
      %v939 = vld [vmem:[%s924 + $0x38] sm:$0xf]
      %v940 = vld [vmem:[%s924 + $0x3c] sm:$0xf]
      %v948 = vunpack.c.l.b16 %v350
      %v949 = vunpack.c.l.b16 %v351
      %v950 = vunpack.c.l.b16 %v352
      %v951 = vunpack.c.l.b16 %v353
      %v952 = vunpack.c.l.b16 %v354
      %v953 = vunpack.c.l.b16 %v355
      %v954 = vunpack.c.l.b16 %v356
      %v955 = vpack.c.b16 %v949, %v948
      %v956 = vpack.c.b16 %v951, %v950
      %v957 = vpack.c.b16 %v953, %v952
      %v958 = vpack.c.b16 %v954, %v954
      %v979 = vunpack.c.l.b16 %v925
      %v980 = vunpack.c.l.b16 %v926
      %v981 = vunpack.c.l.b16 %v927
      %v982 = vunpack.c.l.b16 %v928
      %v983 = vunpack.c.l.b16 %v929
      %v984 = vunpack.c.l.b16 %v930
      %v985 = vunpack.c.l.b16 %v931
      %v986 = vunpack.c.l.b16 %v932
      %v987 = vunpack.c.l.b16 %v933
      %v988 = vunpack.c.l.b16 %v934
      %v989 = vunpack.c.l.b16 %v935
      %v990 = vunpack.c.l.b16 %v936
      %v991 = vunpack.c.l.b16 %v937
      %v992 = vunpack.c.l.b16 %v938
      %v993 = vunpack.c.l.b16 %v939
      %v994 = vunpack.c.l.b16 %v940
      %v995 = vpack.c.b16 %v980, %v979
      %v996 = vpack.c.b16 %v982, %v981
      %v997 = vpack.c.b16 %v984, %v983
      %v998 = vpack.c.b16 %v986, %v985
      %v999 = vpack.c.b16 %v988, %v987
      %v1000 = vpack.c.b16 %v990, %v989
      %v1001 = vpack.c.b16 %v992, %v991
      %v1002 = vpack.c.b16 %v994, %v993
      %1011 = vmatpush.bf16.msra.mxu0 %v1002
      %1012 = vmatpush.bf16.msra.mxu0 %v1001
      %1013 = vmatpush.bf16.msra.mxu0 %v1000
      %1014 = vmatpush.bf16.msra.mxu0 %v999
      %1015 = vmatpush.bf16.msra.mxu0 %v998
      %1016 = vmatpush.bf16.msra.mxu0 %v997
      %1017 = vmatpush.bf16.msra.mxu0 %v996
      %1018 = vmatpush.bf16.msra.mxu0 %v995
      %1019 = vmatmul.bf16.gmra.mxu0 %v955
      %v1020 = vpop.f32.mrf.mxu0
      %v1021 = vadd.f32 0.0, %v1020
      %v1022 = vpop.f32.mrf.mxu0
      %v1023 = vadd.f32 0.0, %v1022
      %1024 = vmatmul.bf16.gmra.mxu0 %v956
      %v1025 = vpop.f32.mrf.mxu0
      %v1026 = vadd.f32 0.0, %v1025
      %v1027 = vpop.f32.mrf.mxu0
      %v1028 = vadd.f32 0.0, %v1027
      %1029 = vmatmul.bf16.gmra.mxu0 %v957
      %v1030 = vpop.f32.mrf.mxu0
      %v1031 = vadd.f32 0.0, %v1030
      %v1032 = vpop.f32.mrf.mxu0
      %v1033 = vadd.f32 0.0, %v1032
      %1034 = vmatmul.bf16.gmra.mxu0 %v958
      %v1035 = vpop.f32.mrf.mxu0
      %v1036 = vadd.f32 0.0, %v1035
      %v1037 = vpop.f32.mrf.mxu0
      %1038 = vdwg.mxu0
      %v1039 = vadd.f32 %v917, %v1021
      %v1040 = vadd.f32 %v918, %v1023
      %v1041 = vadd.f32 %v919, %v1026
      %v1042 = vadd.f32 %v920, %v1028
      %v1043 = vadd.f32 %v921, %v1031
      %v1044 = vadd.f32 %v922, %v1033
      %v1045 = vadd.f32 %v923, %v1036
      %v1047 = vshrl.u32 %v336, 16
      %v1049 = vrot.slane %v1047, 4
      %v1050 = vshll.u32 %v336, 16
      %v1052 = vrot.slane %v1050, 5
      %v1053 = vor.u32 %v1049, %v1052
      %v1054 = vrot.slane %v1053, 4
      %v1056 = vshll.u32 %v337, 16
      %v1058 = vrot.slane %v1056, 5
      %v1059 = vsel %vm588, %v1054, %v1058
      %v1061 = vshrl.u32 %v338, 16
      %v1063 = vrot.slane %v1061, 4
      %v1064 = vshll.u32 %v338, 16
      %v1066 = vrot.slane %v1064, 5
      %v1067 = vor.u32 %v1063, %v1066
      %v1068 = vrot.slane %v1067, 4
      %v1070 = vshll.u32 %v339, 16
      %v1072 = vrot.slane %v1070, 5
      %v1073 = vsel %vm588, %v1068, %v1072
      %v1075 = vshrl.u32 %v340, 16
      %v1077 = vrot.slane %v1075, 4
      %v1078 = vshll.u32 %v340, 16
      %v1080 = vrot.slane %v1078, 5
      %v1081 = vor.u32 %v1077, %v1080
      %v1082 = vrot.slane %v1081, 4
      %v1084 = vshll.u32 %v341, 16
      %v1086 = vrot.slane %v1084, 5
      %v1087 = vsel %vm588, %v1082, %v1086
      %v1089 = vshrl.u32 %v342, 16
      %v1091 = vrot.slane %v1089, 4
      %v1092 = vshll.u32 %v342, 16
      %v1094 = vrot.slane %v1092, 5
      %v1095 = vor.u32 %v1091, %v1094
      %v1096 = vrot.slane %v1095, 4
      %v1098 = vshll.u32 %v343, 16
      %v1100 = vrot.slane %v1098, 5
      %v1101 = vsel %vm588, %v1096, %v1100
      %v1103 = vshrl.u32 %v344, 16
      %v1105 = vrot.slane %v1103, 4
      %v1106 = vshll.u32 %v344, 16
      %v1108 = vrot.slane %v1106, 5
      %v1109 = vor.u32 %v1105, %v1108
      %v1110 = vrot.slane %v1109, 4
      %v1112 = vshll.u32 %v345, 16
      %v1114 = vrot.slane %v1112, 5
      %v1115 = vsel %vm588, %v1110, %v1114
      %v1117 = vshrl.u32 %v346, 16
      %v1119 = vrot.slane %v1117, 4
      %v1120 = vshll.u32 %v346, 16
      %v1122 = vrot.slane %v1120, 5
      %v1123 = vor.u32 %v1119, %v1122
      %v1124 = vrot.slane %v1123, 4
      %v1126 = vshll.u32 %v347, 16
      %v1128 = vrot.slane %v1126, 5
      %v1129 = vsel %vm588, %v1124, %v1128
      %v1131 = vshrl.u32 %v348, 16
      %v1133 = vrot.slane %v1131, 4
      %v1134 = vshll.u32 %v348, 16
      %v1136 = vrot.slane %v1134, 5
      %v1137 = vor.u32 %v1133, %v1136
      %v1138 = vrot.slane %v1137, 4
      %v1140 = vshll.u32 %v349, 16
      %v1142 = vrot.slane %v1140, 5
      %v1143 = vsel %vm588, %v1138, %v1142
      %s1144 = scalar_lea.vmem %s4, 320
      %v1145 = vld [vmem:[%s1144] sm:$0xf]
      %v1146 = vld [vmem:[%s1144 + $0x4] sm:$0xf]
      %v1147 = vld [vmem:[%s1144 + $0x8] sm:$0xf]
      %v1148 = vld [vmem:[%s1144 + $0xc] sm:$0xf]
      %v1149 = vld [vmem:[%s1144 + $0x10] sm:$0xf]
      %v1150 = vld [vmem:[%s1144 + $0x14] sm:$0xf]
      %v1151 = vld [vmem:[%s1144 + $0x18] sm:$0xf]
      %v1152 = vld [vmem:[%s1144 + $0x1c] sm:$0xf]
      %v1153 = vld [vmem:[%s1144 + $0x20] sm:$0xf]
      %v1154 = vld [vmem:[%s1144 + $0x24] sm:$0xf]
      %v1155 = vld [vmem:[%s1144 + $0x28] sm:$0xf]
      %v1156 = vld [vmem:[%s1144 + $0x2c] sm:$0xf]
      %v1157 = vld [vmem:[%s1144 + $0x30] sm:$0xf]
      %v1158 = vld [vmem:[%s1144 + $0x34] sm:$0xf]
      %v1159 = vld [vmem:[%s1144 + $0x38] sm:$0xf]
      %v1160 = vld [vmem:[%s1144 + $0x3c] sm:$0xf]
      %v1161 = vunpack.c.l.b16 %v1059
      %v1162 = vunpack.c.l.b16 %v1073
      %v1163 = vunpack.c.l.b16 %v1087
      %v1164 = vunpack.c.l.b16 %v1101
      %v1165 = vunpack.c.l.b16 %v1115
      %v1166 = vunpack.c.l.b16 %v1129
      %v1167 = vunpack.c.l.b16 %v1143
      %v1168 = vpack.c.b16 %v1162, %v1161
      %v1169 = vpack.c.b16 %v1164, %v1163
      %v1170 = vpack.c.b16 %v1166, %v1165
      %v1171 = vpack.c.b16 %v1167, %v1167
      %v1192 = vunpack.c.l.b16 %v1145
      %v1193 = vunpack.c.l.b16 %v1146
      %v1194 = vunpack.c.l.b16 %v1147
      %v1195 = vunpack.c.l.b16 %v1148
      %v1196 = vunpack.c.l.b16 %v1149
      %v1197 = vunpack.c.l.b16 %v1150
      %v1198 = vunpack.c.l.b16 %v1151
      %v1199 = vunpack.c.l.b16 %v1152
      %v1200 = vunpack.c.l.b16 %v1153
      %v1201 = vunpack.c.l.b16 %v1154
      %v1202 = vunpack.c.l.b16 %v1155
      %v1203 = vunpack.c.l.b16 %v1156
      %v1204 = vunpack.c.l.b16 %v1157
      %v1205 = vunpack.c.l.b16 %v1158
      %v1206 = vunpack.c.l.b16 %v1159
      %v1207 = vunpack.c.l.b16 %v1160
      %v1208 = vpack.c.b16 %v1193, %v1192
      %v1209 = vpack.c.b16 %v1195, %v1194
      %v1210 = vpack.c.b16 %v1197, %v1196
      %v1211 = vpack.c.b16 %v1199, %v1198
      %v1212 = vpack.c.b16 %v1201, %v1200
      %v1213 = vpack.c.b16 %v1203, %v1202
      %v1214 = vpack.c.b16 %v1205, %v1204
      %v1215 = vpack.c.b16 %v1207, %v1206
      %1224 = vmatpush.bf16.msra.mxu0 %v1215
      %1225 = vmatpush.bf16.msra.mxu0 %v1214
      %1226 = vmatpush.bf16.msra.mxu0 %v1213
      %1227 = vmatpush.bf16.msra.mxu0 %v1212
      %1228 = vmatpush.bf16.msra.mxu0 %v1211
      %1229 = vmatpush.bf16.msra.mxu0 %v1210
      %1230 = vmatpush.bf16.msra.mxu0 %v1209
      %1231 = vmatpush.bf16.msra.mxu0 %v1208
      %1232 = vmatmul.bf16.gmra.mxu0 %v1168
      %v1233 = vpop.f32.mrf.mxu0
      %v1234 = vadd.f32 0.0, %v1233
      %v1235 = vpop.f32.mrf.mxu0
      %v1236 = vadd.f32 0.0, %v1235
      %1237 = vmatmul.bf16.gmra.mxu0 %v1169
      %v1238 = vpop.f32.mrf.mxu0
      %v1239 = vadd.f32 0.0, %v1238
      %v1240 = vpop.f32.mrf.mxu0
      %v1241 = vadd.f32 0.0, %v1240
      %1242 = vmatmul.bf16.gmra.mxu0 %v1170
      %v1243 = vpop.f32.mrf.mxu0
      %v1244 = vadd.f32 0.0, %v1243
      %v1245 = vpop.f32.mrf.mxu0
      %v1246 = vadd.f32 0.0, %v1245
      %1247 = vmatmul.bf16.gmra.mxu0 %v1171
      %v1248 = vpop.f32.mrf.mxu0
      %v1249 = vadd.f32 0.0, %v1248
      %v1250 = vpop.f32.mrf.mxu0
      %1251 = vdwg.mxu0
      %v1252 = vadd.f32 %v1039, %v1234
      %v1253 = vadd.f32 %v1040, %v1236
      %v1254 = vadd.f32 %v1041, %v1239
      %v1255 = vadd.f32 %v1042, %v1241
      %v1256 = vadd.f32 %v1043, %v1244
      %v1257 = vadd.f32 %v1044, %v1246
      %v1258 = vadd.f32 %v1045, %v1249
      %s1259 = scalar_lea.vmem %s4, 384
      %v1260 = vld [vmem:[%s1259] sm:$0xf]
      %v1261 = vld [vmem:[%s1259 + $0x4] sm:$0xf]
      %v1262 = vld [vmem:[%s1259 + $0x8] sm:$0xf]
      %v1263 = vld [vmem:[%s1259 + $0xc] sm:$0xf]
      %v1264 = vld [vmem:[%s1259 + $0x10] sm:$0xf]
      %v1265 = vld [vmem:[%s1259 + $0x14] sm:$0xf]
      %v1266 = vld [vmem:[%s1259 + $0x18] sm:$0xf]
      %v1267 = vld [vmem:[%s1259 + $0x1c] sm:$0xf]
      %v1268 = vld [vmem:[%s1259 + $0x20] sm:$0xf]
      %v1269 = vld [vmem:[%s1259 + $0x24] sm:$0xf]
      %v1270 = vld [vmem:[%s1259 + $0x28] sm:$0xf]
      %v1271 = vld [vmem:[%s1259 + $0x2c] sm:$0xf]
      %v1272 = vld [vmem:[%s1259 + $0x30] sm:$0xf]
      %v1273 = vld [vmem:[%s1259 + $0x34] sm:$0xf]
      %v1274 = vld [vmem:[%s1259 + $0x38] sm:$0xf]
      %v1275 = vld [vmem:[%s1259 + $0x3c] sm:$0xf]
      %v1277 = vunpack.c.l.b16 %v326
      %v1278 = vpack.c.b16 %v497, %v496
      %v1279 = vpack.c.b16 %v499, %v498
      %v1280 = vpack.c.b16 %v501, %v500
      %v1281 = vpack.c.b16 %v1277, %v1277
      %v1302 = vunpack.c.l.b16 %v1260
      %v1303 = vunpack.c.l.b16 %v1261
      %v1304 = vunpack.c.l.b16 %v1262
      %v1305 = vunpack.c.l.b16 %v1263
      %v1306 = vunpack.c.l.b16 %v1264
      %v1307 = vunpack.c.l.b16 %v1265
      %v1308 = vunpack.c.l.b16 %v1266
      %v1309 = vunpack.c.l.b16 %v1267
      %v1310 = vunpack.c.l.b16 %v1268
      %v1311 = vunpack.c.l.b16 %v1269
      %v1312 = vunpack.c.l.b16 %v1270
      %v1313 = vunpack.c.l.b16 %v1271
      %v1314 = vunpack.c.l.b16 %v1272
      %v1315 = vunpack.c.l.b16 %v1273
      %v1316 = vunpack.c.l.b16 %v1274
      %v1317 = vunpack.c.l.b16 %v1275
      %v1318 = vpack.c.b16 %v1303, %v1302
      %v1319 = vpack.c.b16 %v1305, %v1304
      %v1320 = vpack.c.b16 %v1307, %v1306
      %v1321 = vpack.c.b16 %v1309, %v1308
      %v1322 = vpack.c.b16 %v1311, %v1310
      %v1323 = vpack.c.b16 %v1313, %v1312
      %v1324 = vpack.c.b16 %v1315, %v1314
      %v1325 = vpack.c.b16 %v1317, %v1316
      %1334 = vmatpush.bf16.msra.mxu0 %v1325
      %1335 = vmatpush.bf16.msra.mxu0 %v1324
      %1336 = vmatpush.bf16.msra.mxu0 %v1323
      %1337 = vmatpush.bf16.msra.mxu0 %v1322
      %1338 = vmatpush.bf16.msra.mxu0 %v1321
      %1339 = vmatpush.bf16.msra.mxu0 %v1320
      %1340 = vmatpush.bf16.msra.mxu0 %v1319
      %1341 = vmatpush.bf16.msra.mxu0 %v1318
      %1342 = vmatmul.bf16.gmra.mxu0 %v1278
      %v1343 = vpop.f32.mrf.mxu0
      %v1344 = vadd.f32 0.0, %v1343
      %v1345 = vpop.f32.mrf.mxu0
      %v1346 = vadd.f32 0.0, %v1345
      %1347 = vmatmul.bf16.gmra.mxu0 %v1279
      %v1348 = vpop.f32.mrf.mxu0
      %v1349 = vadd.f32 0.0, %v1348
      %v1350 = vpop.f32.mrf.mxu0
      %v1351 = vadd.f32 0.0, %v1350
      %1352 = vmatmul.bf16.gmra.mxu0 %v1280
      %v1353 = vpop.f32.mrf.mxu0
      %v1354 = vadd.f32 0.0, %v1353
      %v1355 = vpop.f32.mrf.mxu0
      %v1356 = vadd.f32 0.0, %v1355
      %1357 = vmatmul.bf16.gmra.mxu0 %v1281
      %v1358 = vpop.f32.mrf.mxu0
      %v1359 = vadd.f32 0.0, %v1358
      %v1360 = vpop.f32.mrf.mxu0
      %1361 = vdwg.mxu0
      %v1362 = vadd.f32 %v1252, %v1344
      %v1363 = vadd.f32 %v1253, %v1346
      %v1364 = vadd.f32 %v1254, %v1349
      %v1365 = vadd.f32 %v1255, %v1351
      %v1366 = vadd.f32 %v1256, %v1354
      %v1367 = vadd.f32 %v1257, %v1356
      %v1368 = vadd.f32 %v1258, %v1359
      %s1369 = scalar_lea.vmem %s4, 448
      %v1370 = vld [vmem:[%s1369] sm:$0xf]
      %v1371 = vld [vmem:[%s1369 + $0x4] sm:$0xf]
      %v1372 = vld [vmem:[%s1369 + $0x8] sm:$0xf]
      %v1373 = vld [vmem:[%s1369 + $0xc] sm:$0xf]
      %v1374 = vld [vmem:[%s1369 + $0x10] sm:$0xf]
      %v1375 = vld [vmem:[%s1369 + $0x14] sm:$0xf]
      %v1376 = vld [vmem:[%s1369 + $0x18] sm:$0xf]
      %v1377 = vld [vmem:[%s1369 + $0x1c] sm:$0xf]
      %v1378 = vld [vmem:[%s1369 + $0x20] sm:$0xf]
      %v1379 = vld [vmem:[%s1369 + $0x24] sm:$0xf]
      %v1380 = vld [vmem:[%s1369 + $0x28] sm:$0xf]
      %v1381 = vld [vmem:[%s1369 + $0x2c] sm:$0xf]
      %v1382 = vld [vmem:[%s1369 + $0x30] sm:$0xf]
      %v1383 = vld [vmem:[%s1369 + $0x34] sm:$0xf]
      %v1384 = vld [vmem:[%s1369 + $0x38] sm:$0xf]
      %v1385 = vld [vmem:[%s1369 + $0x3c] sm:$0xf]
      %v1387 = vunpack.c.l.b16 %v335
      %v1388 = vpack.c.b16 %v399, %v398
      %v1389 = vpack.c.b16 %v401, %v400
      %v1390 = vpack.c.b16 %v403, %v402
      %v1391 = vpack.c.b16 %v1387, %v1387
      %v1412 = vunpack.c.l.b16 %v1370
      %v1413 = vunpack.c.l.b16 %v1371
      %v1414 = vunpack.c.l.b16 %v1372
      %v1415 = vunpack.c.l.b16 %v1373
      %v1416 = vunpack.c.l.b16 %v1374
      %v1417 = vunpack.c.l.b16 %v1375
      %v1418 = vunpack.c.l.b16 %v1376
      %v1419 = vunpack.c.l.b16 %v1377
      %v1420 = vunpack.c.l.b16 %v1378
      %v1421 = vunpack.c.l.b16 %v1379
      %v1422 = vunpack.c.l.b16 %v1380
      %v1423 = vunpack.c.l.b16 %v1381
      %v1424 = vunpack.c.l.b16 %v1382
      %v1425 = vunpack.c.l.b16 %v1383
      %v1426 = vunpack.c.l.b16 %v1384
      %v1427 = vunpack.c.l.b16 %v1385
      %v1428 = vpack.c.b16 %v1413, %v1412
      %v1429 = vpack.c.b16 %v1415, %v1414
      %v1430 = vpack.c.b16 %v1417, %v1416
      %v1431 = vpack.c.b16 %v1419, %v1418
      %v1432 = vpack.c.b16 %v1421, %v1420
      %v1433 = vpack.c.b16 %v1423, %v1422
      %v1434 = vpack.c.b16 %v1425, %v1424
      %v1435 = vpack.c.b16 %v1427, %v1426
      %1444 = vmatpush.bf16.msra.mxu0 %v1435
      %1445 = vmatpush.bf16.msra.mxu0 %v1434
      %1446 = vmatpush.bf16.msra.mxu0 %v1433
      %1447 = vmatpush.bf16.msra.mxu0 %v1432
      %1448 = vmatpush.bf16.msra.mxu0 %v1431
      %1449 = vmatpush.bf16.msra.mxu0 %v1430
      %1450 = vmatpush.bf16.msra.mxu0 %v1429
      %1451 = vmatpush.bf16.msra.mxu0 %v1428
      %1452 = vmatmul.bf16.gmra.mxu0 %v1388
      %v1453 = vpop.f32.mrf.mxu0
      %v1454 = vadd.f32 0.0, %v1453
      %v1455 = vpop.f32.mrf.mxu0
      %v1456 = vadd.f32 0.0, %v1455
      %1457 = vmatmul.bf16.gmra.mxu0 %v1389
      %v1458 = vpop.f32.mrf.mxu0
      %v1459 = vadd.f32 0.0, %v1458
      %v1460 = vpop.f32.mrf.mxu0
      %v1461 = vadd.f32 0.0, %v1460
      %1462 = vmatmul.bf16.gmra.mxu0 %v1390
      %v1463 = vpop.f32.mrf.mxu0
      %v1464 = vadd.f32 0.0, %v1463
      %v1465 = vpop.f32.mrf.mxu0
      %v1466 = vadd.f32 0.0, %v1465
      %1467 = vmatmul.bf16.gmra.mxu0 %v1391
      %v1468 = vpop.f32.mrf.mxu0
      %v1469 = vadd.f32 0.0, %v1468
      %v1470 = vpop.f32.mrf.mxu0
      %1471 = vdwg.mxu0
      %v1472 = vadd.f32 %v1362, %v1454
      %v1473 = vadd.f32 %v1363, %v1456
      %v1474 = vadd.f32 %v1364, %v1459
      %v1475 = vadd.f32 %v1365, %v1461
      %v1476 = vadd.f32 %v1366, %v1464
      %v1477 = vadd.f32 %v1367, %v1466
      %v1478 = vadd.f32 %v1368, %v1469
      %v1480 = vshrl.u32 %v326, 16
      %v1482 = vrot.slane %v1480, 4
      %v1483 = vshll.u32 %v326, 16
      %v1485 = vrot.slane %v1483, 5
      %v1486 = vor.u32 %v1482, %v1485
      %v1487 = vrot.slane %v1486, 4
      %v1489 = vshll.u32 %v327, 16
      %v1491 = vrot.slane %v1489, 5
      %v1492 = vsel %vm588, %v1487, %v1491
      %s1493 = scalar_lea.vmem %s4, 512
      %v1494 = vld [vmem:[%s1493] sm:$0xf]
      %v1495 = vld [vmem:[%s1493 + $0x4] sm:$0xf]
      %v1496 = vld [vmem:[%s1493 + $0x8] sm:$0xf]
      %v1497 = vld [vmem:[%s1493 + $0xc] sm:$0xf]
      %v1498 = vld [vmem:[%s1493 + $0x10] sm:$0xf]
      %v1499 = vld [vmem:[%s1493 + $0x14] sm:$0xf]
      %v1500 = vld [vmem:[%s1493 + $0x18] sm:$0xf]
      %v1501 = vld [vmem:[%s1493 + $0x1c] sm:$0xf]
      %v1502 = vld [vmem:[%s1493 + $0x20] sm:$0xf]
      %v1503 = vld [vmem:[%s1493 + $0x24] sm:$0xf]
      %v1504 = vld [vmem:[%s1493 + $0x28] sm:$0xf]
      %v1505 = vld [vmem:[%s1493 + $0x2c] sm:$0xf]
      %v1506 = vld [vmem:[%s1493 + $0x30] sm:$0xf]
      %v1507 = vld [vmem:[%s1493 + $0x34] sm:$0xf]
      %v1508 = vld [vmem:[%s1493 + $0x38] sm:$0xf]
      %v1509 = vld [vmem:[%s1493 + $0x3c] sm:$0xf]
      %v1510 = vunpack.c.l.b16 %v1492
      %v1511 = vpack.c.b16 %v706, %v705
      %v1512 = vpack.c.b16 %v708, %v707
      %v1513 = vpack.c.b16 %v710, %v709
      %v1514 = vpack.c.b16 %v1510, %v1510
      %v1535 = vunpack.c.l.b16 %v1494
      %v1536 = vunpack.c.l.b16 %v1495
      %v1537 = vunpack.c.l.b16 %v1496
      %v1538 = vunpack.c.l.b16 %v1497
      %v1539 = vunpack.c.l.b16 %v1498
      %v1540 = vunpack.c.l.b16 %v1499
      %v1541 = vunpack.c.l.b16 %v1500
      %v1542 = vunpack.c.l.b16 %v1501
      %v1543 = vunpack.c.l.b16 %v1502
      %v1544 = vunpack.c.l.b16 %v1503
      %v1545 = vunpack.c.l.b16 %v1504
      %v1546 = vunpack.c.l.b16 %v1505
      %v1547 = vunpack.c.l.b16 %v1506
      %v1548 = vunpack.c.l.b16 %v1507
      %v1549 = vunpack.c.l.b16 %v1508
      %v1550 = vunpack.c.l.b16 %v1509
      %v1551 = vpack.c.b16 %v1536, %v1535
      %v1552 = vpack.c.b16 %v1538, %v1537
      %v1553 = vpack.c.b16 %v1540, %v1539
      %v1554 = vpack.c.b16 %v1542, %v1541
      %v1555 = vpack.c.b16 %v1544, %v1543
      %v1556 = vpack.c.b16 %v1546, %v1545
      %v1557 = vpack.c.b16 %v1548, %v1547
      %v1558 = vpack.c.b16 %v1550, %v1549
      %1567 = vmatpush.bf16.msra.mxu0 %v1558
      %1568 = vmatpush.bf16.msra.mxu0 %v1557
      %1569 = vmatpush.bf16.msra.mxu0 %v1556
      %1570 = vmatpush.bf16.msra.mxu0 %v1555
      %1571 = vmatpush.bf16.msra.mxu0 %v1554
      %1572 = vmatpush.bf16.msra.mxu0 %v1553
      %1573 = vmatpush.bf16.msra.mxu0 %v1552
      %1574 = vmatpush.bf16.msra.mxu0 %v1551
      %1575 = vmatmul.bf16.gmra.mxu0 %v1511
      %v1576 = vpop.f32.mrf.mxu0
      %v1577 = vadd.f32 0.0, %v1576
      %v1578 = vpop.f32.mrf.mxu0
      %v1579 = vadd.f32 0.0, %v1578
      %1580 = vmatmul.bf16.gmra.mxu0 %v1512
      %v1581 = vpop.f32.mrf.mxu0
      %v1582 = vadd.f32 0.0, %v1581
      %v1583 = vpop.f32.mrf.mxu0
      %v1584 = vadd.f32 0.0, %v1583
      %1585 = vmatmul.bf16.gmra.mxu0 %v1513
      %v1586 = vpop.f32.mrf.mxu0
      %v1587 = vadd.f32 0.0, %v1586
      %v1588 = vpop.f32.mrf.mxu0
      %v1589 = vadd.f32 0.0, %v1588
      %1590 = vmatmul.bf16.gmra.mxu0 %v1514
      %v1591 = vpop.f32.mrf.mxu0
      %v1592 = vadd.f32 0.0, %v1591
      %v1593 = vpop.f32.mrf.mxu0
      %1594 = vdwg.mxu0
      %v1595 = vadd.f32 %v1472, %v1577
      %v1596 = vadd.f32 %v1473, %v1579
      %v1597 = vadd.f32 %v1474, %v1582
      %v1598 = vadd.f32 %v1475, %v1584
      %v1599 = vadd.f32 %v1476, %v1587
      %v1600 = vadd.f32 %v1477, %v1589
      %v1601 = vadd.f32 %v1478, %v1592
      %v1602 = vld [vmem:[%s5] sm:$0x1]
      %v1604 = vperm.slane %v1602, 0
      %v1606 = vadd.f32 %v1595, %v1604
      %v1607 = vadd.f32 %v1596, %v1604
      %v1608 = vadd.f32 %v1597, %v1604
      %v1609 = vadd.f32 %v1598, %v1604
      %v1610 = vadd.f32 %v1599, %v1604
      %v1611 = vadd.f32 %v1600, %v1604
      %v1612 = vadd.f32 %v1601, %v1604
      %1613 = vst [vmem:[%s311] sm:$0xff] %v1606
      %1614 = vst [vmem:[%s311 + $0x8] sm:$0xff] %v1607
      %1615 = vst [vmem:[%s311 + $0x10] sm:$0xff] %v1608
      %1616 = vst [vmem:[%s311 + $0x18] sm:$0xff] %v1609
      %1617 = vst [vmem:[%s311 + $0x20] sm:$0xff] %v1610
      %1618 = vst [vmem:[%s311 + $0x28] sm:$0xff] %v1611
      %1619 = vst [vmem:[%s311 + $0x30] sm:$0xff] %v1612
      %p1620 = scmp.lt.s32.totalorder %s17, 1
      %s1621 = scalar_select %p1620, %s17, 1
      %s1622 = smul.addr %s1621, 7
      %s1623 = smul.addr %s1622, 8
      %s1624 = scalar_lea.vmem %s6, %s1623
      // Predicated region
      $region45: #{inception_b_forward.6} parent=43 // pred_check
        %p1625 = pneg %p181
      $region46: #{inception_b_forward.6} parent=43 // pred_check_branch
        %1627 = sbr.rel (%p1625) target = $region48
      $region47: #{inception_b_forward.6} parent=43 // pred_region
        _
      $region48: #{inception_b_forward.6} parent=43 // pred_fallthru
        _
    $region44: #{inception_b_forward.6} parent=5 // pred_fallthru
      _
    %p1628 = scmp.le.s32.totalorder 2, %s12
    // Predicated region
    $region49: #{inception_b_forward.6} parent=5 // pred_check
      %p1629 = pneg %p1628
    $region50: #{inception_b_forward.6} parent=5 // pred_check_branch
      %1631 = sbr.rel (%p1629) target = $region52
    $region51: #{inception_b_forward.6} parent=5 // pred_region
      %s1632 = ssub.s32 %s12, 2
      // Predicated region
      $region53: #{inception_b_forward.6} parent=51 // pred_check
        %p1633 = pneg %p187
      $region54: #{inception_b_forward.6} parent=51 // pred_check_branch
        %1635 = sbr.rel (%p1633) target = $region56
      $region55: #{inception_b_forward.6} parent=51 // pred_region
        %p1636 = scmp.lt.s32.totalorder %s18, 1
        %s1637 = scalar_select %p1636, %s18, 1
        %s1638 = smul.addr %s1637, 7
        %s1639 = smul.addr %s1638, 8
        %s1640 = scalar_lea.vmem %s6, %s1639
      $region56: #{inception_b_forward.6} parent=51 // pred_fallthru
        _
    $region52: #{inception_b_forward.6} parent=5 // pred_fallthru
      _
  $region6: #{inception_b_forward.6} parent=0 // loop_footer
    %s16 = sadd.s32 1, %s12
  $region7: #{inception_b_forward.6} parent=0 // loop_footer_branch
    %11 = sbr.rel target = $region3
  $region8: #{inception_b_forward.6} parent=0 // loop_exit
    _

</llo_original>
